<compile_context>
chip_gen: v7x
topology: tpu7x:2x2x1
jax: 0.10.0
libtpu: 0.0.40
codegen_flags: <defaults>
</compile_context>

<pallas_src>
import jax
import jax.numpy as jnp
import numpy as np
from jax.experimental import pallas as pl
from jax.experimental.pallas import tpu as pltpu

# ---------------------------------------------------------------------------
# Architecture constants (implied by nn.Linear(10752, 6))
# ---------------------------------------------------------------------------
H0, W0 = 36, 43                 # input spatial size
C0, C1, C2, C3 = 1, 32, 64, 256
KH, SH = 6, 2                   # conv kernel height / stride in H (all convs)
KW3 = 2                         # conv3 kernel width
HO1 = (H0 - KH) // SH + 1       # 16
HO2 = (HO1 - KH) // SH + 1      # 6
HO3 = (HO2 - KH) // SH + 1      # 1
WO3 = W0 - KW3 + 1              # 42
NCLS = 6
P_FC = 256                      # WO3*NCLS = 252, padded to lane multiple
NOUT = 128                      # padded output lanes
EPS = 1e-5
assert C3 * HO3 * WO3 == 10752


def _pad8(n):
    return ((n + 7) // 8) * 8


# ---------------------------------------------------------------------------
# Fused Pallas kernel: conv1/2/3 (+BN+ReLU) + Linear, all values in VMEM
# ---------------------------------------------------------------------------
def _fused_cnn_kernel(x_ref, w1_ref, b1_ref, w2_ref, b2_ref, shiftm_ref,
                      w3_ref, b3_ref, wq_ref, mask_ref, rowsel_ref, sel_ref,
                      bfc_ref, o_ref):
    f32, bf16 = jnp.float32, jnp.bfloat16

    # conv1 + BN1 + ReLU:  (rows, H0) @ (H0, HO1*C1); keep only the bf16 copy.
    a1 = jnp.dot(x_ref[...].astype(bf16), w1_ref[...],
                 preferred_element_type=f32)
    a1 = jnp.maximum(a1 + b1_ref[...], 0.0).astype(bf16)

    # conv2 + BN2 + ReLU:  (rows, 512) @ (512, 384)
    a2 = jnp.dot(a1, w2_ref[...], preferred_element_type=f32)
    a2 = jnp.maximum(a2 + b2_ref[...], 0.0).astype(bf16)

    # conv3 (kh=6, kw=2) + BN3 + ReLU.  Width tap j=1 needs a2 at row r+1;
    # shiftm is the 0/1 superdiagonal matrix, so shiftm @ a2 is an exact
    # one-row up-shift of the bf16 a2 (rows whose shift crosses a batch or
    # padding boundary are zeroed later by `mask` since WO3 = W0 - 1).
    # Both taps feed ONE concatenated (rows, 768) @ (768, 256) matmul.
    a2s = jnp.dot(shiftm_ref[...], a2, preferred_element_type=f32).astype(bf16)
    a3 = jnp.dot(jnp.concatenate([a2, a2s], axis=1), w3_ref[...],
                 preferred_element_type=f32)
    a3 = jnp.maximum(a3 + b3_ref[...], 0.0)                     # (rows, 256)

    # Linear(10752, 6); PyTorch flatten order (c3, wo) is folded into wq:
    #   m[r, wo*6+k]    = sum_c3 a3[r, c3] * W_fc[k, c3*WO3 + wo]
    #   mask            keeps only wo == (r mod W0), kills pad/wrap rows
    #   rowsel (8,rows) sums the W0 rows of each batch image (row selection)
    #   sel  (256,128)  regroups the wo*6+k columns into the 6 class logits
    m = jnp.dot(a3.astype(bf16), wq_ref[...], preferred_element_type=f32)
    mm = (m * mask_ref[...]).astype(bf16)                       # (rows, 256)
    d = jnp.dot(rowsel_ref[...], mm, preferred_element_type=f32)  # (8, 256)
    o_ref[...] = jnp.dot(d.astype(bf16), sel_ref[...],
                         preferred_element_type=f32) + bfc_ref[...]


def _fused_cnn_call(xin, packed):
    m_out = packed["rowsel"].shape[0]
    arrays = (xin, packed["w1"], packed["b1"], packed["w2"], packed["b2"],
              packed["shiftm"], packed["w3"], packed["b3"],
              packed["wq"], packed["mask"], packed["rowsel"], packed["sel"],
              packed["bfc"])
    in_specs = [pl.BlockSpec(a.shape, lambda i: (0, 0)) for a in arrays]
    return pl.pallas_call(
        _fused_cnn_kernel,
        out_shape=jax.ShapeDtypeStruct((m_out, NOUT), jnp.float32),
        grid=(1,),
        in_specs=in_specs,
        out_specs=pl.BlockSpec((m_out, NOUT), lambda i: (0, 0)),
        compiler_params=pltpu.CompilerParams(
            dimension_semantics=("arbitrary",)),
    )(*arrays)


def cnn_forward(x, packed):
    """x: (B, 1, H0, W0) NCHW float32 -> logits (B, 6)."""
    batch = x.shape[0]
    assert x.shape[1:] == (C0, H0, W0), x.shape
    rows = batch * W0
    rows_pad = packed["mask"].shape[0]
    assert rows_pad == _pad8(rows), "packed buffers were built for another batch"
    # rows = (b, w), cols = h.  Tiny (~12 KB) relayout; XLA fuses the
    # transpose + reshape + pad into a single copy op.
    xin = x[:, 0].transpose(0, 2, 1).reshape(rows, H0)
    xin = jnp.pad(xin, ((0, rows_pad - rows), (0, 0)))
    out = _fused_cnn_call(xin, packed)
    return out[:batch, :NCLS]


# ---------------------------------------------------------------------------
# One-time weight packing (hoisted out of the forward path)
# ---------------------------------------------------------------------------
def _fold_bn(conv_bias, bn, eps=EPS):
    scale = bn["gamma"] / jnp.sqrt(bn["var"] + eps)
    shift = scale * (conv_bias - bn["mean"]) + bn["beta"]
    return scale, shift


def _conv_h_as_matmul(w, scale, h_in, h_out):
    """Pack Conv2d(kernel=(KH,1), stride=(SH,1)) + folded BN scale into one
    (h_in*Cin, h_out*Cout) matrix acting on (h, c)-flattened columns."""
    w_np = np.asarray(w * scale[:, None, None, None])[:, :, :, 0]  # (Co,Ci,KH)
    cout, cin, kh = w_np.shape
    big = np.zeros((h_in * cin, h_out * cout), np.float32)
    for ho in range(h_out):
        for k in range(kh):
            h = SH * ho + k
            big[h * cin:(h + 1) * cin, ho * cout:(ho + 1) * cout] = w_np[:, :, k].T
    return big


def prepack(p, batch):
    """Fold BN into conv weights and pack everything into the layouts the
    fused kernel consumes.  Done once at init, not per forward call."""
    scale1, shift1 = _fold_bn(p["b1"], p["bn1"])
    scale2, shift2 = _fold_bn(p["b2"], p["bn2"])
    scale3, shift3 = _fold_bn(p["b3"], p["bn3"])

    w1 = _conv_h_as_matmul(p["w1"], scale1, H0, HO1)        # (36, 512)
    w2 = _conv_h_as_matmul(p["w2"], scale2, HO1, HO2)       # (512, 384)
    b1 = np.tile(np.asarray(shift1), HO1)[None, :]          # (1, 512)
    b2 = np.tile(np.asarray(shift2), HO2)[None, :]          # (1, 384)

    # conv3: one (HO2*C2, C3) block per width tap, stacked -> (768, 256).
    w3f = np.asarray(p["w3"] * scale3[:, None, None, None])   # (256, 64, 6, 2)
    w3a = np.transpose(w3f[:, :, :, 0], (2, 1, 0)).reshape(HO2 * C2, C3)
    w3b = np.transpose(w3f[:, :, :, 1], (2, 1, 0)).reshape(HO2 * C2, C3)
    w3 = np.concatenate([w3a, w3b], axis=0)                 # (768, 256)
    b3 = np.asarray(shift3)[None, :]                        # (1, 256)

    # FC: out[k] = sum_{c3,wo} a3[(b,wo), c3] * w_fc[k, c3*WO3 + wo]
    wfc = np.asarray(p["w_fc"]).reshape(NCLS, C3, WO3)      # [k, c3, wo]
    wq = np.transpose(wfc, (1, 2, 0)).reshape(C3, WO3 * NCLS)   # [c3, wo*6+k]
    wq = np.pad(wq, ((0, 0), (0, P_FC - WO3 * NCLS)))           # (256, 256)

    rows = batch * W0
    rows_pad = _pad8(rows)
    m_out = max(8, _pad8(batch))

    wo_of_col = np.arange(WO3 * NCLS) // NCLS
    mask = (np.arange(rows)[:, None] % W0 == wo_of_col[None, :]).astype(np.float32)
    mask = np.pad(mask, ((0, rows_pad - rows), (0, P_FC - WO3 * NCLS)))
    rowsel = (np.arange(m_out)[:, None] ==
              np.arange(rows)[None, :] // W0).astype(np.float32)
    rowsel = np.pad(rowsel, ((0, 0), (0, rows_pad - rows)))     # (8, rows_pad)
    sel = (np.arange(WO3 * NCLS)[:, None] % NCLS ==
           np.arange(NCLS)[None, :]).astype(np.float32)
    sel = np.pad(sel, ((0, P_FC - WO3 * NCLS), (0, NOUT - NCLS)))  # (256, 128)
    shiftm = np.eye(rows_pad, k=1, dtype=np.float32)            # superdiagonal
    bfc = np.pad(np.asarray(p["b_fc"])[None, :], ((0, 0), (0, NOUT - NCLS)))

    bf16, f32 = jnp.bfloat16, jnp.float32
    return dict(
        w1=jnp.asarray(w1, bf16), b1=jnp.asarray(b1, f32),
        w2=jnp.asarray(w2, bf16), b2=jnp.asarray(b2, f32),
        shiftm=jnp.asarray(shiftm, bf16),
        w3=jnp.asarray(w3, bf16), b3=jnp.asarray(b3, f32),
        wq=jnp.asarray(wq, bf16), mask=jnp.asarray(mask, bf16),
        rowsel=jnp.asarray(rowsel, bf16), sel=jnp.asarray(sel, bf16),
        bfc=jnp.asarray(bfc, f32),
    )


# ---------------------------------------------------------------------------
# Parameters + pure-JAX reference (numerical sanity check)
# ---------------------------------------------------------------------------
def init_params(key):
    ks = jax.random.split(key, 16)

    def bn(k, c):
        k1, k2, k3, k4 = jax.random.split(k, 4)
        return dict(
            gamma=jax.random.normal(k1, (c,), jnp.float32) * 0.1 + 1.0,
            beta=jax.random.normal(k2, (c,), jnp.float32) * 0.1,
            mean=jax.random.normal(k3, (c,), jnp.float32) * 0.1,
            var=jax.random.uniform(k4, (c,), jnp.float32, 0.5, 1.5),
        )

    return {
        "w1": jax.random.normal(ks[0], (C1, C0, KH, 1), jnp.float32) * 0.1,
        "b1": jax.random.normal(ks[1], (C1,), jnp.float32) * 0.1,
        "bn1": bn(ks[2], C1),
        "w2": jax.random.normal(ks[3], (C2, C1, KH, 1), jnp.float32) * 0.05,
        "b2": jax.random.normal(ks[4], (C2,), jnp.float32) * 0.1,
        "bn2": bn(ks[5], C2),
        "w3": jax.random.normal(ks[6], (C3, C2, KH, KW3), jnp.float32) * 0.03,
        "b3": jax.random.normal(ks[7], (C3,), jnp.float32) * 0.1,
        "bn3": bn(ks[8], C3),
        "w_fc": jax.random.normal(ks[9], (NCLS, C3 * HO3 * WO3), jnp.float32) * 0.01,
        "b_fc": jax.random.normal(ks[10], (NCLS,), jnp.float32) * 0.1,
    }


def _conv_bn_relu_ref(x, w, b, bn, stride, eps=EPS):
    y = jax.lax.conv_general_dilated(
        x, w, window_strides=stride, padding="VALID",
        dimension_numbers=("NCHW", "OIHW", "NCHW"))
    y = y + b[None, :, None, None]
    scale = bn["gamma"] / jnp.sqrt(bn["var"] + eps)
    y = (scale[None, :, None, None] * (y - bn["mean"][None, :, None, None])
         + bn["beta"][None, :, None, None])
    return jnp.maximum(y, 0.0)


def cnn_reference(x, p):
    y = _conv_bn_relu_ref(x, p["w1"], p["b1"], p["bn1"], (SH, 1))
    y = _conv_bn_relu_ref(y, p["w2"], p["b2"], p["bn2"], (SH, 1))
    y = _conv_bn_relu_ref(y, p["w3"], p["b3"], p["bn3"], (SH, 1))
    y = y.reshape(y.shape[0], -1)
    return y @ p["w_fc"].T + p["b_fc"]


# ---------------------------------------------------------------------------
if __name__ == "__main__":
    key = jax.random.PRNGKey(0)
    k_param, k_x = jax.random.split(key)
    params = init_params(k_param)

    # Input (B=2, C=1, H=36, W=43): after the three convs the feature map is
    # (2, 256, 1, 42) -> 10752 features, matching nn.Linear(10752, 6).
    x = jax.random.normal(k_x, (2, 1, H0, W0), jnp.float32)
    packed = prepack(params, batch=x.shape[0])   # one-time weight packing

    fwd = jax.jit(cnn_forward)
    out = jax.block_until_ready(fwd(x, packed))

    assert out.shape == (2, NCLS), out.shape
    assert bool(jnp.all(jnp.isfinite(out)))
    ref = cnn_reference(x, params)
    max_err = float(jnp.max(jnp.abs(out - ref)))
    assert max_err < 5e-2, f"kernel/reference mismatch: {max_err}"
    print("KERNEL_OK")
</pallas_src>

<mosaic_0001>
module attributes {stable_mosaic.version = 11 : i64} {
  func.func @_fused_cnn_kernel(%arg0: i32, %arg1: memref<88x36xf32, #tpu.memory_space<vmem>>, %arg2: memref<36x512xbf16, #tpu.memory_space<vmem>>, %arg3: memref<1x512xf32, #tpu.memory_space<vmem>>, %arg4: memref<512x384xbf16, #tpu.memory_space<vmem>>, %arg5: memref<1x384xf32, #tpu.memory_space<vmem>>, %arg6: memref<88x88xbf16, #tpu.memory_space<vmem>>, %arg7: memref<768x256xbf16, #tpu.memory_space<vmem>>, %arg8: memref<1x256xf32, #tpu.memory_space<vmem>>, %arg9: memref<256x256xbf16, #tpu.memory_space<vmem>>, %arg10: memref<88x256xbf16, #tpu.memory_space<vmem>>, %arg11: memref<8x88xbf16, #tpu.memory_space<vmem>>, %arg12: memref<256x128xbf16, #tpu.memory_space<vmem>>, %arg13: memref<1x128xf32, #tpu.memory_space<vmem>>, %arg14: memref<8x128xf32, #tpu.memory_space<vmem>>) attributes {dimension_semantics = [#tpu.dimension_semantics<arbitrary>], iteration_bounds = array<i64: 1>, scalar_prefetch = 0 : i64, scratch_operands = 0 : i64, tpu.core_type = #tpu.core_type<tc>, window_params = [{pipeline_mode = #tpu.pipeline_mode<synchronous>, transform_indices = @transform_0, window_bounds = array<i64: 88, 36>}, {pipeline_mode = #tpu.pipeline_mode<synchronous>, transform_indices = @transform_1, window_bounds = array<i64: 36, 512>}, {pipeline_mode = #tpu.pipeline_mode<synchronous>, transform_indices = @transform_2, window_bounds = array<i64: 1, 512>}, {pipeline_mode = #tpu.pipeline_mode<synchronous>, transform_indices = @transform_3, window_bounds = array<i64: 512, 384>}, {pipeline_mode = #tpu.pipeline_mode<synchronous>, transform_indices = @transform_4, window_bounds = array<i64: 1, 384>}, {pipeline_mode = #tpu.pipeline_mode<synchronous>, transform_indices = @transform_5, window_bounds = array<i64: 88, 88>}, {pipeline_mode = #tpu.pipeline_mode<synchronous>, transform_indices = @transform_6, window_bounds = array<i64: 768, 256>}, {pipeline_mode = #tpu.pipeline_mode<synchronous>, transform_indices = @transform_7, window_bounds = array<i64: 1, 256>}, {pipeline_mode = #tpu.pipeline_mode<synchronous>, transform_indices = @transform_8, window_bounds = array<i64: 256, 256>}, {pipeline_mode = #tpu.pipeline_mode<synchronous>, transform_indices = @transform_9, window_bounds = array<i64: 88, 256>}, {pipeline_mode = #tpu.pipeline_mode<synchronous>, transform_indices = @transform_10, window_bounds = array<i64: 8, 88>}, {pipeline_mode = #tpu.pipeline_mode<synchronous>, transform_indices = @transform_11, window_bounds = array<i64: 256, 128>}, {pipeline_mode = #tpu.pipeline_mode<synchronous>, transform_indices = @transform_12, window_bounds = array<i64: 1, 128>}, {pipeline_mode = #tpu.pipeline_mode<synchronous>, transform_indices = @transform_13, window_bounds = array<i64: 8, 128>}]} {
    %c0 = arith.constant 0 : index
    %c0_0 = arith.constant 0 : index
    %0 = vector.load %arg1[%c0, %c0_0] : memref<88x36xf32, #tpu.memory_space<vmem>>, vector<88x36xf32>
    %1 = arith.truncf %0 : vector<88x36xf32> to vector<88x36xbf16>
    %c0_1 = arith.constant 0 : index
    %c0_2 = arith.constant 0 : index
    %2 = vector.load %arg2[%c0_1, %c0_2] : memref<36x512xbf16, #tpu.memory_space<vmem>>, vector<36x512xbf16>
    %cst = arith.constant dense<0.000000e+00> : vector<88x512xf32>
    %3 = tpu.matmul %1, %2, %cst {dimension_numbers = #tpu.dot_dimension_numbers<[1], [0], [0], [1], [0, 0, 1, 1], [], []>} : vector<88x36xbf16>, vector<36x512xbf16>, vector<88x512xf32> -> vector<88x512xf32>
    %c0_3 = arith.constant 0 : index
    %c0_4 = arith.constant 0 : index
    %4 = vector.load %arg3[%c0_3, %c0_4] : memref<1x512xf32, #tpu.memory_space<vmem>>, vector<1x512xf32>
    %5 = vector.broadcast %4 : vector<1x512xf32> to vector<88x512xf32>
    %6 = arith.addf %3, %5 : vector<88x512xf32>
    %cst_5 = arith.constant 0.000000e+00 : f32
    %7 = vector.broadcast %cst_5 : f32 to vector<88x512xf32>
    %8 = arith.maximumf %6, %7 : vector<88x512xf32>
    %9 = arith.truncf %8 : vector<88x512xf32> to vector<88x512xbf16>
    %c0_6 = arith.constant 0 : index
    %c0_7 = arith.constant 0 : index
    %10 = vector.load %arg4[%c0_6, %c0_7] : memref<512x384xbf16, #tpu.memory_space<vmem>>, vector<512x384xbf16>
    %cst_8 = arith.constant dense<0.000000e+00> : vector<88x384xf32>
    %11 = tpu.matmul %9, %10, %cst_8 {dimension_numbers = #tpu.dot_dimension_numbers<[1], [0], [0], [1], [0, 0, 1, 1], [], []>} : vector<88x512xbf16>, vector<512x384xbf16>, vector<88x384xf32> -> vector<88x384xf32>
    %c0_9 = arith.constant 0 : index
    %c0_10 = arith.constant 0 : index
    %12 = vector.load %arg5[%c0_9, %c0_10] : memref<1x384xf32, #tpu.memory_space<vmem>>, vector<1x384xf32>
    %13 = vector.broadcast %12 : vector<1x384xf32> to vector<88x384xf32>
    %14 = arith.addf %11, %13 : vector<88x384xf32>
    %cst_11 = arith.constant 0.000000e+00 : f32
    %15 = vector.broadcast %cst_11 : f32 to vector<88x384xf32>
    %16 = arith.maximumf %14, %15 : vector<88x384xf32>
    %17 = arith.truncf %16 : vector<88x384xf32> to vector<88x384xbf16>
    %c0_12 = arith.constant 0 : index
    %c0_13 = arith.constant 0 : index
    %18 = vector.load %arg6[%c0_12, %c0_13] : memref<88x88xbf16, #tpu.memory_space<vmem>>, vector<88x88xbf16>
    %cst_14 = arith.constant dense<0.000000e+00> : vector<88x384xf32>
    %19 = tpu.matmul %18, %17, %cst_14 {dimension_numbers = #tpu.dot_dimension_numbers<[1], [0], [0], [1], [0, 0, 1, 1], [], []>} : vector<88x88xbf16>, vector<88x384xbf16>, vector<88x384xf32> -> vector<88x384xf32>
    %20 = arith.truncf %19 : vector<88x384xf32> to vector<88x384xbf16>
    %21 = tpu.concatenate %17, %20 in 1 : vector<88x384xbf16>, vector<88x384xbf16> -> vector<88x768xbf16>
    %c0_15 = arith.constant 0 : index
    %c0_16 = arith.constant 0 : index
    %22 = vector.load %arg7[%c0_15, %c0_16] : memref<768x256xbf16, #tpu.memory_space<vmem>>, vector<768x256xbf16>
    %cst_17 = arith.constant dense<0.000000e+00> : vector<88x256xf32>
    %23 = tpu.matmul %21, %22, %cst_17 {dimension_numbers = #tpu.dot_dimension_numbers<[1], [0], [0], [1], [0, 0, 1, 1], [], []>} : vector<88x768xbf16>, vector<768x256xbf16>, vector<88x256xf32> -> vector<88x256xf32>
    %c0_18 = arith.constant 0 : index
    %c0_19 = arith.constant 0 : index
    %24 = vector.load %arg8[%c0_18, %c0_19] : memref<1x256xf32, #tpu.memory_space<vmem>>, vector<1x256xf32>
    %25 = vector.broadcast %24 : vector<1x256xf32> to vector<88x256xf32>
    %26 = arith.addf %23, %25 : vector<88x256xf32>
    %cst_20 = arith.constant 0.000000e+00 : f32
    %27 = vector.broadcast %cst_20 : f32 to vector<88x256xf32>
    %28 = arith.maximumf %26, %27 : vector<88x256xf32>
    %29 = arith.truncf %28 : vector<88x256xf32> to vector<88x256xbf16>
    %c0_21 = arith.constant 0 : index
    %c0_22 = arith.constant 0 : index
    %30 = vector.load %arg9[%c0_21, %c0_22] : memref<256x256xbf16, #tpu.memory_space<vmem>>, vector<256x256xbf16>
    %cst_23 = arith.constant dense<0.000000e+00> : vector<88x256xf32>
    %31 = tpu.matmul %29, %30, %cst_23 {dimension_numbers = #tpu.dot_dimension_numbers<[1], [0], [0], [1], [0, 0, 1, 1], [], []>} : vector<88x256xbf16>, vector<256x256xbf16>, vector<88x256xf32> -> vector<88x256xf32>
    %c0_24 = arith.constant 0 : index
    %c0_25 = arith.constant 0 : index
    %32 = vector.load %arg10[%c0_24, %c0_25] : memref<88x256xbf16, #tpu.memory_space<vmem>>, vector<88x256xbf16>
    %33 = arith.extf %32 : vector<88x256xbf16> to vector<88x256xf32>
    %34 = arith.mulf %31, %33 : vector<88x256xf32>
    %35 = arith.truncf %34 : vector<88x256xf32> to vector<88x256xbf16>
    %c0_26 = arith.constant 0 : index
    %c0_27 = arith.constant 0 : index
    %36 = vector.load %arg11[%c0_26, %c0_27] : memref<8x88xbf16, #tpu.memory_space<vmem>>, vector<8x88xbf16>
    %cst_28 = arith.constant dense<0.000000e+00> : vector<8x256xf32>
    %37 = tpu.matmul %36, %35, %cst_28 {dimension_numbers = #tpu.dot_dimension_numbers<[1], [0], [0], [1], [0, 0, 1, 1], [], []>} : vector<8x88xbf16>, vector<88x256xbf16>, vector<8x256xf32> -> vector<8x256xf32>
    %38 = arith.truncf %37 : vector<8x256xf32> to vector<8x256xbf16>
    %c0_29 = arith.constant 0 : index
    %c0_30 = arith.constant 0 : index
    %39 = vector.load %arg12[%c0_29, %c0_30] : memref<256x128xbf16, #tpu.memory_space<vmem>>, vector<256x128xbf16>
    %cst_31 = arith.constant dense<0.000000e+00> : vector<8x128xf32>
    %40 = tpu.matmul %38, %39, %cst_31 {dimension_numbers = #tpu.dot_dimension_numbers<[1], [0], [0], [1], [0, 0, 1, 1], [], []>} : vector<8x256xbf16>, vector<256x128xbf16>, vector<8x128xf32> -> vector<8x128xf32>
    %c0_32 = arith.constant 0 : index
    %c0_33 = arith.constant 0 : index
    %41 = vector.load %arg13[%c0_32, %c0_33] : memref<1x128xf32, #tpu.memory_space<vmem>>, vector<1x128xf32>
    %42 = vector.broadcast %41 : vector<1x128xf32> to vector<8x128xf32>
    %43 = arith.addf %40, %42 : vector<8x128xf32>
    %c0_34 = arith.constant 0 : index
    %c0_35 = arith.constant 0 : index
    %44 = vector.load %arg14[%c0_34, %c0_35] : memref<8x128xf32, #tpu.memory_space<vmem>>, vector<8x128xf32>
    tpu.vector_store %arg14[%c0_34, %c0_35], %43 {strides = array<i32>} : memref<8x128xf32, #tpu.memory_space<vmem>>, vector<8x128xf32>,
    return
  }
  func.func @transform_0(%arg0: i32) -> (i32, i32) {
    %c0_i32 = arith.constant 0 : i32
    %c0_i32_0 = arith.constant 0 : i32
    %c0_i32_1 = arith.constant 0 : i32
    return %c0_i32, %c0_i32_0 : i32, i32
  }
  func.func @transform_1(%arg0: i32) -> (i32, i32) {
    %c0_i32 = arith.constant 0 : i32
    %c0_i32_0 = arith.constant 0 : i32
    %c0_i32_1 = arith.constant 0 : i32
    return %c0_i32, %c0_i32_0 : i32, i32
  }
  func.func @transform_2(%arg0: i32) -> (i32, i32) {
    %c0_i32 = arith.constant 0 : i32
    %c0_i32_0 = arith.constant 0 : i32
    %c0_i32_1 = arith.constant 0 : i32
    return %c0_i32, %c0_i32_0 : i32, i32
  }
  func.func @transform_3(%arg0: i32) -> (i32, i32) {
    %c0_i32 = arith.constant 0 : i32
    %c0_i32_0 = arith.constant 0 : i32
    %c0_i32_1 = arith.constant 0 : i32
    return %c0_i32, %c0_i32_0 : i32, i32
  }
  func.func @transform_4(%arg0: i32) -> (i32, i32) {
    %c0_i32 = arith.constant 0 : i32
    %c0_i32_0 = arith.constant 0 : i32
    %c0_i32_1 = arith.constant 0 : i32
    return %c0_i32, %c0_i32_0 : i32, i32
  }
  func.func @transform_5(%arg0: i32) -> (i32, i32) {
    %c0_i32 = arith.constant 0 : i32
    %c0_i32_0 = arith.constant 0 : i32
    %c0_i32_1 = arith.constant 0 : i32
    return %c0_i32, %c0_i32_0 : i32, i32
  }
  func.func @transform_6(%arg0: i32) -> (i32, i32) {
    %c0_i32 = arith.constant 0 : i32
    %c0_i32_0 = arith.constant 0 : i32
    %c0_i32_1 = arith.constant 0 : i32
    return %c0_i32, %c0_i32_0 : i32, i32
  }
  func.func @transform_7(%arg0: i32) -> (i32, i32) {
    %c0_i32 = arith.constant 0 : i32
    %c0_i32_0 = arith.constant 0 : i32
    %c0_i32_1 = arith.constant 0 : i32
    return %c0_i32, %c0_i32_0 : i32, i32
  }
  func.func @transform_8(%arg0: i32) -> (i32, i32) {
    %c0_i32 = arith.constant 0 : i32
    %c0_i32_0 = arith.constant 0 : i32
    %c0_i32_1 = arith.constant 0 : i32
    return %c0_i32, %c0_i32_0 : i32, i32
  }
  func.func @transform_9(%arg0: i32) -> (i32, i32) {
    %c0_i32 = arith.constant 0 : i32
    %c0_i32_0 = arith.constant 0 : i32
    %c0_i32_1 = arith.constant 0 : i32
    return %c0_i32, %c0_i32_0 : i32, i32
  }
  func.func @transform_10(%arg0: i32) -> (i32, i32) {
    %c0_i32 = arith.constant 0 : i32
    %c0_i32_0 = arith.constant 0 : i32
    %c0_i32_1 = arith.constant 0 : i32
    return %c0_i32, %c0_i32_0 : i32, i32
  }
  func.func @transform_11(%arg0: i32) -> (i32, i32) {
    %c0_i32 = arith.constant 0 : i32
    %c0_i32_0 = arith.constant 0 : i32
    %c0_i32_1 = arith.constant 0 : i32
    return %c0_i32, %c0_i32_0 : i32, i32
  }
  func.func @transform_12(%arg0: i32) -> (i32, i32) {
    %c0_i32 = arith.constant 0 : i32
    %c0_i32_0 = arith.constant 0 : i32
    %c0_i32_1 = arith.constant 0 : i32
    return %c0_i32, %c0_i32_0 : i32, i32
  }
  func.func @transform_13(%arg0: i32) -> (i32, i32) {
    %c0_i32 = arith.constant 0 : i32
    %c0_i32_0 = arith.constant 0 : i32
    %c0_i32_1 = arith.constant 0 : i32
    return %c0_i32, %c0_i32_0 : i32, i32
  }
}

</mosaic_0001>

<llo_original>
// kernel: cnn_forward.1
$region0: #{cnn_forward.1}
  #allocation0 [shape = 'u32[]', space=smem, size = 0x4, offset = 0x4, fixed_abs, tag = 'smem constant byte address 0x4 - core index']
  #allocation1 [shape = 'u32[144,128]{1,0:T(1,128)}', space=vmem, size = 0x12000, scoped, tag = 'internal scratch']
  %s0 = inlined_call_operand.vmem [shape: f32[88,36], index: 0, kind: input, shape index: {}]
  %s1 = inlined_call_operand.vmem [shape: bf16[36,512], index: 1, kind: input, shape index: {}]
  %s2 = inlined_call_operand.vmem [shape: f32[1,512], index: 2, kind: input, shape index: {}]
  %s3 = inlined_call_operand.hbm [shape: bf16[512,384], index: 3, kind: input, shape index: {}]
  %s4 = inlined_call_operand.vmem [shape: f32[1,384], index: 4, kind: input, shape index: {}]
  %s5 = inlined_call_operand.hbm [shape: bf16[88,88], index: 5, kind: input, shape index: {}]
  %s6 = inlined_call_operand.hbm [shape: bf16[768,256], index: 6, kind: input, shape index: {}]
  %s7 = inlined_call_operand.vmem [shape: f32[1,256], index: 7, kind: input, shape index: {}]
  %s8 = inlined_call_operand.vmem [shape: bf16[256,256], index: 8, kind: input, shape index: {}]
  %s9 = inlined_call_operand.vmem [shape: bf16[88,256], index: 9, kind: input, shape index: {}]
  %s10 = inlined_call_operand.vmem [shape: bf16[8,88], index: 10, kind: input, shape index: {}]
  %s11 = inlined_call_operand.vmem [shape: bf16[256,128], index: 11, kind: input, shape index: {}]
  %s12 = inlined_call_operand.vmem [shape: f32[1,128], index: 12, kind: input, shape index: {}]
  %s13 = inlined_call_operand.vmem [shape: f32[8,128], index: 13, kind: output, shape index: {}]
  %s14 = sld [smem:[#allocation0]]
  $region74: #{cnn_forward.1} parent=0
    _
  %s16 = ssub.s32 1, %s14
  %s17 = scalar_select 0, %s16, %s14
  $region1: #{cnn_forward.1} parent=0
    #allocation2 [shape = 'u8[393216]{0}', space=vmem, size = 0x60000, scoped, tag = 'input window, operand 3, single buffered']
    #allocation3 [shape = 's32[1]{0}', space=sflag, size = 0x4, scoped, tag = 'scoped memory for cnn_forward.1']
    #allocation4 [shape = 'u8[22528]{0}', space=vmem, size = 0x5800, scoped, tag = 'input window, operand 5, single buffered']
    #allocation5 [shape = 's32[1]{0}', space=sflag, size = 0x4, scoped, tag = 'scoped memory for cnn_forward.1']
    #allocation6 [shape = 'u8[393216]{0}', space=vmem, size = 0x60000, scoped, tag = 'input window, operand 6, single buffered']
    %18 = vsyncpa [#allocation3], 0
    %19 = vsyncpa [#allocation5], 0
    // Predicated region
    $region2: #{cnn_forward.1} parent=1 // pred_check
      _
    $region3: #{cnn_forward.1} parent=1 // pred_check_branch
      %21 = sbr.rel (0) target = $region5
    $region4: #{cnn_forward.1} parent=1 // pred_region
      _
    $region5: #{cnn_forward.1} parent=1 // pred_fallthru
      _
    // Predicated region
    $region6: #{cnn_forward.1} parent=1 // pred_check
      _
    $region7: #{cnn_forward.1} parent=1 // pred_check_branch
      %23 = sbr.rel (0) target = $region9
    $region8: #{cnn_forward.1} parent=1 // pred_region
      _
    $region9: #{cnn_forward.1} parent=1 // pred_fallthru
      _
    // Predicated region
    $region10: #{cnn_forward.1} parent=1 // pred_check
      _
    $region11: #{cnn_forward.1} parent=1 // pred_check_branch
      %25 = sbr.rel (0) target = $region13
    $region12: #{cnn_forward.1} parent=1 // pred_region
      _
    $region13: #{cnn_forward.1} parent=1 // pred_fallthru
      _
    // Predicated region
    $region14: #{cnn_forward.1} parent=1 // pred_check
      _
    $region15: #{cnn_forward.1} parent=1 // pred_check_branch
      %27 = sbr.rel (0) target = $region17
    $region16: #{cnn_forward.1} parent=1 // pred_region
      %s29 = ssub.s32 12288, 12288
      %30 = vsyncadd [#allocation3], %s29
      %s31 = sshll.u32 [#allocation2], 4
      %s32 = int_to_ptr.vmem [resolvable:$true] %s31
      %37 = dma.hbm_to_vmem [thread:$0]  %s3, 12288, %s32, [#allocation3], 192, 192, 12
    $region17: #{cnn_forward.1} parent=1 // pred_fallthru
      _
    // Predicated region
    $region18: #{cnn_forward.1} parent=1 // pred_check
      _
    $region19: #{cnn_forward.1} parent=1 // pred_check_branch
      %39 = sbr.rel (0) target = $region21
    $region20: #{cnn_forward.1} parent=1 // pred_region
      _
    $region21: #{cnn_forward.1} parent=1 // pred_fallthru
      _
    // Predicated region
    $region22: #{cnn_forward.1} parent=1 // pred_check
      _
    $region23: #{cnn_forward.1} parent=1 // pred_check_branch
      %41 = sbr.rel (0) target = $region25
    $region24: #{cnn_forward.1} parent=1 // pred_region
      %s43 = ssub.s32 704, 704
      %44 = vsyncadd [#allocation5], %s43
      %s45 = sshll.u32 [#allocation4], 4
      %s46 = int_to_ptr.vmem [resolvable:$true] %s45
      %51 = dma.hbm_to_vmem [thread:$0]  %s5, 704, %s46, [#allocation5], 64, 64, 4
    $region25: #{cnn_forward.1} parent=1 // pred_fallthru
      _
    // Predicated region
    $region26: #{cnn_forward.1} parent=1 // pred_check
      _
    $region27: #{cnn_forward.1} parent=1 // pred_check_branch
      %53 = sbr.rel (0) target = $region29
    $region28: #{cnn_forward.1} parent=1 // pred_region
      %s55 = ssub.s32 12288, 12288
      %56 = vsyncadd [#allocation5], %s55
      %s57 = sshll.u32 [#allocation6], 4
      %s58 = int_to_ptr.vmem [resolvable:$true] %s57
      %63 = dma.hbm_to_vmem [thread:$0]  %s6, 12288, %s58, [#allocation5], 128, 128, 8
    $region29: #{cnn_forward.1} parent=1 // pred_fallthru
      _
    // Predicated region
    $region30: #{cnn_forward.1} parent=1 // pred_check
      _
    $region31: #{cnn_forward.1} parent=1 // pred_check_branch
      %65 = sbr.rel (0) target = $region33
    $region32: #{cnn_forward.1} parent=1 // pred_region
      _
    $region33: #{cnn_forward.1} parent=1 // pred_fallthru
      _
    // Predicated region
    $region34: #{cnn_forward.1} parent=1 // pred_check
      _
    $region35: #{cnn_forward.1} parent=1 // pred_check_branch
      %67 = sbr.rel (0) target = $region37
    $region36: #{cnn_forward.1} parent=1 // pred_region
      _
    $region37: #{cnn_forward.1} parent=1 // pred_fallthru
      _
    // Predicated region
    $region38: #{cnn_forward.1} parent=1 // pred_check
      _
    $region39: #{cnn_forward.1} parent=1 // pred_check_branch
      %69 = sbr.rel (0) target = $region41
    $region40: #{cnn_forward.1} parent=1 // pred_region
      _
    $region41: #{cnn_forward.1} parent=1 // pred_fallthru
      _
    // Predicated region
    $region42: #{cnn_forward.1} parent=1 // pred_check
      _
    $region43: #{cnn_forward.1} parent=1 // pred_check_branch
      %71 = sbr.rel (0) target = $region45
    $region44: #{cnn_forward.1} parent=1 // pred_region
      _
    $region45: #{cnn_forward.1} parent=1 // pred_fallthru
      _
    // Predicated region
    $region46: #{cnn_forward.1} parent=1 // pred_check
      _
    $region47: #{cnn_forward.1} parent=1 // pred_check_branch
      %73 = sbr.rel (0) target = $region49
    $region48: #{cnn_forward.1} parent=1 // pred_region
      _
    $region49: #{cnn_forward.1} parent=1 // pred_fallthru
      _
    // Predicated region
    $region50: #{cnn_forward.1} parent=1 // pred_check
      _
    $region51: #{cnn_forward.1} parent=1 // pred_check_branch
      %75 = sbr.rel (0) target = $region53
    $region52: #{cnn_forward.1} parent=1 // pred_region
      _
    $region53: #{cnn_forward.1} parent=1 // pred_fallthru
      _
    // Predicated region
    $region54: #{cnn_forward.1} parent=1 // pred_check
      _
    $region55: #{cnn_forward.1} parent=1 // pred_check_branch
      %77 = sbr.rel (0) target = $region57
    $region56: #{cnn_forward.1} parent=1 // pred_region
      %78 = dma.done [#allocation3], 12288
    $region57: #{cnn_forward.1} parent=1 // pred_fallthru
      _
    // Predicated region
    $region58: #{cnn_forward.1} parent=1 // pred_check
      _
    $region59: #{cnn_forward.1} parent=1 // pred_check_branch
      %80 = sbr.rel (0) target = $region61
    $region60: #{cnn_forward.1} parent=1 // pred_region
      %81 = dma.done [#allocation5], 704
    $region61: #{cnn_forward.1} parent=1 // pred_fallthru
      _
    // Predicated region
    $region62: #{cnn_forward.1} parent=1 // pred_check
      _
    $region63: #{cnn_forward.1} parent=1 // pred_check_branch
      %83 = sbr.rel (0) target = $region65
    $region64: #{cnn_forward.1} parent=1 // pred_region
      %84 = dma.done [#allocation5], 12288
    $region65: #{cnn_forward.1} parent=1 // pred_fallthru
      _
    %v86 = vld [vmem:[%s0] sm:$0xff]
    %v87 = vld [vmem:[%s0 + $0x8] sm:$0xff]
    %v88 = vld [vmem:[%s0 + $0x10] sm:$0xff]
    %v89 = vld [vmem:[%s0 + $0x18] sm:$0xff]
    %v90 = vld [vmem:[%s0 + $0x20] sm:$0xff]
    %v91 = vld [vmem:[%s0 + $0x28] sm:$0xff]
    %v92 = vld [vmem:[%s0 + $0x30] sm:$0xff]
    %v93 = vld [vmem:[%s0 + $0x38] sm:$0xff]
    %v94 = vld [vmem:[%s0 + $0x40] sm:$0xff]
    %v95 = vld [vmem:[%s0 + $0x48] sm:$0xff]
    %v96 = vld [vmem:[%s0 + $0x50] sm:$0xff]
    %v97 = vpack.c.bf16 %v87, %v86
    %v98 = vpack.c.bf16 %v89, %v88
    %v99 = vpack.c.bf16 %v91, %v90
    %v100 = vpack.c.bf16 %v93, %v92
    %v101 = vpack.c.bf16 %v95, %v94
    %v102 = vpack.c.bf16 %v96, %v96
    %v103 = vld [vmem:[%s1] sm:$0xff]
    %v104 = vld [vmem:[%s1 + $0x8] sm:$0xff]
    %v105 = vld [vmem:[%s1 + $0x10] sm:$0xff]
    %v106 = vld [vmem:[%s1 + $0x18] sm:$0xff]
    %v107 = vld [vmem:[%s1 + $0x20] sm:$0xff]
    %v108 = vld [vmem:[%s1 + $0x28] sm:$0xff]
    %v109 = vld [vmem:[%s1 + $0x30] sm:$0xff]
    %v110 = vld [vmem:[%s1 + $0x38] sm:$0xff]
    %v111 = vld [vmem:[%s1 + $0x40] sm:$0x33]
    %v112 = vld [vmem:[%s1 + $0x48] sm:$0x33]
    %v113 = vld [vmem:[%s2] sm:$0xf]
    %v115 = vlaneseq
    %v116 = vshrl.u32 %v115, 7
    %v117 = vsub.s32 0, %v116
    %v118 = vrot.slane %v113, %v117
    %v119 = vlaneseq
    %v120 = vshrl.u32 %v119, 7
    %v121 = vsub.s32 1, %v120
    %v122 = vrot.slane %v113, %v121
    %v123 = vlaneseq
    %v124 = vshrl.u32 %v123, 7
    %v125 = vsub.s32 2, %v124
    %v126 = vrot.slane %v113, %v125
    %v127 = vlaneseq
    %v128 = vshrl.u32 %v127, 7
    %v129 = vsub.s32 3, %v128
    %v130 = vrot.slane %v113, %v129
    %v145 = vunpack.c.l.b16 %v103
    %v146 = vunpack.c.h.b16 %v103
    %v147 = vunpack.c.l.b16 %v104
    %v148 = vunpack.c.h.b16 %v104
    %v149 = vunpack.c.l.b16 %v105
    %v150 = vunpack.c.h.b16 %v105
    %v151 = vunpack.c.l.b16 %v106
    %v152 = vunpack.c.h.b16 %v106
    %v153 = vunpack.c.l.b16 %v107
    %v154 = vunpack.c.h.b16 %v107
    %v155 = vunpack.c.l.b16 %v108
    %v156 = vunpack.c.h.b16 %v108
    %v157 = vunpack.c.l.b16 %v109
    %v158 = vunpack.c.h.b16 %v109
    %v159 = vunpack.c.l.b16 %v110
    %v160 = vunpack.c.h.b16 %v110
    %v161 = vunpack.c.l.b16 %v111
    %v162 = vunpack.c.h.b16 %v111
    %v163 = vunpack.c.l.b16 %v112
    %v164 = vunpack.c.h.b16 %v112
    %v165 = vpack.c.b16 %v149, %v145
    %v166 = vpack.c.b16 %v150, %v146
    %v167 = vpack.c.b16 %v151, %v147
    %v168 = vpack.c.b16 %v152, %v148
    %v169 = vpack.c.b16 %v157, %v153
    %v170 = vpack.c.b16 %v158, %v154
    %v171 = vpack.c.b16 %v159, %v155
    %v172 = vpack.c.b16 %v160, %v156
    %v173 = vpack.c.b16 %v161, %v161
    %v174 = vpack.c.b16 %v162, %v162
    %v175 = vpack.c.b16 %v163, %v163
    %v176 = vpack.c.b16 %v164, %v164
    %vm185 = vcmask 293888
    %v187 = vsel %vm185, %v97, 0
    %v190 = vsel %vm185, %v98, 0
    %v193 = vsel %vm185, %v99, 0
    %v196 = vsel %vm185, %v100, 0
    %v199 = vsel %vm185, %v101, 0
    %v202 = vsel %vm185, %v102, 0
    %vm204 = vcmask 1041408
    %v206 = vsel %vm204, %v173, 0
    %v209 = vsel %vm204, %v174, 0
    %v212 = vsel %vm204, %v175, 0
    %v215 = vsel %vm204, %v176, 0
    %217 = vmatprep.subr.bf16.mxu0 %v166
    %218 = vmatpush1.bf16.msra.mxu0 %v165
    %219 = vmatprep.subr.bf16.mxu0 %v170
    %220 = vmatpush1.bf16.msra.mxu0 %v169
    %221 = vmatprep.subr.bf16.mxu0 %v209
    %222 = vmatpush1.bf16.msra.mxu0 %v206
    %223 = vmatprep.subr.bf16.mxu0 0
    %224 = vmatpush1.bf16.msra.mxu0 0
    %225 = vmatprep.subr.bf16.mxu0 0
    %226 = vmatpush1.bf16.msra.mxu0 0
    %227 = vmatprep.subr.bf16.mxu0 0
    %228 = vmatpush1.bf16.msra.mxu0 0
    %229 = vmatprep.subr.bf16.mxu0 0
    %230 = vmatpush1.bf16.msra.mxu0 0
    %231 = vmatprep.subr.bf16.mxu0 0
    %232 = vmatpush1.bf16.msra.mxu0 0
    %233 = vmatprep.subr.bf16.mxu0 0
    %234 = vmatpush1.bf16.msra.mxu0 0
    %235 = vmatprep.subr.bf16.mxu0 0
    %236 = vmatpush1.bf16.msra.mxu0 0
    %237 = vmatprep.subr.bf16.mxu0 0
    %238 = vmatpush1.bf16.msra.mxu0 0
    %239 = vmatprep.subr.bf16.mxu0 0
    %240 = vmatpush1.bf16.msra.mxu0 0
    %241 = vmatprep.subr.bf16.mxu0 0
    %242 = vmatpush1.bf16.msra.mxu0 0
    %243 = vmatprep.subr.bf16.mxu0 0
    %244 = vmatpush1.bf16.msra.mxu0 0
    %245 = vmatprep.subr.bf16.mxu0 0
    %246 = vmatpush1.bf16.msra.mxu0 0
    %247 = vmatprep.subr.bf16.mxu0 0
    %248 = vmatpush1.bf16.msra.mxu0 0
    %249 = vmatprep.mubr.bf16.mxu0 0
    %250 = vmatmul.mubr.bf16.gmra.mrb[0].mxu0 %v187
    %v251 = vpop.f32.mrb[0].mxu0
    %v252 = vadd.f32 %v118, %v251
    %v253 = vpop.f32.mrb[0].mxu0
    %v254 = vadd.f32 %v122, %v253
    %v255 = vpop.f32.mrb[0].mxu0
    %v256 = vadd.f32 %v118, %v255
    %v257 = vpop.f32.mrb[0].mxu0
    %v258 = vadd.f32 %v122, %v257
    %259 = vmatprep.mubr.bf16.mxu0 0
    %260 = vmatmul.mubr.bf16.gmra.mrb[0].mxu0 %v190
    %v261 = vpop.f32.mrb[0].mxu0
    %v262 = vadd.f32 %v118, %v261
    %v263 = vpop.f32.mrb[0].mxu0
    %v264 = vadd.f32 %v122, %v263
    %v265 = vpop.f32.mrb[0].mxu0
    %v266 = vadd.f32 %v118, %v265
    %v267 = vpop.f32.mrb[0].mxu0
    %v268 = vadd.f32 %v122, %v267
    %269 = vmatprep.mubr.bf16.mxu0 0
    %270 = vmatmul.mubr.bf16.gmra.mrb[0].mxu0 %v193
    %v271 = vpop.f32.mrb[0].mxu0
    %v272 = vadd.f32 %v118, %v271
    %v273 = vpop.f32.mrb[0].mxu0
    %v274 = vadd.f32 %v122, %v273
    %v275 = vpop.f32.mrb[0].mxu0
    %v276 = vadd.f32 %v118, %v275
    %v277 = vpop.f32.mrb[0].mxu0
    %v278 = vadd.f32 %v122, %v277
    %279 = vmatprep.mubr.bf16.mxu0 0
    %280 = vmatmul.mubr.bf16.gmra.mrb[0].mxu0 %v196
    %v281 = vpop.f32.mrb[0].mxu0
    %v282 = vadd.f32 %v118, %v281
    %v283 = vpop.f32.mrb[0].mxu0
    %v284 = vadd.f32 %v122, %v283
    %v285 = vpop.f32.mrb[0].mxu0
    %v286 = vadd.f32 %v118, %v285
    %v287 = vpop.f32.mrb[0].mxu0
    %v288 = vadd.f32 %v122, %v287
    %289 = vmatprep.mubr.bf16.mxu0 0
    %290 = vmatmul.mubr.bf16.gmra.mrb[0].mxu0 %v199
    %v291 = vpop.f32.mrb[0].mxu0
    %v292 = vadd.f32 %v118, %v291
    %v293 = vpop.f32.mrb[0].mxu0
    %v294 = vadd.f32 %v122, %v293
    %v295 = vpop.f32.mrb[0].mxu0
    %v296 = vadd.f32 %v118, %v295
    %v297 = vpop.f32.mrb[0].mxu0
    %v298 = vadd.f32 %v122, %v297
    %299 = vmatprep.mubr.bf16.mxu0 0
    %300 = vmatmul.mubr.bf16.gmra.mrb[0].mxu0 %v202
    %v301 = vpop.f32.mrb[0].mxu0
    %v302 = vadd.f32 %v118, %v301
    %v303 = vpop.f32.mrb[0].mxu0
    %v304 = vadd.f32 %v122, %v303
    %v305 = vpop.f32.mrb[0].mxu0
    %v306 = vpop.f32.mrb[0].mxu0
    %307 = vdwg.mxu0
    %308 = vmatprep.subr.bf16.mxu0 %v168
    %309 = vmatpush1.bf16.msra.mxu0 %v167
    %310 = vmatprep.subr.bf16.mxu0 %v172
    %311 = vmatpush1.bf16.msra.mxu0 %v171
    %312 = vmatprep.subr.bf16.mxu0 %v215
    %313 = vmatpush1.bf16.msra.mxu0 %v212
    %314 = vmatprep.subr.bf16.mxu0 0
    %315 = vmatpush1.bf16.msra.mxu0 0
    %316 = vmatprep.subr.bf16.mxu0 0
    %317 = vmatpush1.bf16.msra.mxu0 0
    %318 = vmatprep.subr.bf16.mxu0 0
    %319 = vmatpush1.bf16.msra.mxu0 0
    %320 = vmatprep.subr.bf16.mxu0 0
    %321 = vmatpush1.bf16.msra.mxu0 0
    %322 = vmatprep.subr.bf16.mxu0 0
    %323 = vmatpush1.bf16.msra.mxu0 0
    %324 = vmatprep.subr.bf16.mxu0 0
    %325 = vmatpush1.bf16.msra.mxu0 0
    %326 = vmatprep.subr.bf16.mxu0 0
    %327 = vmatpush1.bf16.msra.mxu0 0
    %328 = vmatprep.subr.bf16.mxu0 0
    %329 = vmatpush1.bf16.msra.mxu0 0
    %330 = vmatprep.subr.bf16.mxu0 0
    %331 = vmatpush1.bf16.msra.mxu0 0
    %332 = vmatprep.subr.bf16.mxu0 0
    %333 = vmatpush1.bf16.msra.mxu0 0
    %334 = vmatprep.subr.bf16.mxu0 0
    %335 = vmatpush1.bf16.msra.mxu0 0
    %336 = vmatprep.subr.bf16.mxu0 0
    %337 = vmatpush1.bf16.msra.mxu0 0
    %338 = vmatprep.subr.bf16.mxu0 0
    %339 = vmatpush1.bf16.msra.mxu0 0
    %340 = vmatprep.mubr.bf16.mxu0 0
    %341 = vmatmul.mubr.bf16.gmra.mrb[0].mxu0 %v187
    %v342 = vpop.f32.mrb[0].mxu0
    %v343 = vadd.f32 %v126, %v342
    %v344 = vpop.f32.mrb[0].mxu0
    %v345 = vadd.f32 %v130, %v344
    %v346 = vpop.f32.mrb[0].mxu0
    %v347 = vadd.f32 %v126, %v346
    %v348 = vpop.f32.mrb[0].mxu0
    %v349 = vadd.f32 %v130, %v348
    %350 = vmatprep.mubr.bf16.mxu0 0
    %351 = vmatmul.mubr.bf16.gmra.mrb[0].mxu0 %v190
    %v352 = vpop.f32.mrb[0].mxu0
    %v353 = vadd.f32 %v126, %v352
    %v354 = vpop.f32.mrb[0].mxu0
    %v355 = vadd.f32 %v130, %v354
    %v356 = vpop.f32.mrb[0].mxu0
    %v357 = vadd.f32 %v126, %v356
    %v358 = vpop.f32.mrb[0].mxu0
    %v359 = vadd.f32 %v130, %v358
    %360 = vmatprep.mubr.bf16.mxu0 0
    %361 = vmatmul.mubr.bf16.gmra.mrb[0].mxu0 %v193
    %v362 = vpop.f32.mrb[0].mxu0
    %v363 = vadd.f32 %v126, %v362
    %v364 = vpop.f32.mrb[0].mxu0
    %v365 = vadd.f32 %v130, %v364
    %v366 = vpop.f32.mrb[0].mxu0
    %v367 = vadd.f32 %v126, %v366
    %v368 = vpop.f32.mrb[0].mxu0
    %v369 = vadd.f32 %v130, %v368
    %370 = vmatprep.mubr.bf16.mxu0 0
    %371 = vmatmul.mubr.bf16.gmra.mrb[0].mxu0 %v196
    %v372 = vpop.f32.mrb[0].mxu0
    %v373 = vadd.f32 %v126, %v372
    %v374 = vpop.f32.mrb[0].mxu0
    %v375 = vadd.f32 %v130, %v374
    %v376 = vpop.f32.mrb[0].mxu0
    %v377 = vadd.f32 %v126, %v376
    %v378 = vpop.f32.mrb[0].mxu0
    %v379 = vadd.f32 %v130, %v378
    %380 = vmatprep.mubr.bf16.mxu0 0
    %381 = vmatmul.mubr.bf16.gmra.mrb[0].mxu0 %v199
    %v382 = vpop.f32.mrb[0].mxu0
    %v383 = vadd.f32 %v126, %v382
    %v384 = vpop.f32.mrb[0].mxu0
    %v385 = vadd.f32 %v130, %v384
    %v386 = vpop.f32.mrb[0].mxu0
    %v387 = vadd.f32 %v126, %v386
    %v388 = vpop.f32.mrb[0].mxu0
    %v389 = vadd.f32 %v130, %v388
    %390 = vmatprep.mubr.bf16.mxu0 0
    %391 = vmatmul.mubr.bf16.gmra.mrb[0].mxu0 %v202
    %v392 = vpop.f32.mrb[0].mxu0
    %v393 = vadd.f32 %v126, %v392
    %v394 = vpop.f32.mrb[0].mxu0
    %v395 = vadd.f32 %v130, %v394
    %v396 = vpop.f32.mrb[0].mxu0
    %v397 = vpop.f32.mrb[0].mxu0
    %398 = vdwg.mxu0
    %v399 = vmax.f32 %v252, 0.0
    %v400 = vmax.f32 %v254, 0.0
    %v401 = vmax.f32 %v343, 0.0
    %v402 = vmax.f32 %v345, 0.0
    %v403 = vmax.f32 %v256, 0.0
    %v404 = vmax.f32 %v258, 0.0
    %v405 = vmax.f32 %v347, 0.0
    %v406 = vmax.f32 %v349, 0.0
    %v407 = vmax.f32 %v262, 0.0
    %v408 = vmax.f32 %v264, 0.0
    %v409 = vmax.f32 %v353, 0.0
    %v410 = vmax.f32 %v355, 0.0
    %v411 = vmax.f32 %v266, 0.0
    %v412 = vmax.f32 %v268, 0.0
    %v413 = vmax.f32 %v357, 0.0
    %v414 = vmax.f32 %v359, 0.0
    %v415 = vmax.f32 %v272, 0.0
    %v416 = vmax.f32 %v274, 0.0
    %v417 = vmax.f32 %v363, 0.0
    %v418 = vmax.f32 %v365, 0.0
    %v419 = vmax.f32 %v276, 0.0
    %v420 = vmax.f32 %v278, 0.0
    %v421 = vmax.f32 %v367, 0.0
    %v422 = vmax.f32 %v369, 0.0
    %v423 = vmax.f32 %v282, 0.0
    %v424 = vmax.f32 %v284, 0.0
    %v425 = vmax.f32 %v373, 0.0
    %v426 = vmax.f32 %v375, 0.0
    %v427 = vmax.f32 %v286, 0.0
    %v428 = vmax.f32 %v288, 0.0
    %v429 = vmax.f32 %v377, 0.0
    %v430 = vmax.f32 %v379, 0.0
    %v431 = vmax.f32 %v292, 0.0
    %v432 = vmax.f32 %v294, 0.0
    %v433 = vmax.f32 %v383, 0.0
    %v434 = vmax.f32 %v385, 0.0
    %v435 = vmax.f32 %v296, 0.0
    %v436 = vmax.f32 %v298, 0.0
    %v437 = vmax.f32 %v387, 0.0
    %v438 = vmax.f32 %v389, 0.0
    %v439 = vmax.f32 %v302, 0.0
    %v440 = vmax.f32 %v304, 0.0
    %v441 = vmax.f32 %v393, 0.0
    %v442 = vmax.f32 %v395, 0.0
    %v443 = vpack.c.bf16 %v403, %v399
    %v444 = vpack.c.bf16 %v404, %v400
    %v445 = vpack.c.bf16 %v405, %v401
    %v446 = vpack.c.bf16 %v406, %v402
    %v447 = vpack.c.bf16 %v411, %v407
    %v448 = vpack.c.bf16 %v412, %v408
    %v449 = vpack.c.bf16 %v413, %v409
    %v450 = vpack.c.bf16 %v414, %v410
    %v451 = vpack.c.bf16 %v419, %v415
    %v452 = vpack.c.bf16 %v420, %v416
    %v453 = vpack.c.bf16 %v421, %v417
    %v454 = vpack.c.bf16 %v422, %v418
    %v455 = vpack.c.bf16 %v427, %v423
    %v456 = vpack.c.bf16 %v428, %v424
    %v457 = vpack.c.bf16 %v429, %v425
    %v458 = vpack.c.bf16 %v430, %v426
    %v459 = vpack.c.bf16 %v435, %v431
    %v460 = vpack.c.bf16 %v436, %v432
    %v461 = vpack.c.bf16 %v437, %v433
    %v462 = vpack.c.bf16 %v438, %v434
    %v463 = vpack.c.bf16 %v439, %v439
    %v464 = vpack.c.bf16 %v440, %v440
    %v465 = vpack.c.bf16 %v441, %v441
    %v466 = vpack.c.bf16 %v442, %v442
    %v467 = vld [vmem:[#allocation2] sm:$0xff]
    %v468 = vld [vmem:[#allocation2 + $0x8] sm:$0xf]
    %v469 = vld [vmem:[#allocation2 + $0xc] sm:$0xff]
    %v470 = vld [vmem:[#allocation2 + $0x14] sm:$0xf]
    %v471 = vld [vmem:[#allocation2 + $0x18] sm:$0xff]
    %v472 = vld [vmem:[#allocation2 + $0x20] sm:$0xf]
    %v473 = vld [vmem:[#allocation2 + $0x24] sm:$0xff]
    %v474 = vld [vmem:[#allocation2 + $0x2c] sm:$0xf]
    %v475 = vld [vmem:[#allocation2 + $0x30] sm:$0xff]
    %v476 = vld [vmem:[#allocation2 + $0x38] sm:$0xf]
    %v477 = vld [vmem:[#allocation2 + $0x3c] sm:$0xff]
    %v478 = vld [vmem:[#allocation2 + $0x44] sm:$0xf]
    %v479 = vld [vmem:[#allocation2 + $0x48] sm:$0xff]
    %v480 = vld [vmem:[#allocation2 + $0x50] sm:$0xf]
    %v481 = vld [vmem:[#allocation2 + $0x54] sm:$0xff]
    %v482 = vld [vmem:[#allocation2 + $0x5c] sm:$0xf]
    %v483 = vld [vmem:[#allocation2 + $0x60] sm:$0xff]
    %v484 = vld [vmem:[#allocation2 + $0x68] sm:$0xf]
    %v485 = vld [vmem:[#allocation2 + $0x6c] sm:$0xff]
    %v486 = vld [vmem:[#allocation2 + $0x74] sm:$0xf]
    %v487 = vld [vmem:[#allocation2 + $0x78] sm:$0xff]
    %v488 = vld [vmem:[#allocation2 + $0x80] sm:$0xf]
    %v489 = vld [vmem:[#allocation2 + $0x84] sm:$0xff]
    %v490 = vld [vmem:[#allocation2 + $0x8c] sm:$0xf]
    %v491 = vld [vmem:[#allocation2 + $0x90] sm:$0xff]
    %v492 = vld [vmem:[#allocation2 + $0x98] sm:$0xf]
    %v493 = vld [vmem:[#allocation2 + $0x9c] sm:$0xff]
    %v494 = vld [vmem:[#allocation2 + $0xa4] sm:$0xf]
    %v495 = vld [vmem:[#allocation2 + $0xa8] sm:$0xff]
    %v496 = vld [vmem:[#allocation2 + $0xb0] sm:$0xf]
    %v497 = vld [vmem:[#allocation2 + $0xb4] sm:$0xff]
    %v498 = vld [vmem:[#allocation2 + $0xbc] sm:$0xf]
    %v499 = vld [vmem:[#allocation2 + $0xc0] sm:$0xff]
    %v500 = vld [vmem:[#allocation2 + $0xc8] sm:$0xf]
    %v501 = vld [vmem:[#allocation2 + $0xcc] sm:$0xff]
    %v502 = vld [vmem:[#allocation2 + $0xd4] sm:$0xf]
    %v503 = vld [vmem:[#allocation2 + $0xd8] sm:$0xff]
    %v504 = vld [vmem:[#allocation2 + $0xe0] sm:$0xf]
    %v505 = vld [vmem:[#allocation2 + $0xe4] sm:$0xff]
    %v506 = vld [vmem:[#allocation2 + $0xec] sm:$0xf]
    %v507 = vld [vmem:[#allocation2 + $0xf0] sm:$0xff]
    %v508 = vld [vmem:[#allocation2 + $0xf8] sm:$0xf]
    %v509 = vld [vmem:[#allocation2 + $0xfc] sm:$0xff]
    %v510 = vld [vmem:[#allocation2 + $0x104] sm:$0xf]
    %v511 = vld [vmem:[#allocation2 + $0x108] sm:$0xff]
    %v512 = vld [vmem:[#allocation2 + $0x110] sm:$0xf]
    %v513 = vld [vmem:[#allocation2 + $0x114] sm:$0xff]
    %v514 = vld [vmem:[#allocation2 + $0x11c] sm:$0xf]
    %v515 = vld [vmem:[#allocation2 + $0x120] sm:$0xff]
    %v516 = vld [vmem:[#allocation2 + $0x128] sm:$0xf]
    %v517 = vld [vmem:[#allocation2 + $0x12c] sm:$0xff]
    %v518 = vld [vmem:[#allocation2 + $0x134] sm:$0xf]
    %v519 = vld [vmem:[#allocation2 + $0x138] sm:$0xff]
    %v520 = vld [vmem:[#allocation2 + $0x140] sm:$0xf]
    %v521 = vld [vmem:[#allocation2 + $0x144] sm:$0xff]
    %v522 = vld [vmem:[#allocation2 + $0x14c] sm:$0xf]
    %v523 = vld [vmem:[#allocation2 + $0x150] sm:$0xff]
    %v524 = vld [vmem:[#allocation2 + $0x158] sm:$0xf]
    %v525 = vld [vmem:[#allocation2 + $0x15c] sm:$0xff]
    %v526 = vld [vmem:[#allocation2 + $0x164] sm:$0xf]
    %v527 = vld [vmem:[#allocation2 + $0x168] sm:$0xff]
    %v528 = vld [vmem:[#allocation2 + $0x170] sm:$0xf]
    %v529 = vld [vmem:[#allocation2 + $0x174] sm:$0xff]
    %v530 = vld [vmem:[#allocation2 + $0x17c] sm:$0xf]
    %v531 = vld [vmem:[#allocation2 + $0x180] sm:$0xff]
    %v532 = vld [vmem:[#allocation2 + $0x188] sm:$0xf]
    %v533 = vld [vmem:[#allocation2 + $0x18c] sm:$0xff]
    %v534 = vld [vmem:[#allocation2 + $0x194] sm:$0xf]
    %v535 = vld [vmem:[#allocation2 + $0x198] sm:$0xff]
    %v536 = vld [vmem:[#allocation2 + $0x1a0] sm:$0xf]
    %v537 = vld [vmem:[#allocation2 + $0x1a4] sm:$0xff]
    %v538 = vld [vmem:[#allocation2 + $0x1ac] sm:$0xf]
    %v539 = vld [vmem:[#allocation2 + $0x1b0] sm:$0xff]
    %v540 = vld [vmem:[#allocation2 + $0x1b8] sm:$0xf]
    %v541 = vld [vmem:[#allocation2 + $0x1bc] sm:$0xff]
    %v542 = vld [vmem:[#allocation2 + $0x1c4] sm:$0xf]
    %v543 = vld [vmem:[#allocation2 + $0x1c8] sm:$0xff]
    %v544 = vld [vmem:[#allocation2 + $0x1d0] sm:$0xf]
    %v545 = vld [vmem:[#allocation2 + $0x1d4] sm:$0xff]
    %v546 = vld [vmem:[#allocation2 + $0x1dc] sm:$0xf]
    %v547 = vld [vmem:[#allocation2 + $0x1e0] sm:$0xff]
    %v548 = vld [vmem:[#allocation2 + $0x1e8] sm:$0xf]
    %v549 = vld [vmem:[#allocation2 + $0x1ec] sm:$0xff]
    %v550 = vld [vmem:[#allocation2 + $0x1f4] sm:$0xf]
    %v551 = vld [vmem:[#allocation2 + $0x1f8] sm:$0xff]
    %v552 = vld [vmem:[#allocation2 + $0x200] sm:$0xf]
    %v553 = vld [vmem:[#allocation2 + $0x204] sm:$0xff]
    %v554 = vld [vmem:[#allocation2 + $0x20c] sm:$0xf]
    %v555 = vld [vmem:[#allocation2 + $0x210] sm:$0xff]
    %v556 = vld [vmem:[#allocation2 + $0x218] sm:$0xf]
    %v557 = vld [vmem:[#allocation2 + $0x21c] sm:$0xff]
    %v558 = vld [vmem:[#allocation2 + $0x224] sm:$0xf]
    %v559 = vld [vmem:[#allocation2 + $0x228] sm:$0xff]
    %v560 = vld [vmem:[#allocation2 + $0x230] sm:$0xf]
    %v561 = vld [vmem:[#allocation2 + $0x234] sm:$0xff]
    %v562 = vld [vmem:[#allocation2 + $0x23c] sm:$0xf]
    %v563 = vld [vmem:[#allocation2 + $0x240] sm:$0xff]
    %v564 = vld [vmem:[#allocation2 + $0x248] sm:$0xf]
    %v565 = vld [vmem:[#allocation2 + $0x24c] sm:$0xff]
    %v566 = vld [vmem:[#allocation2 + $0x254] sm:$0xf]
    %v567 = vld [vmem:[#allocation2 + $0x258] sm:$0xff]
    %v568 = vld [vmem:[#allocation2 + $0x260] sm:$0xf]
    %v569 = vld [vmem:[#allocation2 + $0x264] sm:$0xff]
    %v570 = vld [vmem:[#allocation2 + $0x26c] sm:$0xf]
    %v571 = vld [vmem:[#allocation2 + $0x270] sm:$0xff]
    %v572 = vld [vmem:[#allocation2 + $0x278] sm:$0xf]
    %v573 = vld [vmem:[#allocation2 + $0x27c] sm:$0xff]
    %v574 = vld [vmem:[#allocation2 + $0x284] sm:$0xf]
    %v575 = vld [vmem:[#allocation2 + $0x288] sm:$0xff]
    %v576 = vld [vmem:[#allocation2 + $0x290] sm:$0xf]
    %v577 = vld [vmem:[#allocation2 + $0x294] sm:$0xff]
    %v578 = vld [vmem:[#allocation2 + $0x29c] sm:$0xf]
    %v579 = vld [vmem:[#allocation2 + $0x2a0] sm:$0xff]
    %v580 = vld [vmem:[#allocation2 + $0x2a8] sm:$0xf]
    %v581 = vld [vmem:[#allocation2 + $0x2ac] sm:$0xff]
    %v582 = vld [vmem:[#allocation2 + $0x2b4] sm:$0xf]
    %v583 = vld [vmem:[#allocation2 + $0x2b8] sm:$0xff]
    %v584 = vld [vmem:[#allocation2 + $0x2c0] sm:$0xf]
    %v585 = vld [vmem:[#allocation2 + $0x2c4] sm:$0xff]
    %v586 = vld [vmem:[#allocation2 + $0x2cc] sm:$0xf]
    %v587 = vld [vmem:[#allocation2 + $0x2d0] sm:$0xff]
    %v588 = vld [vmem:[#allocation2 + $0x2d8] sm:$0xf]
    %v589 = vld [vmem:[#allocation2 + $0x2dc] sm:$0xff]
    %v590 = vld [vmem:[#allocation2 + $0x2e4] sm:$0xf]
    %v591 = vld [vmem:[#allocation2 + $0x2e8] sm:$0xff]
    %v592 = vld [vmem:[#allocation2 + $0x2f0] sm:$0xf]
    %v593 = vld [vmem:[#allocation2 + $0x2f4] sm:$0xff]
    %v594 = vld [vmem:[#allocation2 + $0x2fc] sm:$0xf]
    %v595 = vld [vmem:[%s4] sm:$0x7]
    %v597 = vlaneseq
    %v598 = vshrl.u32 %v597, 7
    %v599 = vsub.s32 0, %v598
    %v600 = vrot.slane %v595, %v599
    %v601 = vlaneseq
    %v602 = vshrl.u32 %v601, 7
    %v603 = vsub.s32 1, %v602
    %v604 = vrot.slane %v595, %v603
    %v605 = vlaneseq
    %v606 = vshrl.u32 %v605, 7
    %v607 = vsub.s32 2, %v606
    %v608 = vrot.slane %v595, %v607
    %v740 = vunpack.c.l.b16 %v467
    %v741 = vunpack.c.h.b16 %v467
    %v742 = vunpack.c.l.b16 %v468
    %v743 = vunpack.c.l.b16 %v469
    %v744 = vunpack.c.h.b16 %v469
    %v745 = vunpack.c.l.b16 %v470
    %v746 = vunpack.c.l.b16 %v471
    %v747 = vunpack.c.h.b16 %v471
    %v748 = vunpack.c.l.b16 %v472
    %v749 = vunpack.c.l.b16 %v473
    %v750 = vunpack.c.h.b16 %v473
    %v751 = vunpack.c.l.b16 %v474
    %v752 = vunpack.c.l.b16 %v475
    %v753 = vunpack.c.h.b16 %v475
    %v754 = vunpack.c.l.b16 %v476
    %v755 = vunpack.c.l.b16 %v477
    %v756 = vunpack.c.h.b16 %v477
    %v757 = vunpack.c.l.b16 %v478
    %v758 = vunpack.c.l.b16 %v479
    %v759 = vunpack.c.h.b16 %v479
    %v760 = vunpack.c.l.b16 %v480
    %v761 = vunpack.c.l.b16 %v481
    %v762 = vunpack.c.h.b16 %v481
    %v763 = vunpack.c.l.b16 %v482
    %v764 = vunpack.c.l.b16 %v483
    %v765 = vunpack.c.h.b16 %v483
    %v766 = vunpack.c.l.b16 %v484
    %v767 = vunpack.c.l.b16 %v485
    %v768 = vunpack.c.h.b16 %v485
    %v769 = vunpack.c.l.b16 %v486
    %v770 = vunpack.c.l.b16 %v487
    %v771 = vunpack.c.h.b16 %v487
    %v772 = vunpack.c.l.b16 %v488
    %v773 = vunpack.c.l.b16 %v489
    %v774 = vunpack.c.h.b16 %v489
    %v775 = vunpack.c.l.b16 %v490
    %v776 = vunpack.c.l.b16 %v491
    %v777 = vunpack.c.h.b16 %v491
    %v778 = vunpack.c.l.b16 %v492
    %v779 = vunpack.c.l.b16 %v493
    %v780 = vunpack.c.h.b16 %v493
    %v781 = vunpack.c.l.b16 %v494
    %v782 = vunpack.c.l.b16 %v495
    %v783 = vunpack.c.h.b16 %v495
    %v784 = vunpack.c.l.b16 %v496
    %v785 = vunpack.c.l.b16 %v497
    %v786 = vunpack.c.h.b16 %v497
    %v787 = vunpack.c.l.b16 %v498
    %v788 = vunpack.c.l.b16 %v499
    %v789 = vunpack.c.h.b16 %v499
    %v790 = vunpack.c.l.b16 %v500
    %v791 = vunpack.c.l.b16 %v501
    %v792 = vunpack.c.h.b16 %v501
    %v793 = vunpack.c.l.b16 %v502
    %v794 = vunpack.c.l.b16 %v503
    %v795 = vunpack.c.h.b16 %v503
    %v796 = vunpack.c.l.b16 %v504
    %v797 = vunpack.c.l.b16 %v505
    %v798 = vunpack.c.h.b16 %v505
    %v799 = vunpack.c.l.b16 %v506
    %v800 = vunpack.c.l.b16 %v507
    %v801 = vunpack.c.h.b16 %v507
    %v802 = vunpack.c.l.b16 %v508
    %v803 = vunpack.c.l.b16 %v509
    %v804 = vunpack.c.h.b16 %v509
    %v805 = vunpack.c.l.b16 %v510
    %v806 = vunpack.c.l.b16 %v511
    %v807 = vunpack.c.h.b16 %v511
    %v808 = vunpack.c.l.b16 %v512
    %v809 = vunpack.c.l.b16 %v513
    %v810 = vunpack.c.h.b16 %v513
    %v811 = vunpack.c.l.b16 %v514
    %v812 = vunpack.c.l.b16 %v515
    %v813 = vunpack.c.h.b16 %v515
    %v814 = vunpack.c.l.b16 %v516
    %v815 = vunpack.c.l.b16 %v517
    %v816 = vunpack.c.h.b16 %v517
    %v817 = vunpack.c.l.b16 %v518
    %v818 = vunpack.c.l.b16 %v519
    %v819 = vunpack.c.h.b16 %v519
    %v820 = vunpack.c.l.b16 %v520
    %v821 = vunpack.c.l.b16 %v521
    %v822 = vunpack.c.h.b16 %v521
    %v823 = vunpack.c.l.b16 %v522
    %v824 = vunpack.c.l.b16 %v523
    %v825 = vunpack.c.h.b16 %v523
    %v826 = vunpack.c.l.b16 %v524
    %v827 = vunpack.c.l.b16 %v525
    %v828 = vunpack.c.h.b16 %v525
    %v829 = vunpack.c.l.b16 %v526
    %v830 = vunpack.c.l.b16 %v527
    %v831 = vunpack.c.h.b16 %v527
    %v832 = vunpack.c.l.b16 %v528
    %v833 = vunpack.c.l.b16 %v529
    %v834 = vunpack.c.h.b16 %v529
    %v835 = vunpack.c.l.b16 %v530
    %v836 = vunpack.c.l.b16 %v531
    %v837 = vunpack.c.h.b16 %v531
    %v838 = vunpack.c.l.b16 %v532
    %v839 = vunpack.c.l.b16 %v533
    %v840 = vunpack.c.h.b16 %v533
    %v841 = vunpack.c.l.b16 %v534
    %v842 = vunpack.c.l.b16 %v535
    %v843 = vunpack.c.h.b16 %v535
    %v844 = vunpack.c.l.b16 %v536
    %v845 = vunpack.c.l.b16 %v537
    %v846 = vunpack.c.h.b16 %v537
    %v847 = vunpack.c.l.b16 %v538
    %v848 = vunpack.c.l.b16 %v539
    %v849 = vunpack.c.h.b16 %v539
    %v850 = vunpack.c.l.b16 %v540
    %v851 = vunpack.c.l.b16 %v541
    %v852 = vunpack.c.h.b16 %v541
    %v853 = vunpack.c.l.b16 %v542
    %v854 = vunpack.c.l.b16 %v543
    %v855 = vunpack.c.h.b16 %v543
    %v856 = vunpack.c.l.b16 %v544
    %v857 = vunpack.c.l.b16 %v545
    %v858 = vunpack.c.h.b16 %v545
    %v859 = vunpack.c.l.b16 %v546
    %v860 = vunpack.c.l.b16 %v547
    %v861 = vunpack.c.h.b16 %v547
    %v862 = vunpack.c.l.b16 %v548
    %v863 = vunpack.c.l.b16 %v549
    %v864 = vunpack.c.h.b16 %v549
    %v865 = vunpack.c.l.b16 %v550
    %v866 = vunpack.c.l.b16 %v551
    %v867 = vunpack.c.h.b16 %v551
    %v868 = vunpack.c.l.b16 %v552
    %v869 = vunpack.c.l.b16 %v553
    %v870 = vunpack.c.h.b16 %v553
    %v871 = vunpack.c.l.b16 %v554
    %v872 = vunpack.c.l.b16 %v555
    %v873 = vunpack.c.h.b16 %v555
    %v874 = vunpack.c.l.b16 %v556
    %v875 = vunpack.c.l.b16 %v557
    %v876 = vunpack.c.h.b16 %v557
    %v877 = vunpack.c.l.b16 %v558
    %v878 = vunpack.c.l.b16 %v559
    %v879 = vunpack.c.h.b16 %v559
    %v880 = vunpack.c.l.b16 %v560
    %v881 = vunpack.c.l.b16 %v561
    %v882 = vunpack.c.h.b16 %v561
    %v883 = vunpack.c.l.b16 %v562
    %v884 = vunpack.c.l.b16 %v563
    %v885 = vunpack.c.h.b16 %v563
    %v886 = vunpack.c.l.b16 %v564
    %v887 = vunpack.c.l.b16 %v565
    %v888 = vunpack.c.h.b16 %v565
    %v889 = vunpack.c.l.b16 %v566
    %v890 = vunpack.c.l.b16 %v567
    %v891 = vunpack.c.h.b16 %v567
    %v892 = vunpack.c.l.b16 %v568
    %v893 = vunpack.c.l.b16 %v569
    %v894 = vunpack.c.h.b16 %v569
    %v895 = vunpack.c.l.b16 %v570
    %v896 = vunpack.c.l.b16 %v571
    %v897 = vunpack.c.h.b16 %v571
    %v898 = vunpack.c.l.b16 %v572
    %v899 = vunpack.c.l.b16 %v573
    %v900 = vunpack.c.h.b16 %v573
    %v901 = vunpack.c.l.b16 %v574
    %v902 = vunpack.c.l.b16 %v575
    %v903 = vunpack.c.h.b16 %v575
    %v904 = vunpack.c.l.b16 %v576
    %v905 = vunpack.c.l.b16 %v577
    %v906 = vunpack.c.h.b16 %v577
    %v907 = vunpack.c.l.b16 %v578
    %v908 = vunpack.c.l.b16 %v579
    %v909 = vunpack.c.h.b16 %v579
    %v910 = vunpack.c.l.b16 %v580
    %v911 = vunpack.c.l.b16 %v581
    %v912 = vunpack.c.h.b16 %v581
    %v913 = vunpack.c.l.b16 %v582
    %v914 = vunpack.c.l.b16 %v583
    %v915 = vunpack.c.h.b16 %v583
    %v916 = vunpack.c.l.b16 %v584
    %v917 = vunpack.c.l.b16 %v585
    %v918 = vunpack.c.h.b16 %v585
    %v919 = vunpack.c.l.b16 %v586
    %v920 = vunpack.c.l.b16 %v587
    %v921 = vunpack.c.h.b16 %v587
    %v922 = vunpack.c.l.b16 %v588
    %v923 = vunpack.c.l.b16 %v589
    %v924 = vunpack.c.h.b16 %v589
    %v925 = vunpack.c.l.b16 %v590
    %v926 = vunpack.c.l.b16 %v591
    %v927 = vunpack.c.h.b16 %v591
    %v928 = vunpack.c.l.b16 %v592
    %v929 = vunpack.c.l.b16 %v593
    %v930 = vunpack.c.h.b16 %v593
    %v931 = vunpack.c.l.b16 %v594
    %v932 = vpack.c.b16 %v743, %v740
    %v933 = vpack.c.b16 %v744, %v741
    %v934 = vpack.c.b16 %v745, %v742
    %v935 = vpack.c.b16 %v749, %v746
    %v936 = vpack.c.b16 %v750, %v747
    %v937 = vpack.c.b16 %v751, %v748
    %v938 = vpack.c.b16 %v755, %v752
    %v939 = vpack.c.b16 %v756, %v753
    %v940 = vpack.c.b16 %v757, %v754
    %v941 = vpack.c.b16 %v761, %v758
    %v942 = vpack.c.b16 %v762, %v759
    %v943 = vpack.c.b16 %v763, %v760
    %v944 = vpack.c.b16 %v767, %v764
    %v945 = vpack.c.b16 %v768, %v765
    %v946 = vpack.c.b16 %v769, %v766
    %v947 = vpack.c.b16 %v773, %v770
    %v948 = vpack.c.b16 %v774, %v771
    %v949 = vpack.c.b16 %v775, %v772
    %v950 = vpack.c.b16 %v779, %v776
    %v951 = vpack.c.b16 %v780, %v777
    %v952 = vpack.c.b16 %v781, %v778
    %v953 = vpack.c.b16 %v785, %v782
    %v954 = vpack.c.b16 %v786, %v783
    %v955 = vpack.c.b16 %v787, %v784
    %v956 = vpack.c.b16 %v791, %v788
    %v957 = vpack.c.b16 %v792, %v789
    %v958 = vpack.c.b16 %v793, %v790
    %v959 = vpack.c.b16 %v797, %v794
    %v960 = vpack.c.b16 %v798, %v795
    %v961 = vpack.c.b16 %v799, %v796
    %v962 = vpack.c.b16 %v803, %v800
    %v963 = vpack.c.b16 %v804, %v801
    %v964 = vpack.c.b16 %v805, %v802
    %v965 = vpack.c.b16 %v809, %v806
    %v966 = vpack.c.b16 %v810, %v807
    %v967 = vpack.c.b16 %v811, %v808
    %v968 = vpack.c.b16 %v815, %v812
    %v969 = vpack.c.b16 %v816, %v813
    %v970 = vpack.c.b16 %v817, %v814
    %v971 = vpack.c.b16 %v821, %v818
    %v972 = vpack.c.b16 %v822, %v819
    %v973 = vpack.c.b16 %v823, %v820
    %v974 = vpack.c.b16 %v827, %v824
    %v975 = vpack.c.b16 %v828, %v825
    %v976 = vpack.c.b16 %v829, %v826
    %v977 = vpack.c.b16 %v833, %v830
    %v978 = vpack.c.b16 %v834, %v831
    %v979 = vpack.c.b16 %v835, %v832
    %v980 = vpack.c.b16 %v839, %v836
    %v981 = vpack.c.b16 %v840, %v837
    %v982 = vpack.c.b16 %v841, %v838
    %v983 = vpack.c.b16 %v845, %v842
    %v984 = vpack.c.b16 %v846, %v843
    %v985 = vpack.c.b16 %v847, %v844
    %v986 = vpack.c.b16 %v851, %v848
    %v987 = vpack.c.b16 %v852, %v849
    %v988 = vpack.c.b16 %v853, %v850
    %v989 = vpack.c.b16 %v857, %v854
    %v990 = vpack.c.b16 %v858, %v855
    %v991 = vpack.c.b16 %v859, %v856
    %v992 = vpack.c.b16 %v863, %v860
    %v993 = vpack.c.b16 %v864, %v861
    %v994 = vpack.c.b16 %v865, %v862
    %v995 = vpack.c.b16 %v869, %v866
    %v996 = vpack.c.b16 %v870, %v867
    %v997 = vpack.c.b16 %v871, %v868
    %v998 = vpack.c.b16 %v875, %v872
    %v999 = vpack.c.b16 %v876, %v873
    %v1000 = vpack.c.b16 %v877, %v874
    %v1001 = vpack.c.b16 %v881, %v878
    %v1002 = vpack.c.b16 %v882, %v879
    %v1003 = vpack.c.b16 %v883, %v880
    %v1004 = vpack.c.b16 %v887, %v884
    %v1005 = vpack.c.b16 %v888, %v885
    %v1006 = vpack.c.b16 %v889, %v886
    %v1007 = vpack.c.b16 %v893, %v890
    %v1008 = vpack.c.b16 %v894, %v891
    %v1009 = vpack.c.b16 %v895, %v892
    %v1010 = vpack.c.b16 %v899, %v896
    %v1011 = vpack.c.b16 %v900, %v897
    %v1012 = vpack.c.b16 %v901, %v898
    %v1013 = vpack.c.b16 %v905, %v902
    %v1014 = vpack.c.b16 %v906, %v903
    %v1015 = vpack.c.b16 %v907, %v904
    %v1016 = vpack.c.b16 %v911, %v908
    %v1017 = vpack.c.b16 %v912, %v909
    %v1018 = vpack.c.b16 %v913, %v910
    %v1019 = vpack.c.b16 %v917, %v914
    %v1020 = vpack.c.b16 %v918, %v915
    %v1021 = vpack.c.b16 %v919, %v916
    %v1022 = vpack.c.b16 %v923, %v920
    %v1023 = vpack.c.b16 %v924, %v921
    %v1024 = vpack.c.b16 %v925, %v922
    %v1025 = vpack.c.b16 %v929, %v926
    %v1026 = vpack.c.b16 %v930, %v927
    %v1027 = vpack.c.b16 %v931, %v928
    %1124 = vmatprep.subr.bf16.mxu0 %v933
    %1125 = vmatpush1.bf16.msra.mxu0 %v932
    %1126 = vmatprep.subr.bf16.mxu0 %v936
    %1127 = vmatpush1.bf16.msra.mxu0 %v935
    %1128 = vmatprep.subr.bf16.mxu0 %v939
    %1129 = vmatpush1.bf16.msra.mxu0 %v938
    %1130 = vmatprep.subr.bf16.mxu0 %v942
    %1131 = vmatpush1.bf16.msra.mxu0 %v941
    %1132 = vmatprep.subr.bf16.mxu0 %v945
    %1133 = vmatpush1.bf16.msra.mxu0 %v944
    %1134 = vmatprep.subr.bf16.mxu0 %v948
    %1135 = vmatpush1.bf16.msra.mxu0 %v947
    %1136 = vmatprep.subr.bf16.mxu0 %v951
    %1137 = vmatpush1.bf16.msra.mxu0 %v950
    %1138 = vmatprep.subr.bf16.mxu0 %v954
    %1139 = vmatpush1.bf16.msra.mxu0 %v953
    %1140 = vmatprep.subr.bf16.mxu0 %v957
    %1141 = vmatpush1.bf16.msra.mxu0 %v956
    %1142 = vmatprep.subr.bf16.mxu0 %v960
    %1143 = vmatpush1.bf16.msra.mxu0 %v959
    %1144 = vmatprep.subr.bf16.mxu0 %v963
    %1145 = vmatpush1.bf16.msra.mxu0 %v962
    %1146 = vmatprep.subr.bf16.mxu0 %v966
    %1147 = vmatpush1.bf16.msra.mxu0 %v965
    %1148 = vmatprep.subr.bf16.mxu0 %v969
    %1149 = vmatpush1.bf16.msra.mxu0 %v968
    %1150 = vmatprep.subr.bf16.mxu0 %v972
    %1151 = vmatpush1.bf16.msra.mxu0 %v971
    %1152 = vmatprep.subr.bf16.mxu0 %v975
    %1153 = vmatpush1.bf16.msra.mxu0 %v974
    %1154 = vmatprep.subr.bf16.mxu0 %v978
    %1155 = vmatpush1.bf16.msra.mxu0 %v977
    %1156 = vmatprep.mubr.bf16.mxu0 %v444
    %1157 = vmatmul.mubr.bf16.gmra.mrb[0].mxu0 %v443
    %v1158 = vpop.f32.mrb[0].mxu0
    %v1159 = vadd.f32 %v600, %v1158
    %v1160 = vpop.f32.mrb[0].mxu0
    %v1161 = vadd.f32 %v604, %v1160
    %v1162 = vpop.f32.mrb[0].mxu0
    %v1163 = vadd.f32 %v600, %v1162
    %v1164 = vpop.f32.mrb[0].mxu0
    %v1165 = vadd.f32 %v604, %v1164
    %1166 = vmatprep.mubr.bf16.mxu0 %v448
    %1167 = vmatmul.mubr.bf16.gmra.mrb[0].mxu0 %v447
    %v1168 = vpop.f32.mrb[0].mxu0
    %v1169 = vadd.f32 %v600, %v1168
    %v1170 = vpop.f32.mrb[0].mxu0
    %v1171 = vadd.f32 %v604, %v1170
    %v1172 = vpop.f32.mrb[0].mxu0
    %v1173 = vadd.f32 %v600, %v1172
    %v1174 = vpop.f32.mrb[0].mxu0
    %v1175 = vadd.f32 %v604, %v1174
    %1176 = vmatprep.mubr.bf16.mxu0 %v452
    %1177 = vmatmul.mubr.bf16.gmra.mrb[0].mxu0 %v451
    %v1178 = vpop.f32.mrb[0].mxu0
    %v1179 = vadd.f32 %v600, %v1178
    %v1180 = vpop.f32.mrb[0].mxu0
    %v1181 = vadd.f32 %v604, %v1180
    %v1182 = vpop.f32.mrb[0].mxu0
    %v1183 = vadd.f32 %v600, %v1182
    %v1184 = vpop.f32.mrb[0].mxu0
    %v1185 = vadd.f32 %v604, %v1184
    %1186 = vmatprep.mubr.bf16.mxu0 %v456
    %1187 = vmatmul.mubr.bf16.gmra.mrb[0].mxu0 %v455
    %v1188 = vpop.f32.mrb[0].mxu0
    %v1189 = vadd.f32 %v600, %v1188
    %v1190 = vpop.f32.mrb[0].mxu0
    %v1191 = vadd.f32 %v604, %v1190
    %v1192 = vpop.f32.mrb[0].mxu0
    %v1193 = vadd.f32 %v600, %v1192
    %v1194 = vpop.f32.mrb[0].mxu0
    %v1195 = vadd.f32 %v604, %v1194
    %1196 = vmatprep.mubr.bf16.mxu0 %v460
    %1197 = vmatmul.mubr.bf16.gmra.mrb[0].mxu0 %v459
    %v1198 = vpop.f32.mrb[0].mxu0
    %v1199 = vadd.f32 %v600, %v1198
    %v1200 = vpop.f32.mrb[0].mxu0
    %v1201 = vadd.f32 %v604, %v1200
    %v1202 = vpop.f32.mrb[0].mxu0
    %v1203 = vadd.f32 %v600, %v1202
    %v1204 = vpop.f32.mrb[0].mxu0
    %v1205 = vadd.f32 %v604, %v1204
    %1206 = vmatprep.mubr.bf16.mxu0 %v464
    %1207 = vmatmul.mubr.bf16.gmra.mrb[0].mxu0 %v463
    %v1208 = vpop.f32.mrb[0].mxu0
    %v1209 = vadd.f32 %v600, %v1208
    %v1210 = vpop.f32.mrb[0].mxu0
    %v1211 = vadd.f32 %v604, %v1210
    %v1212 = vpop.f32.mrb[0].mxu0
    %v1213 = vpop.f32.mrb[0].mxu0
    %1214 = vdwg.mxu0
    %1215 = vmatprep.subr.bf16.mxu0 %v981
    %1216 = vmatpush1.bf16.msra.mxu0 %v980
    %1217 = vmatprep.subr.bf16.mxu0 %v984
    %1218 = vmatpush1.bf16.msra.mxu0 %v983
    %1219 = vmatprep.subr.bf16.mxu0 %v987
    %1220 = vmatpush1.bf16.msra.mxu0 %v986
    %1221 = vmatprep.subr.bf16.mxu0 %v990
    %1222 = vmatpush1.bf16.msra.mxu0 %v989
    %1223 = vmatprep.subr.bf16.mxu0 %v993
    %1224 = vmatpush1.bf16.msra.mxu0 %v992
    %1225 = vmatprep.subr.bf16.mxu0 %v996
    %1226 = vmatpush1.bf16.msra.mxu0 %v995
    %1227 = vmatprep.subr.bf16.mxu0 %v999
    %1228 = vmatpush1.bf16.msra.mxu0 %v998
    %1229 = vmatprep.subr.bf16.mxu0 %v1002
    %1230 = vmatpush1.bf16.msra.mxu0 %v1001
    %1231 = vmatprep.subr.bf16.mxu0 %v1005
    %1232 = vmatpush1.bf16.msra.mxu0 %v1004
    %1233 = vmatprep.subr.bf16.mxu0 %v1008
    %1234 = vmatpush1.bf16.msra.mxu0 %v1007
    %1235 = vmatprep.subr.bf16.mxu0 %v1011
    %1236 = vmatpush1.bf16.msra.mxu0 %v1010
    %1237 = vmatprep.subr.bf16.mxu0 %v1014
    %1238 = vmatpush1.bf16.msra.mxu0 %v1013
    %1239 = vmatprep.subr.bf16.mxu0 %v1017
    %1240 = vmatpush1.bf16.msra.mxu0 %v1016
    %1241 = vmatprep.subr.bf16.mxu0 %v1020
    %1242 = vmatpush1.bf16.msra.mxu0 %v1019
    %1243 = vmatprep.subr.bf16.mxu0 %v1023
    %1244 = vmatpush1.bf16.msra.mxu0 %v1022
    %1245 = vmatprep.subr.bf16.mxu0 %v1026
    %1246 = vmatpush1.bf16.msra.mxu0 %v1025
    %1247 = vmatprep.mubr.bf16.mxu0 %v446
    %1248 = vmatmul.mubr.bf16.gmra.mrb[0].mxu0 %v445
    %v1249 = vpop.f32.mrb[0].mxu0
    %v1250 = vadd.f32 %v1159, %v1249
    %v1251 = vpop.f32.mrb[0].mxu0
    %v1252 = vadd.f32 %v1161, %v1251
    %v1253 = vpop.f32.mrb[0].mxu0
    %v1254 = vadd.f32 %v1163, %v1253
    %v1255 = vpop.f32.mrb[0].mxu0
    %v1256 = vadd.f32 %v1165, %v1255
    %1257 = vmatprep.mubr.bf16.mxu0 %v450
    %1258 = vmatmul.mubr.bf16.gmra.mrb[0].mxu0 %v449
    %v1259 = vpop.f32.mrb[0].mxu0
    %v1260 = vadd.f32 %v1169, %v1259
    %v1261 = vpop.f32.mrb[0].mxu0
    %v1262 = vadd.f32 %v1171, %v1261
    %v1263 = vpop.f32.mrb[0].mxu0
    %v1264 = vadd.f32 %v1173, %v1263
    %v1265 = vpop.f32.mrb[0].mxu0
    %v1266 = vadd.f32 %v1175, %v1265
    %1267 = vmatprep.mubr.bf16.mxu0 %v454
    %1268 = vmatmul.mubr.bf16.gmra.mrb[0].mxu0 %v453
    %v1269 = vpop.f32.mrb[0].mxu0
    %v1270 = vadd.f32 %v1179, %v1269
    %v1271 = vpop.f32.mrb[0].mxu0
    %v1272 = vadd.f32 %v1181, %v1271
    %v1273 = vpop.f32.mrb[0].mxu0
    %v1274 = vadd.f32 %v1183, %v1273
    %v1275 = vpop.f32.mrb[0].mxu0
    %v1276 = vadd.f32 %v1185, %v1275
    %1277 = vmatprep.mubr.bf16.mxu0 %v458
    %1278 = vmatmul.mubr.bf16.gmra.mrb[0].mxu0 %v457
    %v1279 = vpop.f32.mrb[0].mxu0
    %v1280 = vadd.f32 %v1189, %v1279
    %v1281 = vpop.f32.mrb[0].mxu0
    %v1282 = vadd.f32 %v1191, %v1281
    %v1283 = vpop.f32.mrb[0].mxu0
    %v1284 = vadd.f32 %v1193, %v1283
    %v1285 = vpop.f32.mrb[0].mxu0
    %v1286 = vadd.f32 %v1195, %v1285
    %1287 = vmatprep.mubr.bf16.mxu0 %v462
    %1288 = vmatmul.mubr.bf16.gmra.mrb[0].mxu0 %v461
    %v1289 = vpop.f32.mrb[0].mxu0
    %v1290 = vadd.f32 %v1199, %v1289
    %v1291 = vpop.f32.mrb[0].mxu0
    %v1292 = vadd.f32 %v1201, %v1291
    %v1293 = vpop.f32.mrb[0].mxu0
    %v1294 = vadd.f32 %v1203, %v1293
    %v1295 = vpop.f32.mrb[0].mxu0
    %v1296 = vadd.f32 %v1205, %v1295
    %1297 = vmatprep.mubr.bf16.mxu0 %v466
    %1298 = vmatmul.mubr.bf16.gmra.mrb[0].mxu0 %v465
    %v1299 = vpop.f32.mrb[0].mxu0
    %v1300 = vadd.f32 %v1209, %v1299
    %v1301 = vpop.f32.mrb[0].mxu0
    %v1302 = vadd.f32 %v1211, %v1301
    %v1303 = vpop.f32.mrb[0].mxu0
    %v1304 = vpop.f32.mrb[0].mxu0
    %1305 = vdwg.mxu0
    %1306 = vmatprep.subr.bf16.mxu0 0
    %1307 = vmatpush1.bf16.msra.mxu0 %v934
    %1308 = vmatprep.subr.bf16.mxu0 0
    %1309 = vmatpush1.bf16.msra.mxu0 %v937
    %1310 = vmatprep.subr.bf16.mxu0 0
    %1311 = vmatpush1.bf16.msra.mxu0 %v940
    %1312 = vmatprep.subr.bf16.mxu0 0
    %1313 = vmatpush1.bf16.msra.mxu0 %v943
    %1314 = vmatprep.subr.bf16.mxu0 0
    %1315 = vmatpush1.bf16.msra.mxu0 %v946
    %1316 = vmatprep.subr.bf16.mxu0 0
    %1317 = vmatpush1.bf16.msra.mxu0 %v949
    %1318 = vmatprep.subr.bf16.mxu0 0
    %1319 = vmatpush1.bf16.msra.mxu0 %v952
    %1320 = vmatprep.subr.bf16.mxu0 0
    %1321 = vmatpush1.bf16.msra.mxu0 %v955
    %1322 = vmatprep.subr.bf16.mxu0 0
    %1323 = vmatpush1.bf16.msra.mxu0 %v958
    %1324 = vmatprep.subr.bf16.mxu0 0
    %1325 = vmatpush1.bf16.msra.mxu0 %v961
    %1326 = vmatprep.subr.bf16.mxu0 0
    %1327 = vmatpush1.bf16.msra.mxu0 %v964
    %1328 = vmatprep.subr.bf16.mxu0 0
    %1329 = vmatpush1.bf16.msra.mxu0 %v967
    %1330 = vmatprep.subr.bf16.mxu0 0
    %1331 = vmatpush1.bf16.msra.mxu0 %v970
    %1332 = vmatprep.subr.bf16.mxu0 0
    %1333 = vmatpush1.bf16.msra.mxu0 %v973
    %1334 = vmatprep.subr.bf16.mxu0 0
    %1335 = vmatpush1.bf16.msra.mxu0 %v976
    %1336 = vmatprep.subr.bf16.mxu0 0
    %1337 = vmatpush1.bf16.msra.mxu0 %v979
    %1338 = vmatprep.mubr.bf16.mxu0 %v444
    %1339 = vmatmul.mubr.bf16.gmra.mrb[0].mxu0 %v443
    %v1340 = vpop.f32.mrb[0].mxu0
    %v1341 = vadd.f32 %v608, %v1340
    %v1342 = vpop.f32.mrb[0].mxu0
    %v1343 = vpop.f32.mrb[0].mxu0
    %v1344 = vadd.f32 %v608, %v1343
    %v1345 = vpop.f32.mrb[0].mxu0
    %1346 = vmatprep.mubr.bf16.mxu0 %v448
    %1347 = vmatmul.mubr.bf16.gmra.mrb[0].mxu0 %v447
    %v1348 = vpop.f32.mrb[0].mxu0
    %v1349 = vadd.f32 %v608, %v1348
    %v1350 = vpop.f32.mrb[0].mxu0
    %v1351 = vpop.f32.mrb[0].mxu0
    %v1352 = vadd.f32 %v608, %v1351
    %v1353 = vpop.f32.mrb[0].mxu0
    %1354 = vmatprep.mubr.bf16.mxu0 %v452
    %1355 = vmatmul.mubr.bf16.gmra.mrb[0].mxu0 %v451
    %v1356 = vpop.f32.mrb[0].mxu0
    %v1357 = vadd.f32 %v608, %v1356
    %v1358 = vpop.f32.mrb[0].mxu0
    %v1359 = vpop.f32.mrb[0].mxu0
    %v1360 = vadd.f32 %v608, %v1359
    %v1361 = vpop.f32.mrb[0].mxu0
    %1362 = vmatprep.mubr.bf16.mxu0 %v456
    %1363 = vmatmul.mubr.bf16.gmra.mrb[0].mxu0 %v455
    %v1364 = vpop.f32.mrb[0].mxu0
    %v1365 = vadd.f32 %v608, %v1364
    %v1366 = vpop.f32.mrb[0].mxu0
    %v1367 = vpop.f32.mrb[0].mxu0
    %v1368 = vadd.f32 %v608, %v1367
    %v1369 = vpop.f32.mrb[0].mxu0
    %1370 = vmatprep.mubr.bf16.mxu0 %v460
    %1371 = vmatmul.mubr.bf16.gmra.mrb[0].mxu0 %v459
    %v1372 = vpop.f32.mrb[0].mxu0
    %v1373 = vadd.f32 %v608, %v1372
    %v1374 = vpop.f32.mrb[0].mxu0
    %v1375 = vpop.f32.mrb[0].mxu0
    %v1376 = vadd.f32 %v608, %v1375
    %v1377 = vpop.f32.mrb[0].mxu0
    %1378 = vmatprep.mubr.bf16.mxu0 %v464
    %1379 = vmatmul.mubr.bf16.gmra.mrb[0].mxu0 %v463
    %v1380 = vpop.f32.mrb[0].mxu0
    %v1381 = vadd.f32 %v608, %v1380
    %v1382 = vpop.f32.mrb[0].mxu0
    %v1383 = vpop.f32.mrb[0].mxu0
    %v1384 = vpop.f32.mrb[0].mxu0
    %1385 = vdwg.mxu0
    %1386 = vmatprep.subr.bf16.mxu0 0
    %1387 = vmatpush1.bf16.msra.mxu0 %v982
    %1388 = vmatprep.subr.bf16.mxu0 0
    %1389 = vmatpush1.bf16.msra.mxu0 %v985
    %1390 = vmatprep.subr.bf16.mxu0 0
    %1391 = vmatpush1.bf16.msra.mxu0 %v988
    %1392 = vmatprep.subr.bf16.mxu0 0
    %1393 = vmatpush1.bf16.msra.mxu0 %v991
    %1394 = vmatprep.subr.bf16.mxu0 0
    %1395 = vmatpush1.bf16.msra.mxu0 %v994
    %1396 = vmatprep.subr.bf16.mxu0 0
    %1397 = vmatpush1.bf16.msra.mxu0 %v997
    %1398 = vmatprep.subr.bf16.mxu0 0
    %1399 = vmatpush1.bf16.msra.mxu0 %v1000
    %1400 = vmatprep.subr.bf16.mxu0 0
    %1401 = vmatpush1.bf16.msra.mxu0 %v1003
    %1402 = vmatprep.subr.bf16.mxu0 0
    %1403 = vmatpush1.bf16.msra.mxu0 %v1006
    %1404 = vmatprep.subr.bf16.mxu0 0
    %1405 = vmatpush1.bf16.msra.mxu0 %v1009
    %1406 = vmatprep.subr.bf16.mxu0 0
    %1407 = vmatpush1.bf16.msra.mxu0 %v1012
    %1408 = vmatprep.subr.bf16.mxu0 0
    %1409 = vmatpush1.bf16.msra.mxu0 %v1015
    %1410 = vmatprep.subr.bf16.mxu0 0
    %1411 = vmatpush1.bf16.msra.mxu0 %v1018
    %1412 = vmatprep.subr.bf16.mxu0 0
    %1413 = vmatpush1.bf16.msra.mxu0 %v1021
    %1414 = vmatprep.subr.bf16.mxu0 0
    %1415 = vmatpush1.bf16.msra.mxu0 %v1024
    %1416 = vmatprep.subr.bf16.mxu0 0
    %1417 = vmatpush1.bf16.msra.mxu0 %v1027
    %1418 = vmatprep.mubr.bf16.mxu0 %v446
    %1419 = vmatmul.mubr.bf16.gmra.mrb[0].mxu0 %v445
    %v1420 = vpop.f32.mrb[0].mxu0
    %v1421 = vadd.f32 %v1341, %v1420
    %v1422 = vpop.f32.mrb[0].mxu0
    %v1423 = vpop.f32.mrb[0].mxu0
    %v1424 = vadd.f32 %v1344, %v1423
    %v1425 = vpop.f32.mrb[0].mxu0
    %1426 = vmatprep.mubr.bf16.mxu0 %v450
    %1427 = vmatmul.mubr.bf16.gmra.mrb[0].mxu0 %v449
    %v1428 = vpop.f32.mrb[0].mxu0
    %v1429 = vadd.f32 %v1349, %v1428
    %v1430 = vpop.f32.mrb[0].mxu0
    %v1431 = vpop.f32.mrb[0].mxu0
    %v1432 = vadd.f32 %v1352, %v1431
    %v1433 = vpop.f32.mrb[0].mxu0
    %1434 = vmatprep.mubr.bf16.mxu0 %v454
    %1435 = vmatmul.mubr.bf16.gmra.mrb[0].mxu0 %v453
    %v1436 = vpop.f32.mrb[0].mxu0
    %v1437 = vadd.f32 %v1357, %v1436
    %v1438 = vpop.f32.mrb[0].mxu0
    %v1439 = vpop.f32.mrb[0].mxu0
    %v1440 = vadd.f32 %v1360, %v1439
    %v1441 = vpop.f32.mrb[0].mxu0
    %1442 = vmatprep.mubr.bf16.mxu0 %v458
    %1443 = vmatmul.mubr.bf16.gmra.mrb[0].mxu0 %v457
    %v1444 = vpop.f32.mrb[0].mxu0
    %v1445 = vadd.f32 %v1365, %v1444
    %v1446 = vpop.f32.mrb[0].mxu0
    %v1447 = vpop.f32.mrb[0].mxu0
    %v1448 = vadd.f32 %v1368, %v1447
    %v1449 = vpop.f32.mrb[0].mxu0
    %1450 = vmatprep.mubr.bf16.mxu0 %v462
    %1451 = vmatmul.mubr.bf16.gmra.mrb[0].mxu0 %v461
    %v1452 = vpop.f32.mrb[0].mxu0
    %v1453 = vadd.f32 %v1373, %v1452
    %v1454 = vpop.f32.mrb[0].mxu0
    %v1455 = vpop.f32.mrb[0].mxu0
    %v1456 = vadd.f32 %v1376, %v1455
    %v1457 = vpop.f32.mrb[0].mxu0
    %1458 = vmatprep.mubr.bf16.mxu0 %v466
    %1459 = vmatmul.mubr.bf16.gmra.mrb[0].mxu0 %v465
    %v1460 = vpop.f32.mrb[0].mxu0
    %v1461 = vadd.f32 %v1381, %v1460
    %v1462 = vpop.f32.mrb[0].mxu0
    %v1463 = vpop.f32.mrb[0].mxu0
    %v1464 = vpop.f32.mrb[0].mxu0
    %1465 = vdwg.mxu0
    %v1466 = vmax.f32 %v1250, 0.0
    %v1467 = vmax.f32 %v1252, 0.0
    %v1468 = vmax.f32 %v1421, 0.0
    %v1469 = vmax.f32 %v1254, 0.0
    %v1470 = vmax.f32 %v1256, 0.0
    %v1471 = vmax.f32 %v1424, 0.0
    %v1472 = vmax.f32 %v1260, 0.0
    %v1473 = vmax.f32 %v1262, 0.0
    %v1474 = vmax.f32 %v1429, 0.0
    %v1475 = vmax.f32 %v1264, 0.0
    %v1476 = vmax.f32 %v1266, 0.0
    %v1477 = vmax.f32 %v1432, 0.0
    %v1478 = vmax.f32 %v1270, 0.0
    %v1479 = vmax.f32 %v1272, 0.0
    %v1480 = vmax.f32 %v1437, 0.0
    %v1481 = vmax.f32 %v1274, 0.0
    %v1482 = vmax.f32 %v1276, 0.0
    %v1483 = vmax.f32 %v1440, 0.0
    %v1484 = vmax.f32 %v1280, 0.0
    %v1485 = vmax.f32 %v1282, 0.0
    %v1486 = vmax.f32 %v1445, 0.0
    %v1487 = vmax.f32 %v1284, 0.0
    %v1488 = vmax.f32 %v1286, 0.0
    %v1489 = vmax.f32 %v1448, 0.0
    %v1490 = vmax.f32 %v1290, 0.0
    %v1491 = vmax.f32 %v1292, 0.0
    %v1492 = vmax.f32 %v1453, 0.0
    %v1493 = vmax.f32 %v1294, 0.0
    %v1494 = vmax.f32 %v1296, 0.0
    %v1495 = vmax.f32 %v1456, 0.0
    %v1496 = vmax.f32 %v1300, 0.0
    %v1497 = vmax.f32 %v1302, 0.0
    %v1498 = vmax.f32 %v1461, 0.0
    %v1499 = vpack.c.bf16 %v1469, %v1466
    %v1500 = vpack.c.bf16 %v1470, %v1467
    %v1501 = vpack.c.bf16 %v1471, %v1468
    %v1502 = vpack.c.bf16 %v1475, %v1472
    %v1503 = vpack.c.bf16 %v1476, %v1473
    %v1504 = vpack.c.bf16 %v1477, %v1474
    %v1505 = vpack.c.bf16 %v1481, %v1478
    %v1506 = vpack.c.bf16 %v1482, %v1479
    %v1507 = vpack.c.bf16 %v1483, %v1480
    %v1508 = vpack.c.bf16 %v1487, %v1484
    %v1509 = vpack.c.bf16 %v1488, %v1485
    %v1510 = vpack.c.bf16 %v1489, %v1486
    %v1511 = vpack.c.bf16 %v1493, %v1490
    %v1512 = vpack.c.bf16 %v1494, %v1491
    %v1513 = vpack.c.bf16 %v1495, %v1492
    %v1514 = vpack.c.bf16 %v1496, %v1496
    %v1515 = vpack.c.bf16 %v1497, %v1497
    %v1516 = vpack.c.bf16 %v1498, %v1498
    %v1517 = vld [vmem:[#allocation4] sm:$0xf]
    %v1518 = vld [vmem:[#allocation4 + $0x4] sm:$0xf]
    %v1519 = vld [vmem:[#allocation4 + $0x8] sm:$0xf]
    %v1520 = vld [vmem:[#allocation4 + $0xc] sm:$0xf]
    %v1521 = vld [vmem:[#allocation4 + $0x10] sm:$0xf]
    %v1522 = vld [vmem:[#allocation4 + $0x14] sm:$0xf]
    %v1523 = vld [vmem:[#allocation4 + $0x18] sm:$0xf]
    %v1524 = vld [vmem:[#allocation4 + $0x1c] sm:$0xf]
    %v1525 = vld [vmem:[#allocation4 + $0x20] sm:$0xf]
    %v1526 = vld [vmem:[#allocation4 + $0x24] sm:$0xf]
    %v1527 = vld [vmem:[#allocation4 + $0x28] sm:$0xf]
    %v1539 = vunpack.c.l.b16 %v1517
    %v1540 = vunpack.c.l.b16 %v1518
    %v1541 = vunpack.c.l.b16 %v1519
    %v1542 = vunpack.c.l.b16 %v1520
    %v1543 = vunpack.c.l.b16 %v1521
    %v1544 = vunpack.c.l.b16 %v1522
    %v1545 = vunpack.c.l.b16 %v1523
    %v1546 = vunpack.c.l.b16 %v1524
    %v1547 = vunpack.c.l.b16 %v1525
    %v1548 = vunpack.c.l.b16 %v1526
    %v1549 = vunpack.c.l.b16 %v1527
    %v1550 = vpack.c.b16 %v1540, %v1539
    %v1551 = vpack.c.b16 %v1542, %v1541
    %v1552 = vpack.c.b16 %v1544, %v1543
    %v1553 = vpack.c.b16 %v1546, %v1545
    %v1554 = vpack.c.b16 %v1548, %v1547
    %v1555 = vpack.c.b16 %v1549, %v1549
    %vm1556 = vcmask 719872
    %v1558 = vsel %vm1556, %v1550, 0
    %v1561 = vsel %vm1556, %v1551, 0
    %v1564 = vsel %vm1556, %v1552, 0
    %v1567 = vsel %vm1556, %v1553, 0
    %v1570 = vsel %vm1556, %v1554, 0
    %v1573 = vsel %vm1556, %v1555, 0
    %vm1575 = vcmask 1043456
    %v1577 = vsel %vm1575, %v1514, 0
    %v1580 = vsel %vm1575, %v1515, 0
    %v1583 = vsel %vm1575, %v1516, 0
    %1585 = vmatprep.subr.bf16.mxu0 %v1500
    %1586 = vmatpush1.bf16.msra.mxu0 %v1499
    %1587 = vmatprep.subr.bf16.mxu0 %v1503
    %1588 = vmatpush1.bf16.msra.mxu0 %v1502
    %1589 = vmatprep.subr.bf16.mxu0 %v1506
    %1590 = vmatpush1.bf16.msra.mxu0 %v1505
    %1591 = vmatprep.subr.bf16.mxu0 %v1509
    %1592 = vmatpush1.bf16.msra.mxu0 %v1508
    %1593 = vmatprep.subr.bf16.mxu0 %v1512
    %1594 = vmatpush1.bf16.msra.mxu0 %v1511
    %1595 = vmatprep.subr.bf16.mxu0 %v1580
    %1596 = vmatpush1.bf16.msra.mxu0 %v1577
    %1597 = vmatprep.subr.bf16.mxu0 0
    %1598 = vmatpush1.bf16.msra.mxu0 0
    %1599 = vmatprep.subr.bf16.mxu0 0
    %1600 = vmatpush1.bf16.msra.mxu0 0
    %1601 = vmatprep.subr.bf16.mxu0 0
    %1602 = vmatpush1.bf16.msra.mxu0 0
    %1603 = vmatprep.subr.bf16.mxu0 0
    %1604 = vmatpush1.bf16.msra.mxu0 0
    %1605 = vmatprep.subr.bf16.mxu0 0
    %1606 = vmatpush1.bf16.msra.mxu0 0
    %1607 = vmatprep.subr.bf16.mxu0 0
    %1608 = vmatpush1.bf16.msra.mxu0 0
    %1609 = vmatprep.subr.bf16.mxu0 0
    %1610 = vmatpush1.bf16.msra.mxu0 0
    %1611 = vmatprep.subr.bf16.mxu0 0
    %1612 = vmatpush1.bf16.msra.mxu0 0
    %1613 = vmatprep.subr.bf16.mxu0 0
    %1614 = vmatpush1.bf16.msra.mxu0 0
    %1615 = vmatprep.subr.bf16.mxu0 0
    %1616 = vmatpush1.bf16.msra.mxu0 0
    %1617 = vmatprep.mubr.bf16.mxu0 0
    %1618 = vmatmul.mubr.bf16.gmra.mrb[0].mxu0 %v1558
    %v1619 = vpop.f32.mrb[0].mxu0
    %v1620 = vadd.f32 0.0, %v1619
    %v1621 = vpop.f32.mrb[0].mxu0
    %v1622 = vadd.f32 0.0, %v1621
    %v1623 = vpop.f32.mrb[0].mxu0
    %v1624 = vadd.f32 0.0, %v1623
    %v1625 = vpop.f32.mrb[0].mxu0
    %v1626 = vadd.f32 0.0, %v1625
    %1627 = vmatprep.mubr.bf16.mxu0 0
    %1628 = vmatmul.mubr.bf16.gmra.mrb[0].mxu0 %v1561
    %v1629 = vpop.f32.mrb[0].mxu0
    %v1630 = vadd.f32 0.0, %v1629
    %v1631 = vpop.f32.mrb[0].mxu0
    %v1632 = vadd.f32 0.0, %v1631
    %v1633 = vpop.f32.mrb[0].mxu0
    %v1634 = vadd.f32 0.0, %v1633
    %v1635 = vpop.f32.mrb[0].mxu0
    %v1636 = vadd.f32 0.0, %v1635
    %1637 = vmatprep.mubr.bf16.mxu0 0
    %1638 = vmatmul.mubr.bf16.gmra.mrb[0].mxu0 %v1564
    %v1639 = vpop.f32.mrb[0].mxu0
    %v1640 = vadd.f32 0.0, %v1639
    %v1641 = vpop.f32.mrb[0].mxu0
    %v1642 = vadd.f32 0.0, %v1641
    %v1643 = vpop.f32.mrb[0].mxu0
    %v1644 = vadd.f32 0.0, %v1643
    %v1645 = vpop.f32.mrb[0].mxu0
    %v1646 = vadd.f32 0.0, %v1645
    %1647 = vmatprep.mubr.bf16.mxu0 0
    %1648 = vmatmul.mubr.bf16.gmra.mrb[0].mxu0 %v1567
    %v1649 = vpop.f32.mrb[0].mxu0
    %v1650 = vadd.f32 0.0, %v1649
    %v1651 = vpop.f32.mrb[0].mxu0
    %v1652 = vadd.f32 0.0, %v1651
    %v1653 = vpop.f32.mrb[0].mxu0
    %v1654 = vadd.f32 0.0, %v1653
    %v1655 = vpop.f32.mrb[0].mxu0
    %v1656 = vadd.f32 0.0, %v1655
    %1657 = vmatprep.mubr.bf16.mxu0 0
    %1658 = vmatmul.mubr.bf16.gmra.mrb[0].mxu0 %v1570
    %v1659 = vpop.f32.mrb[0].mxu0
    %v1660 = vadd.f32 0.0, %v1659
    %v1661 = vpop.f32.mrb[0].mxu0
    %v1662 = vadd.f32 0.0, %v1661
    %v1663 = vpop.f32.mrb[0].mxu0
    %v1664 = vadd.f32 0.0, %v1663
    %v1665 = vpop.f32.mrb[0].mxu0
    %v1666 = vadd.f32 0.0, %v1665
    %1667 = vmatprep.mubr.bf16.mxu0 0
    %1668 = vmatmul.mubr.bf16.gmra.mrb[0].mxu0 %v1573
    %v1669 = vpop.f32.mrb[0].mxu0
    %v1670 = vadd.f32 0.0, %v1669
    %v1671 = vpop.f32.mrb[0].mxu0
    %v1672 = vadd.f32 0.0, %v1671
    %v1673 = vpop.f32.mrb[0].mxu0
    %v1674 = vpop.f32.mrb[0].mxu0
    %1675 = vdwg.mxu0
    %1676 = vmatprep.subr.bf16.mxu0 0
    %1677 = vmatpush1.bf16.msra.mxu0 %v1501
    %1678 = vmatprep.subr.bf16.mxu0 0
    %1679 = vmatpush1.bf16.msra.mxu0 %v1504
    %1680 = vmatprep.subr.bf16.mxu0 0
    %1681 = vmatpush1.bf16.msra.mxu0 %v1507
    %1682 = vmatprep.subr.bf16.mxu0 0
    %1683 = vmatpush1.bf16.msra.mxu0 %v1510
    %1684 = vmatprep.subr.bf16.mxu0 0
    %1685 = vmatpush1.bf16.msra.mxu0 %v1513
    %1686 = vmatprep.subr.bf16.mxu0 0
    %1687 = vmatpush1.bf16.msra.mxu0 %v1583
    %1688 = vmatprep.subr.bf16.mxu0 0
    %1689 = vmatpush1.bf16.msra.mxu0 0
    %1690 = vmatprep.subr.bf16.mxu0 0
    %1691 = vmatpush1.bf16.msra.mxu0 0
    %1692 = vmatprep.subr.bf16.mxu0 0
    %1693 = vmatpush1.bf16.msra.mxu0 0
    %1694 = vmatprep.subr.bf16.mxu0 0
    %1695 = vmatpush1.bf16.msra.mxu0 0
    %1696 = vmatprep.subr.bf16.mxu0 0
    %1697 = vmatpush1.bf16.msra.mxu0 0
    %1698 = vmatprep.subr.bf16.mxu0 0
    %1699 = vmatpush1.bf16.msra.mxu0 0
    %1700 = vmatprep.subr.bf16.mxu0 0
    %1701 = vmatpush1.bf16.msra.mxu0 0
    %1702 = vmatprep.subr.bf16.mxu0 0
    %1703 = vmatpush1.bf16.msra.mxu0 0
    %1704 = vmatprep.subr.bf16.mxu0 0
    %1705 = vmatpush1.bf16.msra.mxu0 0
    %1706 = vmatprep.subr.bf16.mxu0 0
    %1707 = vmatpush1.bf16.msra.mxu0 0
    %1708 = vmatprep.mubr.bf16.mxu0 0
    %1709 = vmatmul.mubr.bf16.gmra.mrb[0].mxu0 %v1558
    %v1710 = vpop.f32.mrb[0].mxu0
    %v1711 = vadd.f32 0.0, %v1710
    %v1712 = vpop.f32.mrb[0].mxu0
    %v1713 = vpop.f32.mrb[0].mxu0
    %v1714 = vadd.f32 0.0, %v1713
    %v1715 = vpop.f32.mrb[0].mxu0
    %1716 = vmatprep.mubr.bf16.mxu0 0
    %1717 = vmatmul.mubr.bf16.gmra.mrb[0].mxu0 %v1561
    %v1718 = vpop.f32.mrb[0].mxu0
    %v1719 = vadd.f32 0.0, %v1718
    %v1720 = vpop.f32.mrb[0].mxu0
    %v1721 = vpop.f32.mrb[0].mxu0
    %v1722 = vadd.f32 0.0, %v1721
    %v1723 = vpop.f32.mrb[0].mxu0
    %1724 = vmatprep.mubr.bf16.mxu0 0
    %1725 = vmatmul.mubr.bf16.gmra.mrb[0].mxu0 %v1564
    %v1726 = vpop.f32.mrb[0].mxu0
    %v1727 = vadd.f32 0.0, %v1726
    %v1728 = vpop.f32.mrb[0].mxu0
    %v1729 = vpop.f32.mrb[0].mxu0
    %v1730 = vadd.f32 0.0, %v1729
    %v1731 = vpop.f32.mrb[0].mxu0
    %1732 = vmatprep.mubr.bf16.mxu0 0
    %1733 = vmatmul.mubr.bf16.gmra.mrb[0].mxu0 %v1567
    %v1734 = vpop.f32.mrb[0].mxu0
    %v1735 = vadd.f32 0.0, %v1734
    %v1736 = vpop.f32.mrb[0].mxu0
    %v1737 = vpop.f32.mrb[0].mxu0
    %v1738 = vadd.f32 0.0, %v1737
    %v1739 = vpop.f32.mrb[0].mxu0
    %1740 = vmatprep.mubr.bf16.mxu0 0
    %1741 = vmatmul.mubr.bf16.gmra.mrb[0].mxu0 %v1570
    %v1742 = vpop.f32.mrb[0].mxu0
    %v1743 = vadd.f32 0.0, %v1742
    %v1744 = vpop.f32.mrb[0].mxu0
    %v1745 = vpop.f32.mrb[0].mxu0
    %v1746 = vadd.f32 0.0, %v1745
    %v1747 = vpop.f32.mrb[0].mxu0
    %1748 = vmatprep.mubr.bf16.mxu0 0
    %1749 = vmatmul.mubr.bf16.gmra.mrb[0].mxu0 %v1573
    %v1750 = vpop.f32.mrb[0].mxu0
    %v1751 = vadd.f32 0.0, %v1750
    %v1752 = vpop.f32.mrb[0].mxu0
    %v1753 = vpop.f32.mrb[0].mxu0
    %v1754 = vpop.f32.mrb[0].mxu0
    %1755 = vdwg.mxu0
    %v1756 = vpack.c.bf16 %v1624, %v1620
    %v1757 = vpack.c.bf16 %v1626, %v1622
    %v1758 = vpack.c.bf16 %v1714, %v1711
    %v1759 = vpack.c.bf16 %v1634, %v1630
    %v1760 = vpack.c.bf16 %v1636, %v1632
    %v1761 = vpack.c.bf16 %v1722, %v1719
    %v1762 = vpack.c.bf16 %v1644, %v1640
    %v1763 = vpack.c.bf16 %v1646, %v1642
    %v1764 = vpack.c.bf16 %v1730, %v1727
    %v1765 = vpack.c.bf16 %v1654, %v1650
    %v1766 = vpack.c.bf16 %v1656, %v1652
    %v1767 = vpack.c.bf16 %v1738, %v1735
    %v1768 = vpack.c.bf16 %v1664, %v1660
    %v1769 = vpack.c.bf16 %v1666, %v1662
    %v1770 = vpack.c.bf16 %v1746, %v1743
    %v1771 = vpack.c.bf16 %v1670, %v1670
    %v1772 = vpack.c.bf16 %v1672, %v1672
    %v1773 = vpack.c.bf16 %v1751, %v1751
    %v1774 = vld [vmem:[#allocation6] sm:$0xff]
    %v1775 = vld [vmem:[#allocation6 + $0x8] sm:$0xff]
    %v1776 = vld [vmem:[#allocation6 + $0x10] sm:$0xff]
    %v1777 = vld [vmem:[#allocation6 + $0x18] sm:$0xff]
    %v1778 = vld [vmem:[#allocation6 + $0x20] sm:$0xff]
    %v1779 = vld [vmem:[#allocation6 + $0x28] sm:$0xff]
    %v1780 = vld [vmem:[#allocation6 + $0x30] sm:$0xff]
    %v1781 = vld [vmem:[#allocation6 + $0x38] sm:$0xff]
    %v1782 = vld [vmem:[#allocation6 + $0x40] sm:$0xff]
    %v1783 = vld [vmem:[#allocation6 + $0x48] sm:$0xff]
    %v1784 = vld [vmem:[#allocation6 + $0x50] sm:$0xff]
    %v1785 = vld [vmem:[#allocation6 + $0x58] sm:$0xff]
    %v1786 = vld [vmem:[#allocation6 + $0x60] sm:$0xff]
    %v1787 = vld [vmem:[#allocation6 + $0x68] sm:$0xff]
    %v1788 = vld [vmem:[#allocation6 + $0x70] sm:$0xff]
    %v1789 = vld [vmem:[#allocation6 + $0x78] sm:$0xff]
    %v1790 = vld [vmem:[#allocation6 + $0x80] sm:$0xff]
    %v1791 = vld [vmem:[#allocation6 + $0x88] sm:$0xff]
    %v1792 = vld [vmem:[#allocation6 + $0x90] sm:$0xff]
    %v1793 = vld [vmem:[#allocation6 + $0x98] sm:$0xff]
    %v1794 = vld [vmem:[#allocation6 + $0xa0] sm:$0xff]
    %v1795 = vld [vmem:[#allocation6 + $0xa8] sm:$0xff]
    %v1796 = vld [vmem:[#allocation6 + $0xb0] sm:$0xff]
    %v1797 = vld [vmem:[#allocation6 + $0xb8] sm:$0xff]
    %v1798 = vld [vmem:[#allocation6 + $0xc0] sm:$0xff]
    %v1799 = vld [vmem:[#allocation6 + $0xc8] sm:$0xff]
    %v1800 = vld [vmem:[#allocation6 + $0xd0] sm:$0xff]
    %v1801 = vld [vmem:[#allocation6 + $0xd8] sm:$0xff]
    %v1802 = vld [vmem:[#allocation6 + $0xe0] sm:$0xff]
    %v1803 = vld [vmem:[#allocation6 + $0xe8] sm:$0xff]
    %v1804 = vld [vmem:[#allocation6 + $0xf0] sm:$0xff]
    %v1805 = vld [vmem:[#allocation6 + $0xf8] sm:$0xff]
    %v1806 = vld [vmem:[#allocation6 + $0x100] sm:$0xff]
    %v1807 = vld [vmem:[#allocation6 + $0x108] sm:$0xff]
    %v1808 = vld [vmem:[#allocation6 + $0x110] sm:$0xff]
    %v1809 = vld [vmem:[#allocation6 + $0x118] sm:$0xff]
    %v1810 = vld [vmem:[#allocation6 + $0x120] sm:$0xff]
    %v1811 = vld [vmem:[#allocation6 + $0x128] sm:$0xff]
    %v1812 = vld [vmem:[#allocation6 + $0x130] sm:$0xff]
    %v1813 = vld [vmem:[#allocation6 + $0x138] sm:$0xff]
    %v1814 = vld [vmem:[#allocation6 + $0x140] sm:$0xff]
    %v1815 = vld [vmem:[#allocation6 + $0x148] sm:$0xff]
    %v1816 = vld [vmem:[#allocation6 + $0x150] sm:$0xff]
    %v1817 = vld [vmem:[#allocation6 + $0x158] sm:$0xff]
    %v1818 = vld [vmem:[#allocation6 + $0x160] sm:$0xff]
    %v1819 = vld [vmem:[#allocation6 + $0x168] sm:$0xff]
    %v1820 = vld [vmem:[#allocation6 + $0x170] sm:$0xff]
    %v1821 = vld [vmem:[#allocation6 + $0x178] sm:$0xff]
    %v1822 = vld [vmem:[#allocation6 + $0x180] sm:$0xff]
    %v1823 = vld [vmem:[#allocation6 + $0x188] sm:$0xff]
    %v1824 = vld [vmem:[#allocation6 + $0x190] sm:$0xff]
    %v1825 = vld [vmem:[#allocation6 + $0x198] sm:$0xff]
    %v1826 = vld [vmem:[#allocation6 + $0x1a0] sm:$0xff]
    %v1827 = vld [vmem:[#allocation6 + $0x1a8] sm:$0xff]
    %v1828 = vld [vmem:[#allocation6 + $0x1b0] sm:$0xff]
    %v1829 = vld [vmem:[#allocation6 + $0x1b8] sm:$0xff]
    %v1830 = vld [vmem:[#allocation6 + $0x1c0] sm:$0xff]
    %v1831 = vld [vmem:[#allocation6 + $0x1c8] sm:$0xff]
    %v1832 = vld [vmem:[#allocation6 + $0x1d0] sm:$0xff]
    %v1833 = vld [vmem:[#allocation6 + $0x1d8] sm:$0xff]
    %v1834 = vld [vmem:[#allocation6 + $0x1e0] sm:$0xff]
    %v1835 = vld [vmem:[#allocation6 + $0x1e8] sm:$0xff]
    %v1836 = vld [vmem:[#allocation6 + $0x1f0] sm:$0xff]
    %v1837 = vld [vmem:[#allocation6 + $0x1f8] sm:$0xff]
    %v1838 = vld [vmem:[#allocation6 + $0x200] sm:$0xff]
    %v1839 = vld [vmem:[#allocation6 + $0x208] sm:$0xff]
    %v1840 = vld [vmem:[#allocation6 + $0x210] sm:$0xff]
    %v1841 = vld [vmem:[#allocation6 + $0x218] sm:$0xff]
    %v1842 = vld [vmem:[#allocation6 + $0x220] sm:$0xff]
    %v1843 = vld [vmem:[#allocation6 + $0x228] sm:$0xff]
    %v1844 = vld [vmem:[#allocation6 + $0x230] sm:$0xff]
    %v1845 = vld [vmem:[#allocation6 + $0x238] sm:$0xff]
    %v1846 = vld [vmem:[#allocation6 + $0x240] sm:$0xff]
    %v1847 = vld [vmem:[#allocation6 + $0x248] sm:$0xff]
    %v1848 = vld [vmem:[#allocation6 + $0x250] sm:$0xff]
    %v1849 = vld [vmem:[#allocation6 + $0x258] sm:$0xff]
    %v1850 = vld [vmem:[#allocation6 + $0x260] sm:$0xff]
    %v1851 = vld [vmem:[#allocation6 + $0x268] sm:$0xff]
    %v1852 = vld [vmem:[#allocation6 + $0x270] sm:$0xff]
    %v1853 = vld [vmem:[#allocation6 + $0x278] sm:$0xff]
    %v1854 = vld [vmem:[#allocation6 + $0x280] sm:$0xff]
    %v1855 = vld [vmem:[#allocation6 + $0x288] sm:$0xff]
    %v1856 = vld [vmem:[#allocation6 + $0x290] sm:$0xff]
    %v1857 = vld [vmem:[#allocation6 + $0x298] sm:$0xff]
    %v1858 = vld [vmem:[#allocation6 + $0x2a0] sm:$0xff]
    %v1859 = vld [vmem:[#allocation6 + $0x2a8] sm:$0xff]
    %v1860 = vld [vmem:[#allocation6 + $0x2b0] sm:$0xff]
    %v1861 = vld [vmem:[#allocation6 + $0x2b8] sm:$0xff]
    %v1862 = vld [vmem:[#allocation6 + $0x2c0] sm:$0xff]
    %v1863 = vld [vmem:[#allocation6 + $0x2c8] sm:$0xff]
    %v1864 = vld [vmem:[#allocation6 + $0x2d0] sm:$0xff]
    %v1865 = vld [vmem:[#allocation6 + $0x2d8] sm:$0xff]
    %v1866 = vld [vmem:[#allocation6 + $0x2e0] sm:$0xff]
    %v1867 = vld [vmem:[#allocation6 + $0x2e8] sm:$0xff]
    %v1868 = vld [vmem:[#allocation6 + $0x2f0] sm:$0xff]
    %v1869 = vld [vmem:[#allocation6 + $0x2f8] sm:$0xff]
    %v1870 = vld [vmem:[%s7] sm:$0x3]
    %v1872 = vlaneseq
    %v1873 = vshrl.u32 %v1872, 7
    %v1874 = vsub.s32 0, %v1873
    %v1875 = vrot.slane %v1870, %v1874
    %v1876 = vlaneseq
    %v1877 = vshrl.u32 %v1876, 7
    %v1878 = vsub.s32 1, %v1877
    %v1879 = vrot.slane %v1870, %v1878
    %v1978 = vunpack.c.l.b16 %v1774
    %v1979 = vunpack.c.h.b16 %v1774
    %v1980 = vunpack.c.l.b16 %v1775
    %v1981 = vunpack.c.h.b16 %v1775
    %v1982 = vunpack.c.l.b16 %v1776
    %v1983 = vunpack.c.h.b16 %v1776
    %v1984 = vunpack.c.l.b16 %v1777
    %v1985 = vunpack.c.h.b16 %v1777
    %v1986 = vunpack.c.l.b16 %v1778
    %v1987 = vunpack.c.h.b16 %v1778
    %v1988 = vunpack.c.l.b16 %v1779
    %v1989 = vunpack.c.h.b16 %v1779
    %v1990 = vunpack.c.l.b16 %v1780
    %v1991 = vunpack.c.h.b16 %v1780
    %v1992 = vunpack.c.l.b16 %v1781
    %v1993 = vunpack.c.h.b16 %v1781
    %v1994 = vunpack.c.l.b16 %v1782
    %v1995 = vunpack.c.h.b16 %v1782
    %v1996 = vunpack.c.l.b16 %v1783
    %v1997 = vunpack.c.h.b16 %v1783
    %v1998 = vunpack.c.l.b16 %v1784
    %v1999 = vunpack.c.h.b16 %v1784
    %v2000 = vunpack.c.l.b16 %v1785
    %v2001 = vunpack.c.h.b16 %v1785
    %v2002 = vunpack.c.l.b16 %v1786
    %v2003 = vunpack.c.h.b16 %v1786
    %v2004 = vunpack.c.l.b16 %v1787
    %v2005 = vunpack.c.h.b16 %v1787
    %v2006 = vunpack.c.l.b16 %v1788
    %v2007 = vunpack.c.h.b16 %v1788
    %v2008 = vunpack.c.l.b16 %v1789
    %v2009 = vunpack.c.h.b16 %v1789
    %v2010 = vunpack.c.l.b16 %v1790
    %v2011 = vunpack.c.h.b16 %v1790
    %v2012 = vunpack.c.l.b16 %v1791
    %v2013 = vunpack.c.h.b16 %v1791
    %v2014 = vunpack.c.l.b16 %v1792
    %v2015 = vunpack.c.h.b16 %v1792
    %v2016 = vunpack.c.l.b16 %v1793
    %v2017 = vunpack.c.h.b16 %v1793
    %v2018 = vunpack.c.l.b16 %v1794
    %v2019 = vunpack.c.h.b16 %v1794
    %v2020 = vunpack.c.l.b16 %v1795
    %v2021 = vunpack.c.h.b16 %v1795
    %v2022 = vunpack.c.l.b16 %v1796
    %v2023 = vunpack.c.h.b16 %v1796
    %v2024 = vunpack.c.l.b16 %v1797
    %v2025 = vunpack.c.h.b16 %v1797
    %v2026 = vunpack.c.l.b16 %v1798
    %v2027 = vunpack.c.h.b16 %v1798
    %v2028 = vunpack.c.l.b16 %v1799
    %v2029 = vunpack.c.h.b16 %v1799
    %v2030 = vunpack.c.l.b16 %v1800
    %v2031 = vunpack.c.h.b16 %v1800
    %v2032 = vunpack.c.l.b16 %v1801
    %v2033 = vunpack.c.h.b16 %v1801
    %v2034 = vunpack.c.l.b16 %v1802
    %v2035 = vunpack.c.h.b16 %v1802
    %v2036 = vunpack.c.l.b16 %v1803
    %v2037 = vunpack.c.h.b16 %v1803
    %v2038 = vunpack.c.l.b16 %v1804
    %v2039 = vunpack.c.h.b16 %v1804
    %v2040 = vunpack.c.l.b16 %v1805
    %v2041 = vunpack.c.h.b16 %v1805
    %v2042 = vunpack.c.l.b16 %v1806
    %v2043 = vunpack.c.h.b16 %v1806
    %v2044 = vunpack.c.l.b16 %v1807
    %v2045 = vunpack.c.h.b16 %v1807
    %v2046 = vunpack.c.l.b16 %v1808
    %v2047 = vunpack.c.h.b16 %v1808
    %v2048 = vunpack.c.l.b16 %v1809
    %v2049 = vunpack.c.h.b16 %v1809
    %v2050 = vunpack.c.l.b16 %v1810
    %v2051 = vunpack.c.h.b16 %v1810
    %v2052 = vunpack.c.l.b16 %v1811
    %v2053 = vunpack.c.h.b16 %v1811
    %v2054 = vunpack.c.l.b16 %v1812
    %v2055 = vunpack.c.h.b16 %v1812
    %v2056 = vunpack.c.l.b16 %v1813
    %v2057 = vunpack.c.h.b16 %v1813
    %v2058 = vunpack.c.l.b16 %v1814
    %v2059 = vunpack.c.h.b16 %v1814
    %v2060 = vunpack.c.l.b16 %v1815
    %v2061 = vunpack.c.h.b16 %v1815
    %v2062 = vunpack.c.l.b16 %v1816
    %v2063 = vunpack.c.h.b16 %v1816
    %v2064 = vunpack.c.l.b16 %v1817
    %v2065 = vunpack.c.h.b16 %v1817
    %v2066 = vunpack.c.l.b16 %v1818
    %v2067 = vunpack.c.h.b16 %v1818
    %v2068 = vunpack.c.l.b16 %v1819
    %v2069 = vunpack.c.h.b16 %v1819
    %v2070 = vunpack.c.l.b16 %v1820
    %v2071 = vunpack.c.h.b16 %v1820
    %v2072 = vunpack.c.l.b16 %v1821
    %v2073 = vunpack.c.h.b16 %v1821
    %v2074 = vunpack.c.l.b16 %v1822
    %v2075 = vunpack.c.h.b16 %v1822
    %v2076 = vunpack.c.l.b16 %v1823
    %v2077 = vunpack.c.h.b16 %v1823
    %v2078 = vunpack.c.l.b16 %v1824
    %v2079 = vunpack.c.h.b16 %v1824
    %v2080 = vunpack.c.l.b16 %v1825
    %v2081 = vunpack.c.h.b16 %v1825
    %v2082 = vunpack.c.l.b16 %v1826
    %v2083 = vunpack.c.h.b16 %v1826
    %v2084 = vunpack.c.l.b16 %v1827
    %v2085 = vunpack.c.h.b16 %v1827
    %v2086 = vunpack.c.l.b16 %v1828
    %v2087 = vunpack.c.h.b16 %v1828
    %v2088 = vunpack.c.l.b16 %v1829
    %v2089 = vunpack.c.h.b16 %v1829
    %v2090 = vunpack.c.l.b16 %v1830
    %v2091 = vunpack.c.h.b16 %v1830
    %v2092 = vunpack.c.l.b16 %v1831
    %v2093 = vunpack.c.h.b16 %v1831
    %v2094 = vunpack.c.l.b16 %v1832
    %v2095 = vunpack.c.h.b16 %v1832
    %v2096 = vunpack.c.l.b16 %v1833
    %v2097 = vunpack.c.h.b16 %v1833
    %v2098 = vunpack.c.l.b16 %v1834
    %v2099 = vunpack.c.h.b16 %v1834
    %v2100 = vunpack.c.l.b16 %v1835
    %v2101 = vunpack.c.h.b16 %v1835
    %v2102 = vunpack.c.l.b16 %v1836
    %v2103 = vunpack.c.h.b16 %v1836
    %v2104 = vunpack.c.l.b16 %v1837
    %v2105 = vunpack.c.h.b16 %v1837
    %v2106 = vunpack.c.l.b16 %v1838
    %v2107 = vunpack.c.h.b16 %v1838
    %v2108 = vunpack.c.l.b16 %v1839
    %v2109 = vunpack.c.h.b16 %v1839
    %v2110 = vunpack.c.l.b16 %v1840
    %v2111 = vunpack.c.h.b16 %v1840
    %v2112 = vunpack.c.l.b16 %v1841
    %v2113 = vunpack.c.h.b16 %v1841
    %v2114 = vunpack.c.l.b16 %v1842
    %v2115 = vunpack.c.h.b16 %v1842
    %v2116 = vunpack.c.l.b16 %v1843
    %v2117 = vunpack.c.h.b16 %v1843
    %v2118 = vunpack.c.l.b16 %v1844
    %v2119 = vunpack.c.h.b16 %v1844
    %v2120 = vunpack.c.l.b16 %v1845
    %v2121 = vunpack.c.h.b16 %v1845
    %v2122 = vunpack.c.l.b16 %v1846
    %v2123 = vunpack.c.h.b16 %v1846
    %v2124 = vunpack.c.l.b16 %v1847
    %v2125 = vunpack.c.h.b16 %v1847
    %v2126 = vunpack.c.l.b16 %v1848
    %v2127 = vunpack.c.h.b16 %v1848
    %v2128 = vunpack.c.l.b16 %v1849
    %v2129 = vunpack.c.h.b16 %v1849
    %v2130 = vunpack.c.l.b16 %v1850
    %v2131 = vunpack.c.h.b16 %v1850
    %v2132 = vunpack.c.l.b16 %v1851
    %v2133 = vunpack.c.h.b16 %v1851
    %v2134 = vunpack.c.l.b16 %v1852
    %v2135 = vunpack.c.h.b16 %v1852
    %v2136 = vunpack.c.l.b16 %v1853
    %v2137 = vunpack.c.h.b16 %v1853
    %v2138 = vunpack.c.l.b16 %v1854
    %v2139 = vunpack.c.h.b16 %v1854
    %v2140 = vunpack.c.l.b16 %v1855
    %v2141 = vunpack.c.h.b16 %v1855
    %v2142 = vunpack.c.l.b16 %v1856
    %v2143 = vunpack.c.h.b16 %v1856
    %v2144 = vunpack.c.l.b16 %v1857
    %v2145 = vunpack.c.h.b16 %v1857
    %v2146 = vunpack.c.l.b16 %v1858
    %v2147 = vunpack.c.h.b16 %v1858
    %v2148 = vunpack.c.l.b16 %v1859
    %v2149 = vunpack.c.h.b16 %v1859
    %v2150 = vunpack.c.l.b16 %v1860
    %v2151 = vunpack.c.h.b16 %v1860
    %v2152 = vunpack.c.l.b16 %v1861
    %v2153 = vunpack.c.h.b16 %v1861
    %v2154 = vunpack.c.l.b16 %v1862
    %v2155 = vunpack.c.h.b16 %v1862
    %v2156 = vunpack.c.l.b16 %v1863
    %v2157 = vunpack.c.h.b16 %v1863
    %v2158 = vunpack.c.l.b16 %v1864
    %v2159 = vunpack.c.h.b16 %v1864
    %v2160 = vunpack.c.l.b16 %v1865
    %v2161 = vunpack.c.h.b16 %v1865
    %v2162 = vunpack.c.l.b16 %v1866
    %v2163 = vunpack.c.h.b16 %v1866
    %v2164 = vunpack.c.l.b16 %v1867
    %v2165 = vunpack.c.h.b16 %v1867
    %v2166 = vunpack.c.l.b16 %v1868
    %v2167 = vunpack.c.h.b16 %v1868
    %v2168 = vunpack.c.l.b16 %v1869
    %v2169 = vunpack.c.h.b16 %v1869
    %v2170 = vpack.c.b16 %v1980, %v1978
    %v2171 = vpack.c.b16 %v1981, %v1979
    %v2172 = vpack.c.b16 %v1984, %v1982
    %v2173 = vpack.c.b16 %v1985, %v1983
    %v2174 = vpack.c.b16 %v1988, %v1986
    %v2175 = vpack.c.b16 %v1989, %v1987
    %v2176 = vpack.c.b16 %v1992, %v1990
    %v2177 = vpack.c.b16 %v1993, %v1991
    %v2178 = vpack.c.b16 %v1996, %v1994
    %v2179 = vpack.c.b16 %v1997, %v1995
    %v2180 = vpack.c.b16 %v2000, %v1998
    %v2181 = vpack.c.b16 %v2001, %v1999
    %v2182 = vpack.c.b16 %v2004, %v2002
    %v2183 = vpack.c.b16 %v2005, %v2003
    %v2184 = vpack.c.b16 %v2008, %v2006
    %v2185 = vpack.c.b16 %v2009, %v2007
    %v2186 = vpack.c.b16 %v2012, %v2010
    %v2187 = vpack.c.b16 %v2013, %v2011
    %v2188 = vpack.c.b16 %v2016, %v2014
    %v2189 = vpack.c.b16 %v2017, %v2015
    %v2190 = vpack.c.b16 %v2020, %v2018
    %v2191 = vpack.c.b16 %v2021, %v2019
    %v2192 = vpack.c.b16 %v2024, %v2022
    %v2193 = vpack.c.b16 %v2025, %v2023
    %v2194 = vpack.c.b16 %v2028, %v2026
    %v2195 = vpack.c.b16 %v2029, %v2027
    %v2196 = vpack.c.b16 %v2032, %v2030
    %v2197 = vpack.c.b16 %v2033, %v2031
    %v2198 = vpack.c.b16 %v2036, %v2034
    %v2199 = vpack.c.b16 %v2037, %v2035
    %v2200 = vpack.c.b16 %v2040, %v2038
    %v2201 = vpack.c.b16 %v2041, %v2039
    %v2202 = vpack.c.b16 %v2044, %v2042
    %v2203 = vpack.c.b16 %v2045, %v2043
    %v2204 = vpack.c.b16 %v2048, %v2046
    %v2205 = vpack.c.b16 %v2049, %v2047
    %v2206 = vpack.c.b16 %v2052, %v2050
    %v2207 = vpack.c.b16 %v2053, %v2051
    %v2208 = vpack.c.b16 %v2056, %v2054
    %v2209 = vpack.c.b16 %v2057, %v2055
    %v2210 = vpack.c.b16 %v2060, %v2058
    %v2211 = vpack.c.b16 %v2061, %v2059
    %v2212 = vpack.c.b16 %v2064, %v2062
    %v2213 = vpack.c.b16 %v2065, %v2063
    %v2214 = vpack.c.b16 %v2068, %v2066
    %v2215 = vpack.c.b16 %v2069, %v2067
    %v2216 = vpack.c.b16 %v2072, %v2070
    %v2217 = vpack.c.b16 %v2073, %v2071
    %v2218 = vpack.c.b16 %v2076, %v2074
    %v2219 = vpack.c.b16 %v2077, %v2075
    %v2220 = vpack.c.b16 %v2080, %v2078
    %v2221 = vpack.c.b16 %v2081, %v2079
    %v2222 = vpack.c.b16 %v2084, %v2082
    %v2223 = vpack.c.b16 %v2085, %v2083
    %v2224 = vpack.c.b16 %v2088, %v2086
    %v2225 = vpack.c.b16 %v2089, %v2087
    %v2226 = vpack.c.b16 %v2092, %v2090
    %v2227 = vpack.c.b16 %v2093, %v2091
    %v2228 = vpack.c.b16 %v2096, %v2094
    %v2229 = vpack.c.b16 %v2097, %v2095
    %v2230 = vpack.c.b16 %v2100, %v2098
    %v2231 = vpack.c.b16 %v2101, %v2099
    %v2232 = vpack.c.b16 %v2104, %v2102
    %v2233 = vpack.c.b16 %v2105, %v2103
    %v2234 = vpack.c.b16 %v2108, %v2106
    %v2235 = vpack.c.b16 %v2109, %v2107
    %v2236 = vpack.c.b16 %v2112, %v2110
    %v2237 = vpack.c.b16 %v2113, %v2111
    %v2238 = vpack.c.b16 %v2116, %v2114
    %v2239 = vpack.c.b16 %v2117, %v2115
    %v2240 = vpack.c.b16 %v2120, %v2118
    %v2241 = vpack.c.b16 %v2121, %v2119
    %v2242 = vpack.c.b16 %v2124, %v2122
    %v2243 = vpack.c.b16 %v2125, %v2123
    %v2244 = vpack.c.b16 %v2128, %v2126
    %v2245 = vpack.c.b16 %v2129, %v2127
    %v2246 = vpack.c.b16 %v2132, %v2130
    %v2247 = vpack.c.b16 %v2133, %v2131
    %v2248 = vpack.c.b16 %v2136, %v2134
    %v2249 = vpack.c.b16 %v2137, %v2135
    %v2250 = vpack.c.b16 %v2140, %v2138
    %v2251 = vpack.c.b16 %v2141, %v2139
    %v2252 = vpack.c.b16 %v2144, %v2142
    %v2253 = vpack.c.b16 %v2145, %v2143
    %v2254 = vpack.c.b16 %v2148, %v2146
    %v2255 = vpack.c.b16 %v2149, %v2147
    %v2256 = vpack.c.b16 %v2152, %v2150
    %v2257 = vpack.c.b16 %v2153, %v2151
    %v2258 = vpack.c.b16 %v2156, %v2154
    %v2259 = vpack.c.b16 %v2157, %v2155
    %v2260 = vpack.c.b16 %v2160, %v2158
    %v2261 = vpack.c.b16 %v2161, %v2159
    %v2262 = vpack.c.b16 %v2164, %v2162
    %v2263 = vpack.c.b16 %v2165, %v2163
    %v2264 = vpack.c.b16 %v2168, %v2166
    %v2265 = vpack.c.b16 %v2169, %v2167
    %2362 = vmatprep.subr.bf16.mxu0 %v2171
    %2363 = vmatpush1.bf16.msra.mxu0 %v2170
    %2364 = vmatprep.subr.bf16.mxu0 %v2173
    %2365 = vmatpush1.bf16.msra.mxu0 %v2172
    %2366 = vmatprep.subr.bf16.mxu0 %v2175
    %2367 = vmatpush1.bf16.msra.mxu0 %v2174
    %2368 = vmatprep.subr.bf16.mxu0 %v2177
    %2369 = vmatpush1.bf16.msra.mxu0 %v2176
    %2370 = vmatprep.subr.bf16.mxu0 %v2179
    %2371 = vmatpush1.bf16.msra.mxu0 %v2178
    %2372 = vmatprep.subr.bf16.mxu0 %v2181
    %2373 = vmatpush1.bf16.msra.mxu0 %v2180
    %2374 = vmatprep.subr.bf16.mxu0 %v2183
    %2375 = vmatpush1.bf16.msra.mxu0 %v2182
    %2376 = vmatprep.subr.bf16.mxu0 %v2185
    %2377 = vmatpush1.bf16.msra.mxu0 %v2184
    %2378 = vmatprep.subr.bf16.mxu0 %v2187
    %2379 = vmatpush1.bf16.msra.mxu0 %v2186
    %2380 = vmatprep.subr.bf16.mxu0 %v2189
    %2381 = vmatpush1.bf16.msra.mxu0 %v2188
    %2382 = vmatprep.subr.bf16.mxu0 %v2191
    %2383 = vmatpush1.bf16.msra.mxu0 %v2190
    %2384 = vmatprep.subr.bf16.mxu0 %v2193
    %2385 = vmatpush1.bf16.msra.mxu0 %v2192
    %2386 = vmatprep.subr.bf16.mxu0 %v2195
    %2387 = vmatpush1.bf16.msra.mxu0 %v2194
    %2388 = vmatprep.subr.bf16.mxu0 %v2197
    %2389 = vmatpush1.bf16.msra.mxu0 %v2196
    %2390 = vmatprep.subr.bf16.mxu0 %v2199
    %2391 = vmatpush1.bf16.msra.mxu0 %v2198
    %2392 = vmatprep.subr.bf16.mxu0 %v2201
    %2393 = vmatpush1.bf16.msra.mxu0 %v2200
    %2394 = vmatprep.mubr.bf16.mxu0 %v1500
    %2395 = vmatmul.mubr.bf16.gmra.mrb[0].mxu0 %v1499
    %v2396 = vpop.f32.mrb[0].mxu0
    %v2397 = vadd.f32 %v1875, %v2396
    %v2398 = vpop.f32.mrb[0].mxu0
    %v2399 = vadd.f32 %v1879, %v2398
    %v2400 = vpop.f32.mrb[0].mxu0
    %v2401 = vadd.f32 %v1875, %v2400
    %v2402 = vpop.f32.mrb[0].mxu0
    %v2403 = vadd.f32 %v1879, %v2402
    %2404 = vmatprep.mubr.bf16.mxu0 %v1503
    %2405 = vmatmul.mubr.bf16.gmra.mrb[0].mxu0 %v1502
    %v2406 = vpop.f32.mrb[0].mxu0
    %v2407 = vadd.f32 %v1875, %v2406
    %v2408 = vpop.f32.mrb[0].mxu0
    %v2409 = vadd.f32 %v1879, %v2408
    %v2410 = vpop.f32.mrb[0].mxu0
    %v2411 = vadd.f32 %v1875, %v2410
    %v2412 = vpop.f32.mrb[0].mxu0
    %v2413 = vadd.f32 %v1879, %v2412
    %2414 = vmatprep.mubr.bf16.mxu0 %v1506
    %2415 = vmatmul.mubr.bf16.gmra.mrb[0].mxu0 %v1505
    %v2416 = vpop.f32.mrb[0].mxu0
    %v2417 = vadd.f32 %v1875, %v2416
    %v2418 = vpop.f32.mrb[0].mxu0
    %v2419 = vadd.f32 %v1879, %v2418
    %v2420 = vpop.f32.mrb[0].mxu0
    %v2421 = vadd.f32 %v1875, %v2420
    %v2422 = vpop.f32.mrb[0].mxu0
    %v2423 = vadd.f32 %v1879, %v2422
    %2424 = vmatprep.mubr.bf16.mxu0 %v1509
    %2425 = vmatmul.mubr.bf16.gmra.mrb[0].mxu0 %v1508
    %v2426 = vpop.f32.mrb[0].mxu0
    %v2427 = vadd.f32 %v1875, %v2426
    %v2428 = vpop.f32.mrb[0].mxu0
    %v2429 = vadd.f32 %v1879, %v2428
    %v2430 = vpop.f32.mrb[0].mxu0
    %v2431 = vadd.f32 %v1875, %v2430
    %v2432 = vpop.f32.mrb[0].mxu0
    %v2433 = vadd.f32 %v1879, %v2432
    %2434 = vmatprep.mubr.bf16.mxu0 %v1512
    %2435 = vmatmul.mubr.bf16.gmra.mrb[0].mxu0 %v1511
    %v2436 = vpop.f32.mrb[0].mxu0
    %v2437 = vadd.f32 %v1875, %v2436
    %v2438 = vpop.f32.mrb[0].mxu0
    %v2439 = vadd.f32 %v1879, %v2438
    %v2440 = vpop.f32.mrb[0].mxu0
    %v2441 = vadd.f32 %v1875, %v2440
    %v2442 = vpop.f32.mrb[0].mxu0
    %v2443 = vadd.f32 %v1879, %v2442
    %2444 = vmatprep.mubr.bf16.mxu0 %v1515
    %2445 = vmatmul.mubr.bf16.gmra.mrb[0].mxu0 %v1514
    %v2446 = vpop.f32.mrb[0].mxu0
    %v2447 = vadd.f32 %v1875, %v2446
    %v2448 = vpop.f32.mrb[0].mxu0
    %v2449 = vadd.f32 %v1879, %v2448
    %v2450 = vpop.f32.mrb[0].mxu0
    %v2451 = vpop.f32.mrb[0].mxu0
    %2452 = vdwg.mxu0
    %2453 = vmatprep.subr.bf16.mxu0 %v2203
    %2454 = vmatpush1.bf16.msra.mxu0 %v2202
    %2455 = vmatprep.subr.bf16.mxu0 %v2205
    %2456 = vmatpush1.bf16.msra.mxu0 %v2204
    %2457 = vmatprep.subr.bf16.mxu0 %v2207
    %2458 = vmatpush1.bf16.msra.mxu0 %v2206
    %2459 = vmatprep.subr.bf16.mxu0 %v2209
    %2460 = vmatpush1.bf16.msra.mxu0 %v2208
    %2461 = vmatprep.subr.bf16.mxu0 %v2211
    %2462 = vmatpush1.bf16.msra.mxu0 %v2210
    %2463 = vmatprep.subr.bf16.mxu0 %v2213
    %2464 = vmatpush1.bf16.msra.mxu0 %v2212
    %2465 = vmatprep.subr.bf16.mxu0 %v2215
    %2466 = vmatpush1.bf16.msra.mxu0 %v2214
    %2467 = vmatprep.subr.bf16.mxu0 %v2217
    %2468 = vmatpush1.bf16.msra.mxu0 %v2216
    %2469 = vmatprep.subr.bf16.mxu0 %v2219
    %2470 = vmatpush1.bf16.msra.mxu0 %v2218
    %2471 = vmatprep.subr.bf16.mxu0 %v2221
    %2472 = vmatpush1.bf16.msra.mxu0 %v2220
    %2473 = vmatprep.subr.bf16.mxu0 %v2223
    %2474 = vmatpush1.bf16.msra.mxu0 %v2222
    %2475 = vmatprep.subr.bf16.mxu0 %v2225
    %2476 = vmatpush1.bf16.msra.mxu0 %v2224
    %2477 = vmatprep.subr.bf16.mxu0 %v2227
    %2478 = vmatpush1.bf16.msra.mxu0 %v2226
    %2479 = vmatprep.subr.bf16.mxu0 %v2229
    %2480 = vmatpush1.bf16.msra.mxu0 %v2228
    %2481 = vmatprep.subr.bf16.mxu0 %v2231
    %2482 = vmatpush1.bf16.msra.mxu0 %v2230
    %2483 = vmatprep.subr.bf16.mxu0 %v2233
    %2484 = vmatpush1.bf16.msra.mxu0 %v2232
    %2485 = vmatprep.mubr.bf16.mxu0 %v1756
    %2486 = vmatmul.mubr.bf16.gmra.mrb[0].mxu0 %v1501
    %v2487 = vpop.f32.mrb[0].mxu0
    %v2488 = vadd.f32 %v2397, %v2487
    %v2489 = vpop.f32.mrb[0].mxu0
    %v2490 = vadd.f32 %v2399, %v2489
    %v2491 = vpop.f32.mrb[0].mxu0
    %v2492 = vadd.f32 %v2401, %v2491
    %v2493 = vpop.f32.mrb[0].mxu0
    %v2494 = vadd.f32 %v2403, %v2493
    %2495 = vmatprep.mubr.bf16.mxu0 %v1759
    %2496 = vmatmul.mubr.bf16.gmra.mrb[0].mxu0 %v1504
    %v2497 = vpop.f32.mrb[0].mxu0
    %v2498 = vadd.f32 %v2407, %v2497
    %v2499 = vpop.f32.mrb[0].mxu0
    %v2500 = vadd.f32 %v2409, %v2499
    %v2501 = vpop.f32.mrb[0].mxu0
    %v2502 = vadd.f32 %v2411, %v2501
    %v2503 = vpop.f32.mrb[0].mxu0
    %v2504 = vadd.f32 %v2413, %v2503
    %2505 = vmatprep.mubr.bf16.mxu0 %v1762
    %2506 = vmatmul.mubr.bf16.gmra.mrb[0].mxu0 %v1507
    %v2507 = vpop.f32.mrb[0].mxu0
    %v2508 = vadd.f32 %v2417, %v2507
    %v2509 = vpop.f32.mrb[0].mxu0
    %v2510 = vadd.f32 %v2419, %v2509
    %v2511 = vpop.f32.mrb[0].mxu0
    %v2512 = vadd.f32 %v2421, %v2511
    %v2513 = vpop.f32.mrb[0].mxu0
    %v2514 = vadd.f32 %v2423, %v2513
    %2515 = vmatprep.mubr.bf16.mxu0 %v1765
    %2516 = vmatmul.mubr.bf16.gmra.mrb[0].mxu0 %v1510
    %v2517 = vpop.f32.mrb[0].mxu0
    %v2518 = vadd.f32 %v2427, %v2517
    %v2519 = vpop.f32.mrb[0].mxu0
    %v2520 = vadd.f32 %v2429, %v2519
    %v2521 = vpop.f32.mrb[0].mxu0
    %v2522 = vadd.f32 %v2431, %v2521
    %v2523 = vpop.f32.mrb[0].mxu0
    %v2524 = vadd.f32 %v2433, %v2523
    %2525 = vmatprep.mubr.bf16.mxu0 %v1768
    %2526 = vmatmul.mubr.bf16.gmra.mrb[0].mxu0 %v1513
    %v2527 = vpop.f32.mrb[0].mxu0
    %v2528 = vadd.f32 %v2437, %v2527
    %v2529 = vpop.f32.mrb[0].mxu0
    %v2530 = vadd.f32 %v2439, %v2529
    %v2531 = vpop.f32.mrb[0].mxu0
    %v2532 = vadd.f32 %v2441, %v2531
    %v2533 = vpop.f32.mrb[0].mxu0
    %v2534 = vadd.f32 %v2443, %v2533
    %2535 = vmatprep.mubr.bf16.mxu0 %v1771
    %2536 = vmatmul.mubr.bf16.gmra.mrb[0].mxu0 %v1516
    %v2537 = vpop.f32.mrb[0].mxu0
    %v2538 = vadd.f32 %v2447, %v2537
    %v2539 = vpop.f32.mrb[0].mxu0
    %v2540 = vadd.f32 %v2449, %v2539
    %v2541 = vpop.f32.mrb[0].mxu0
    %v2542 = vpop.f32.mrb[0].mxu0
    %2543 = vdwg.mxu0
    %2544 = vmatprep.subr.bf16.mxu0 %v2235
    %2545 = vmatpush1.bf16.msra.mxu0 %v2234
    %2546 = vmatprep.subr.bf16.mxu0 %v2237
    %2547 = vmatpush1.bf16.msra.mxu0 %v2236
    %2548 = vmatprep.subr.bf16.mxu0 %v2239
    %2549 = vmatpush1.bf16.msra.mxu0 %v2238
    %2550 = vmatprep.subr.bf16.mxu0 %v2241
    %2551 = vmatpush1.bf16.msra.mxu0 %v2240
    %2552 = vmatprep.subr.bf16.mxu0 %v2243
    %2553 = vmatpush1.bf16.msra.mxu0 %v2242
    %2554 = vmatprep.subr.bf16.mxu0 %v2245
    %2555 = vmatpush1.bf16.msra.mxu0 %v2244
    %2556 = vmatprep.subr.bf16.mxu0 %v2247
    %2557 = vmatpush1.bf16.msra.mxu0 %v2246
    %2558 = vmatprep.subr.bf16.mxu0 %v2249
    %2559 = vmatpush1.bf16.msra.mxu0 %v2248
    %2560 = vmatprep.subr.bf16.mxu0 %v2251
    %2561 = vmatpush1.bf16.msra.mxu0 %v2250
    %2562 = vmatprep.subr.bf16.mxu0 %v2253
    %2563 = vmatpush1.bf16.msra.mxu0 %v2252
    %2564 = vmatprep.subr.bf16.mxu0 %v2255
    %2565 = vmatpush1.bf16.msra.mxu0 %v2254
    %2566 = vmatprep.subr.bf16.mxu0 %v2257
    %2567 = vmatpush1.bf16.msra.mxu0 %v2256
    %2568 = vmatprep.subr.bf16.mxu0 %v2259
    %2569 = vmatpush1.bf16.msra.mxu0 %v2258
    %2570 = vmatprep.subr.bf16.mxu0 %v2261
    %2571 = vmatpush1.bf16.msra.mxu0 %v2260
    %2572 = vmatprep.subr.bf16.mxu0 %v2263
    %2573 = vmatpush1.bf16.msra.mxu0 %v2262
    %2574 = vmatprep.subr.bf16.mxu0 %v2265
    %2575 = vmatpush1.bf16.msra.mxu0 %v2264
    %2576 = vmatprep.mubr.bf16.mxu0 %v1758
    %2577 = vmatmul.mubr.bf16.gmra.mrb[0].mxu0 %v1757
    %v2578 = vpop.f32.mrb[0].mxu0
    %v2579 = vadd.f32 %v2488, %v2578
    %v2580 = vpop.f32.mrb[0].mxu0
    %v2581 = vadd.f32 %v2490, %v2580
    %v2582 = vpop.f32.mrb[0].mxu0
    %v2583 = vadd.f32 %v2492, %v2582
    %v2584 = vpop.f32.mrb[0].mxu0
    %v2585 = vadd.f32 %v2494, %v2584
    %2586 = vmatprep.mubr.bf16.mxu0 %v1761
    %2587 = vmatmul.mubr.bf16.gmra.mrb[0].mxu0 %v1760
    %v2588 = vpop.f32.mrb[0].mxu0
    %v2589 = vadd.f32 %v2498, %v2588
    %v2590 = vpop.f32.mrb[0].mxu0
    %v2591 = vadd.f32 %v2500, %v2590
    %v2592 = vpop.f32.mrb[0].mxu0
    %v2593 = vadd.f32 %v2502, %v2592
    %v2594 = vpop.f32.mrb[0].mxu0
    %v2595 = vadd.f32 %v2504, %v2594
    %2596 = vmatprep.mubr.bf16.mxu0 %v1764
    %2597 = vmatmul.mubr.bf16.gmra.mrb[0].mxu0 %v1763
    %v2598 = vpop.f32.mrb[0].mxu0
    %v2599 = vadd.f32 %v2508, %v2598
    %v2600 = vpop.f32.mrb[0].mxu0
    %v2601 = vadd.f32 %v2510, %v2600
    %v2602 = vpop.f32.mrb[0].mxu0
    %v2603 = vadd.f32 %v2512, %v2602
    %v2604 = vpop.f32.mrb[0].mxu0
    %v2605 = vadd.f32 %v2514, %v2604
    %2606 = vmatprep.mubr.bf16.mxu0 %v1767
    %2607 = vmatmul.mubr.bf16.gmra.mrb[0].mxu0 %v1766
    %v2608 = vpop.f32.mrb[0].mxu0
    %v2609 = vadd.f32 %v2518, %v2608
    %v2610 = vpop.f32.mrb[0].mxu0
    %v2611 = vadd.f32 %v2520, %v2610
    %v2612 = vpop.f32.mrb[0].mxu0
    %v2613 = vadd.f32 %v2522, %v2612
    %v2614 = vpop.f32.mrb[0].mxu0
    %v2615 = vadd.f32 %v2524, %v2614
    %2616 = vmatprep.mubr.bf16.mxu0 %v1770
    %2617 = vmatmul.mubr.bf16.gmra.mrb[0].mxu0 %v1769
    %v2618 = vpop.f32.mrb[0].mxu0
    %v2619 = vadd.f32 %v2528, %v2618
    %v2620 = vpop.f32.mrb[0].mxu0
    %v2621 = vadd.f32 %v2530, %v2620
    %v2622 = vpop.f32.mrb[0].mxu0
    %v2623 = vadd.f32 %v2532, %v2622
    %v2624 = vpop.f32.mrb[0].mxu0
    %v2625 = vadd.f32 %v2534, %v2624
    %2626 = vmatprep.mubr.bf16.mxu0 %v1773
    %2627 = vmatmul.mubr.bf16.gmra.mrb[0].mxu0 %v1772
    %v2628 = vpop.f32.mrb[0].mxu0
    %v2629 = vadd.f32 %v2538, %v2628
    %v2630 = vpop.f32.mrb[0].mxu0
    %v2631 = vadd.f32 %v2540, %v2630
    %v2632 = vpop.f32.mrb[0].mxu0
    %v2633 = vpop.f32.mrb[0].mxu0
    %2634 = vdwg.mxu0
    %v2635 = vmax.f32 %v2579, 0.0
    %v2636 = vmax.f32 %v2581, 0.0
    %v2637 = vmax.f32 %v2583, 0.0
    %v2638 = vmax.f32 %v2585, 0.0
    %v2639 = vmax.f32 %v2589, 0.0
    %v2640 = vmax.f32 %v2591, 0.0
    %v2641 = vmax.f32 %v2593, 0.0
    %v2642 = vmax.f32 %v2595, 0.0
    %v2643 = vmax.f32 %v2599, 0.0
    %v2644 = vmax.f32 %v2601, 0.0
    %v2645 = vmax.f32 %v2603, 0.0
    %v2646 = vmax.f32 %v2605, 0.0
    %v2647 = vmax.f32 %v2609, 0.0
    %v2648 = vmax.f32 %v2611, 0.0
    %v2649 = vmax.f32 %v2613, 0.0
    %v2650 = vmax.f32 %v2615, 0.0
    %v2651 = vmax.f32 %v2619, 0.0
    %v2652 = vmax.f32 %v2621, 0.0
    %v2653 = vmax.f32 %v2623, 0.0
    %v2654 = vmax.f32 %v2625, 0.0
    %v2655 = vmax.f32 %v2629, 0.0
    %v2656 = vmax.f32 %v2631, 0.0
    %v2657 = vpack.c.bf16 %v2637, %v2635
    %v2658 = vpack.c.bf16 %v2638, %v2636
    %v2659 = vpack.c.bf16 %v2641, %v2639
    %v2660 = vpack.c.bf16 %v2642, %v2640
    %v2661 = vpack.c.bf16 %v2645, %v2643
    %v2662 = vpack.c.bf16 %v2646, %v2644
    %v2663 = vpack.c.bf16 %v2649, %v2647
    %v2664 = vpack.c.bf16 %v2650, %v2648
    %v2665 = vpack.c.bf16 %v2653, %v2651
    %v2666 = vpack.c.bf16 %v2654, %v2652
    %v2667 = vpack.c.bf16 %v2655, %v2655
    %v2668 = vpack.c.bf16 %v2656, %v2656
    %v2669 = vld [vmem:[%s8] sm:$0xff]
    %v2670 = vld [vmem:[%s8 + $0x8] sm:$0xff]
    %v2671 = vld [vmem:[%s8 + $0x10] sm:$0xff]
    %v2672 = vld [vmem:[%s8 + $0x18] sm:$0xff]
    %v2673 = vld [vmem:[%s8 + $0x20] sm:$0xff]
    %v2674 = vld [vmem:[%s8 + $0x28] sm:$0xff]
    %v2675 = vld [vmem:[%s8 + $0x30] sm:$0xff]
    %v2676 = vld [vmem:[%s8 + $0x38] sm:$0xff]
    %v2677 = vld [vmem:[%s8 + $0x40] sm:$0xff]
    %v2678 = vld [vmem:[%s8 + $0x48] sm:$0xff]
    %v2679 = vld [vmem:[%s8 + $0x50] sm:$0xff]
    %v2680 = vld [vmem:[%s8 + $0x58] sm:$0xff]
    %v2681 = vld [vmem:[%s8 + $0x60] sm:$0xff]
    %v2682 = vld [vmem:[%s8 + $0x68] sm:$0xff]
    %v2683 = vld [vmem:[%s8 + $0x70] sm:$0xff]
    %v2684 = vld [vmem:[%s8 + $0x78] sm:$0xff]
    %v2685 = vld [vmem:[%s8 + $0x80] sm:$0xff]
    %v2686 = vld [vmem:[%s8 + $0x88] sm:$0xff]
    %v2687 = vld [vmem:[%s8 + $0x90] sm:$0xff]
    %v2688 = vld [vmem:[%s8 + $0x98] sm:$0xff]
    %v2689 = vld [vmem:[%s8 + $0xa0] sm:$0xff]
    %v2690 = vld [vmem:[%s8 + $0xa8] sm:$0xff]
    %v2691 = vld [vmem:[%s8 + $0xb0] sm:$0xff]
    %v2692 = vld [vmem:[%s8 + $0xb8] sm:$0xff]
    %v2693 = vld [vmem:[%s8 + $0xc0] sm:$0xff]
    %v2694 = vld [vmem:[%s8 + $0xc8] sm:$0xff]
    %v2695 = vld [vmem:[%s8 + $0xd0] sm:$0xff]
    %v2696 = vld [vmem:[%s8 + $0xd8] sm:$0xff]
    %v2697 = vld [vmem:[%s8 + $0xe0] sm:$0xff]
    %v2698 = vld [vmem:[%s8 + $0xe8] sm:$0xff]
    %v2699 = vld [vmem:[%s8 + $0xf0] sm:$0xff]
    %v2700 = vld [vmem:[%s8 + $0xf8] sm:$0xff]
    %v2733 = vunpack.c.l.b16 %v2669
    %v2734 = vunpack.c.h.b16 %v2669
    %v2735 = vunpack.c.l.b16 %v2670
    %v2736 = vunpack.c.h.b16 %v2670
    %v2737 = vunpack.c.l.b16 %v2671
    %v2738 = vunpack.c.h.b16 %v2671
    %v2739 = vunpack.c.l.b16 %v2672
    %v2740 = vunpack.c.h.b16 %v2672
    %v2741 = vunpack.c.l.b16 %v2673
    %v2742 = vunpack.c.h.b16 %v2673
    %v2743 = vunpack.c.l.b16 %v2674
    %v2744 = vunpack.c.h.b16 %v2674
    %v2745 = vunpack.c.l.b16 %v2675
    %v2746 = vunpack.c.h.b16 %v2675
    %v2747 = vunpack.c.l.b16 %v2676
    %v2748 = vunpack.c.h.b16 %v2676
    %v2749 = vunpack.c.l.b16 %v2677
    %v2750 = vunpack.c.h.b16 %v2677
    %v2751 = vunpack.c.l.b16 %v2678
    %v2752 = vunpack.c.h.b16 %v2678
    %v2753 = vunpack.c.l.b16 %v2679
    %v2754 = vunpack.c.h.b16 %v2679
    %v2755 = vunpack.c.l.b16 %v2680
    %v2756 = vunpack.c.h.b16 %v2680
    %v2757 = vunpack.c.l.b16 %v2681
    %v2758 = vunpack.c.h.b16 %v2681
    %v2759 = vunpack.c.l.b16 %v2682
    %v2760 = vunpack.c.h.b16 %v2682
    %v2761 = vunpack.c.l.b16 %v2683
    %v2762 = vunpack.c.h.b16 %v2683
    %v2763 = vunpack.c.l.b16 %v2684
    %v2764 = vunpack.c.h.b16 %v2684
    %v2765 = vunpack.c.l.b16 %v2685
    %v2766 = vunpack.c.h.b16 %v2685
    %v2767 = vunpack.c.l.b16 %v2686
    %v2768 = vunpack.c.h.b16 %v2686
    %v2769 = vunpack.c.l.b16 %v2687
    %v2770 = vunpack.c.h.b16 %v2687
    %v2771 = vunpack.c.l.b16 %v2688
    %v2772 = vunpack.c.h.b16 %v2688
    %v2773 = vunpack.c.l.b16 %v2689
    %v2774 = vunpack.c.h.b16 %v2689
    %v2775 = vunpack.c.l.b16 %v2690
    %v2776 = vunpack.c.h.b16 %v2690
    %v2777 = vunpack.c.l.b16 %v2691
    %v2778 = vunpack.c.h.b16 %v2691
    %v2779 = vunpack.c.l.b16 %v2692
    %v2780 = vunpack.c.h.b16 %v2692
    %v2781 = vunpack.c.l.b16 %v2693
    %v2782 = vunpack.c.h.b16 %v2693
    %v2783 = vunpack.c.l.b16 %v2694
    %v2784 = vunpack.c.h.b16 %v2694
    %v2785 = vunpack.c.l.b16 %v2695
    %v2786 = vunpack.c.h.b16 %v2695
    %v2787 = vunpack.c.l.b16 %v2696
    %v2788 = vunpack.c.h.b16 %v2696
    %v2789 = vunpack.c.l.b16 %v2697
    %v2790 = vunpack.c.h.b16 %v2697
    %v2791 = vunpack.c.l.b16 %v2698
    %v2792 = vunpack.c.h.b16 %v2698
    %v2793 = vunpack.c.l.b16 %v2699
    %v2794 = vunpack.c.h.b16 %v2699
    %v2795 = vunpack.c.l.b16 %v2700
    %v2796 = vunpack.c.h.b16 %v2700
    %v2797 = vpack.c.b16 %v2735, %v2733
    %v2798 = vpack.c.b16 %v2736, %v2734
    %v2799 = vpack.c.b16 %v2739, %v2737
    %v2800 = vpack.c.b16 %v2740, %v2738
    %v2801 = vpack.c.b16 %v2743, %v2741
    %v2802 = vpack.c.b16 %v2744, %v2742
    %v2803 = vpack.c.b16 %v2747, %v2745
    %v2804 = vpack.c.b16 %v2748, %v2746
    %v2805 = vpack.c.b16 %v2751, %v2749
    %v2806 = vpack.c.b16 %v2752, %v2750
    %v2807 = vpack.c.b16 %v2755, %v2753
    %v2808 = vpack.c.b16 %v2756, %v2754
    %v2809 = vpack.c.b16 %v2759, %v2757
    %v2810 = vpack.c.b16 %v2760, %v2758
    %v2811 = vpack.c.b16 %v2763, %v2761
    %v2812 = vpack.c.b16 %v2764, %v2762
    %v2813 = vpack.c.b16 %v2767, %v2765
    %v2814 = vpack.c.b16 %v2768, %v2766
    %v2815 = vpack.c.b16 %v2771, %v2769
    %v2816 = vpack.c.b16 %v2772, %v2770
    %v2817 = vpack.c.b16 %v2775, %v2773
    %v2818 = vpack.c.b16 %v2776, %v2774
    %v2819 = vpack.c.b16 %v2779, %v2777
    %v2820 = vpack.c.b16 %v2780, %v2778
    %v2821 = vpack.c.b16 %v2783, %v2781
    %v2822 = vpack.c.b16 %v2784, %v2782
    %v2823 = vpack.c.b16 %v2787, %v2785
    %v2824 = vpack.c.b16 %v2788, %v2786
    %v2825 = vpack.c.b16 %v2791, %v2789
    %v2826 = vpack.c.b16 %v2792, %v2790
    %v2827 = vpack.c.b16 %v2795, %v2793
    %v2828 = vpack.c.b16 %v2796, %v2794
    %2861 = vmatprep.subr.bf16.mxu0 %v2798
    %2862 = vmatpush1.bf16.msra.mxu0 %v2797
    %2863 = vmatprep.subr.bf16.mxu0 %v2800
    %2864 = vmatpush1.bf16.msra.mxu0 %v2799
    %2865 = vmatprep.subr.bf16.mxu0 %v2802
    %2866 = vmatpush1.bf16.msra.mxu0 %v2801
    %2867 = vmatprep.subr.bf16.mxu0 %v2804
    %2868 = vmatpush1.bf16.msra.mxu0 %v2803
    %2869 = vmatprep.subr.bf16.mxu0 %v2806
    %2870 = vmatpush1.bf16.msra.mxu0 %v2805
    %2871 = vmatprep.subr.bf16.mxu0 %v2808
    %2872 = vmatpush1.bf16.msra.mxu0 %v2807
    %2873 = vmatprep.subr.bf16.mxu0 %v2810
    %2874 = vmatpush1.bf16.msra.mxu0 %v2809
    %2875 = vmatprep.subr.bf16.mxu0 %v2812
    %2876 = vmatpush1.bf16.msra.mxu0 %v2811
    %2877 = vmatprep.subr.bf16.mxu0 %v2814
    %2878 = vmatpush1.bf16.msra.mxu0 %v2813
    %2879 = vmatprep.subr.bf16.mxu0 %v2816
    %2880 = vmatpush1.bf16.msra.mxu0 %v2815
    %2881 = vmatprep.subr.bf16.mxu0 %v2818
    %2882 = vmatpush1.bf16.msra.mxu0 %v2817
    %2883 = vmatprep.subr.bf16.mxu0 %v2820
    %2884 = vmatpush1.bf16.msra.mxu0 %v2819
    %2885 = vmatprep.subr.bf16.mxu0 %v2822
    %2886 = vmatpush1.bf16.msra.mxu0 %v2821
    %2887 = vmatprep.subr.bf16.mxu0 %v2824
    %2888 = vmatpush1.bf16.msra.mxu0 %v2823
    %2889 = vmatprep.subr.bf16.mxu0 %v2826
    %2890 = vmatpush1.bf16.msra.mxu0 %v2825
    %2891 = vmatprep.subr.bf16.mxu0 %v2828
    %2892 = vmatpush1.bf16.msra.mxu0 %v2827
    %2893 = vmatprep.mubr.bf16.mxu0 %v2658
    %2894 = vmatmul.mubr.bf16.gmra.mrb[0].mxu0 %v2657
    %v2895 = vpop.f32.mrb[0].mxu0
    %v2896 = vadd.f32 0.0, %v2895
    %v2897 = vpop.f32.mrb[0].mxu0
    %v2898 = vadd.f32 0.0, %v2897
    %v2899 = vpop.f32.mrb[0].mxu0
    %v2900 = vadd.f32 0.0, %v2899
    %v2901 = vpop.f32.mrb[0].mxu0
    %v2902 = vadd.f32 0.0, %v2901
    %2903 = vmatprep.mubr.bf16.mxu0 %v2660
    %2904 = vmatmul.mubr.bf16.gmra.mrb[0].mxu0 %v2659
    %v2905 = vpop.f32.mrb[0].mxu0
    %v2906 = vadd.f32 0.0, %v2905
    %v2907 = vpop.f32.mrb[0].mxu0
    %v2908 = vadd.f32 0.0, %v2907
    %v2909 = vpop.f32.mrb[0].mxu0
    %v2910 = vadd.f32 0.0, %v2909
    %v2911 = vpop.f32.mrb[0].mxu0
    %v2912 = vadd.f32 0.0, %v2911
    %2913 = vmatprep.mubr.bf16.mxu0 %v2662
    %2914 = vmatmul.mubr.bf16.gmra.mrb[0].mxu0 %v2661
    %v2915 = vpop.f32.mrb[0].mxu0
    %v2916 = vadd.f32 0.0, %v2915
    %v2917 = vpop.f32.mrb[0].mxu0
    %v2918 = vadd.f32 0.0, %v2917
    %v2919 = vpop.f32.mrb[0].mxu0
    %v2920 = vadd.f32 0.0, %v2919
    %v2921 = vpop.f32.mrb[0].mxu0
    %v2922 = vadd.f32 0.0, %v2921
    %2923 = vmatprep.mubr.bf16.mxu0 %v2664
    %2924 = vmatmul.mubr.bf16.gmra.mrb[0].mxu0 %v2663
    %v2925 = vpop.f32.mrb[0].mxu0
    %v2926 = vadd.f32 0.0, %v2925
    %v2927 = vpop.f32.mrb[0].mxu0
    %v2928 = vadd.f32 0.0, %v2927
    %v2929 = vpop.f32.mrb[0].mxu0
    %v2930 = vadd.f32 0.0, %v2929
    %v2931 = vpop.f32.mrb[0].mxu0
    %v2932 = vadd.f32 0.0, %v2931
    %2933 = vmatprep.mubr.bf16.mxu0 %v2666
    %2934 = vmatmul.mubr.bf16.gmra.mrb[0].mxu0 %v2665
    %v2935 = vpop.f32.mrb[0].mxu0
    %v2936 = vadd.f32 0.0, %v2935
    %v2937 = vpop.f32.mrb[0].mxu0
    %v2938 = vadd.f32 0.0, %v2937
    %v2939 = vpop.f32.mrb[0].mxu0
    %v2940 = vadd.f32 0.0, %v2939
    %v2941 = vpop.f32.mrb[0].mxu0
    %v2942 = vadd.f32 0.0, %v2941
    %2943 = vmatprep.mubr.bf16.mxu0 %v2668
    %2944 = vmatmul.mubr.bf16.gmra.mrb[0].mxu0 %v2667
    %v2945 = vpop.f32.mrb[0].mxu0
    %v2946 = vadd.f32 0.0, %v2945
    %v2947 = vpop.f32.mrb[0].mxu0
    %v2948 = vadd.f32 0.0, %v2947
    %v2949 = vpop.f32.mrb[0].mxu0
    %v2950 = vpop.f32.mrb[0].mxu0
    %2951 = vdwg.mxu0
    %v2952 = vld [vmem:[%s9] sm:$0xff]
    %v2953 = vld [vmem:[%s9 + $0x8] sm:$0xff]
    %v2954 = vld [vmem:[%s9 + $0x10] sm:$0xff]
    %v2955 = vld [vmem:[%s9 + $0x18] sm:$0xff]
    %v2956 = vld [vmem:[%s9 + $0x20] sm:$0xff]
    %v2957 = vld [vmem:[%s9 + $0x28] sm:$0xff]
    %v2958 = vld [vmem:[%s9 + $0x30] sm:$0xff]
    %v2959 = vld [vmem:[%s9 + $0x38] sm:$0xff]
    %v2960 = vld [vmem:[%s9 + $0x40] sm:$0xff]
    %v2961 = vld [vmem:[%s9 + $0x48] sm:$0xff]
    %v2962 = vld [vmem:[%s9 + $0x50] sm:$0xff]
    %v2963 = vunpack.c.l.bf16 %v2952
    %v2964 = vunpack.c.h.bf16 %v2952
    %v2965 = vunpack.c.l.bf16 %v2953
    %v2966 = vunpack.c.h.bf16 %v2953
    %v2967 = vunpack.c.l.bf16 %v2954
    %v2968 = vunpack.c.h.bf16 %v2954
    %v2969 = vunpack.c.l.bf16 %v2955
    %v2970 = vunpack.c.h.bf16 %v2955
    %v2971 = vunpack.c.l.bf16 %v2956
    %v2972 = vunpack.c.h.bf16 %v2956
    %v2973 = vunpack.c.l.bf16 %v2957
    %v2974 = vunpack.c.h.bf16 %v2957
    %v2975 = vunpack.c.l.bf16 %v2958
    %v2976 = vunpack.c.h.bf16 %v2958
    %v2977 = vunpack.c.l.bf16 %v2959
    %v2978 = vunpack.c.h.bf16 %v2959
    %v2979 = vunpack.c.l.bf16 %v2960
    %v2980 = vunpack.c.h.bf16 %v2960
    %v2981 = vunpack.c.l.bf16 %v2961
    %v2982 = vunpack.c.h.bf16 %v2961
    %v2983 = vunpack.c.l.bf16 %v2962
    %v2984 = vunpack.c.h.bf16 %v2962
    %v2985 = vmul.f32 %v2896, %v2963
    %v2986 = vmul.f32 %v2898, %v2964
    %v2987 = vmul.f32 %v2900, %v2965
    %v2988 = vmul.f32 %v2902, %v2966
    %v2989 = vmul.f32 %v2906, %v2967
    %v2990 = vmul.f32 %v2908, %v2968
    %v2991 = vmul.f32 %v2910, %v2969
    %v2992 = vmul.f32 %v2912, %v2970
    %v2993 = vmul.f32 %v2916, %v2971
    %v2994 = vmul.f32 %v2918, %v2972
    %v2995 = vmul.f32 %v2920, %v2973
    %v2996 = vmul.f32 %v2922, %v2974
    %v2997 = vmul.f32 %v2926, %v2975
    %v2998 = vmul.f32 %v2928, %v2976
    %v2999 = vmul.f32 %v2930, %v2977
    %v3000 = vmul.f32 %v2932, %v2978
    %v3001 = vmul.f32 %v2936, %v2979
    %v3002 = vmul.f32 %v2938, %v2980
    %v3003 = vmul.f32 %v2940, %v2981
    %v3004 = vmul.f32 %v2942, %v2982
    %v3005 = vmul.f32 %v2946, %v2983
    %v3006 = vmul.f32 %v2948, %v2984
    %v3007 = vpack.c.bf16 %v2987, %v2985
    %v3008 = vpack.c.bf16 %v2988, %v2986
    %v3009 = vpack.c.bf16 %v2991, %v2989
    %v3010 = vpack.c.bf16 %v2992, %v2990
    %v3011 = vpack.c.bf16 %v2995, %v2993
    %v3012 = vpack.c.bf16 %v2996, %v2994
    %v3013 = vpack.c.bf16 %v2999, %v2997
    %v3014 = vpack.c.bf16 %v3000, %v2998
    %v3015 = vpack.c.bf16 %v3003, %v3001
    %v3016 = vpack.c.bf16 %v3004, %v3002
    %v3017 = vpack.c.bf16 %v3005, %v3005
    %v3018 = vpack.c.bf16 %v3006, %v3006
    %v3019 = vld [vmem:[%s10] sm:$0xf]
    %v3021 = vsel %vm1556, %v3019, 0
    %v3024 = vsel %vm1575, %v3017, 0
    %v3027 = vsel %vm1575, %v3018, 0
    %3029 = vmatprep.subr.bf16.mxu0 %v3008
    %3030 = vmatpush1.bf16.msra.mxu0 %v3007
    %3031 = vmatprep.subr.bf16.mxu0 %v3010
    %3032 = vmatpush1.bf16.msra.mxu0 %v3009
    %3033 = vmatprep.subr.bf16.mxu0 %v3012
    %3034 = vmatpush1.bf16.msra.mxu0 %v3011
    %3035 = vmatprep.subr.bf16.mxu0 %v3014
    %3036 = vmatpush1.bf16.msra.mxu0 %v3013
    %3037 = vmatprep.subr.bf16.mxu0 %v3016
    %3038 = vmatpush1.bf16.msra.mxu0 %v3015
    %3039 = vmatprep.subr.bf16.mxu0 %v3027
    %3040 = vmatpush1.bf16.msra.mxu0 %v3024
    %3041 = vmatprep.subr.bf16.mxu0 0
    %3042 = vmatpush1.bf16.msra.mxu0 0
    %3043 = vmatprep.subr.bf16.mxu0 0
    %3044 = vmatpush1.bf16.msra.mxu0 0
    %3045 = vmatprep.subr.bf16.mxu0 0
    %3046 = vmatpush1.bf16.msra.mxu0 0
    %3047 = vmatprep.subr.bf16.mxu0 0
    %3048 = vmatpush1.bf16.msra.mxu0 0
    %3049 = vmatprep.subr.bf16.mxu0 0
    %3050 = vmatpush1.bf16.msra.mxu0 0
    %3051 = vmatprep.subr.bf16.mxu0 0
    %3052 = vmatpush1.bf16.msra.mxu0 0
    %3053 = vmatprep.subr.bf16.mxu0 0
    %3054 = vmatpush1.bf16.msra.mxu0 0
    %3055 = vmatprep.subr.bf16.mxu0 0
    %3056 = vmatpush1.bf16.msra.mxu0 0
    %3057 = vmatprep.subr.bf16.mxu0 0
    %3058 = vmatpush1.bf16.msra.mxu0 0
    %3059 = vmatprep.subr.bf16.mxu0 0
    %3060 = vmatpush1.bf16.msra.mxu0 0
    %3061 = vmatprep.mubr.bf16.mxu0 0
    %3062 = vmatmul.mubr.bf16.gmra.mrb[0].mxu0 %v3021
    %v3063 = vpop.f32.mrb[0].mxu0
    %v3064 = vadd.f32 0.0, %v3063
    %v3065 = vpop.f32.mrb[0].mxu0
    %v3066 = vadd.f32 0.0, %v3065
    %v3067 = vpop.f32.mrb[0].mxu0
    %v3068 = vpop.f32.mrb[0].mxu0
    %3069 = vdwg.mxu0
    %v3070 = vpack.c.bf16 %v3064, %v3064
    %v3071 = vpack.c.bf16 %v3066, %v3066
    %v3072 = vld [vmem:[%s11] sm:$0xf]
    %v3073 = vld [vmem:[%s11 + $0x4] sm:$0xf]
    %v3074 = vld [vmem:[%s11 + $0x8] sm:$0xf]
    %v3075 = vld [vmem:[%s11 + $0xc] sm:$0xf]
    %v3076 = vld [vmem:[%s11 + $0x10] sm:$0xf]
    %v3077 = vld [vmem:[%s11 + $0x14] sm:$0xf]
    %v3078 = vld [vmem:[%s11 + $0x18] sm:$0xf]
    %v3079 = vld [vmem:[%s11 + $0x1c] sm:$0xf]
    %v3080 = vld [vmem:[%s11 + $0x20] sm:$0xf]
    %v3081 = vld [vmem:[%s11 + $0x24] sm:$0xf]
    %v3082 = vld [vmem:[%s11 + $0x28] sm:$0xf]
    %v3083 = vld [vmem:[%s11 + $0x2c] sm:$0xf]
    %v3084 = vld [vmem:[%s11 + $0x30] sm:$0xf]
    %v3085 = vld [vmem:[%s11 + $0x34] sm:$0xf]
    %v3086 = vld [vmem:[%s11 + $0x38] sm:$0xf]
    %v3087 = vld [vmem:[%s11 + $0x3c] sm:$0xf]
    %v3088 = vld [vmem:[%s11 + $0x40] sm:$0xf]
    %v3089 = vld [vmem:[%s11 + $0x44] sm:$0xf]
    %v3090 = vld [vmem:[%s11 + $0x48] sm:$0xf]
    %v3091 = vld [vmem:[%s11 + $0x4c] sm:$0xf]
    %v3092 = vld [vmem:[%s11 + $0x50] sm:$0xf]
    %v3093 = vld [vmem:[%s11 + $0x54] sm:$0xf]
    %v3094 = vld [vmem:[%s11 + $0x58] sm:$0xf]
    %v3095 = vld [vmem:[%s11 + $0x5c] sm:$0xf]
    %v3096 = vld [vmem:[%s11 + $0x60] sm:$0xf]
    %v3097 = vld [vmem:[%s11 + $0x64] sm:$0xf]
    %v3098 = vld [vmem:[%s11 + $0x68] sm:$0xf]
    %v3099 = vld [vmem:[%s11 + $0x6c] sm:$0xf]
    %v3100 = vld [vmem:[%s11 + $0x70] sm:$0xf]
    %v3101 = vld [vmem:[%s11 + $0x74] sm:$0xf]
    %v3102 = vld [vmem:[%s11 + $0x78] sm:$0xf]
    %v3103 = vld [vmem:[%s11 + $0x7c] sm:$0xf]
    %v3104 = vld [vmem:[%s12] sm:$0x1]
    %v3106 = vlaneseq
    %v3107 = vshrl.u32 %v3106, 7
    %v3108 = vsub.s32 0, %v3107
    %v3109 = vrot.slane %v3104, %v3108
    %v3143 = vunpack.c.l.b16 %v3072
    %v3144 = vunpack.c.l.b16 %v3073
    %v3145 = vunpack.c.l.b16 %v3074
    %v3146 = vunpack.c.l.b16 %v3075
    %v3147 = vunpack.c.l.b16 %v3076
    %v3148 = vunpack.c.l.b16 %v3077
    %v3149 = vunpack.c.l.b16 %v3078
    %v3150 = vunpack.c.l.b16 %v3079
    %v3151 = vunpack.c.l.b16 %v3080
    %v3152 = vunpack.c.l.b16 %v3081
    %v3153 = vunpack.c.l.b16 %v3082
    %v3154 = vunpack.c.l.b16 %v3083
    %v3155 = vunpack.c.l.b16 %v3084
    %v3156 = vunpack.c.l.b16 %v3085
    %v3157 = vunpack.c.l.b16 %v3086
    %v3158 = vunpack.c.l.b16 %v3087
    %v3159 = vunpack.c.l.b16 %v3088
    %v3160 = vunpack.c.l.b16 %v3089
    %v3161 = vunpack.c.l.b16 %v3090
    %v3162 = vunpack.c.l.b16 %v3091
    %v3163 = vunpack.c.l.b16 %v3092
    %v3164 = vunpack.c.l.b16 %v3093
    %v3165 = vunpack.c.l.b16 %v3094
    %v3166 = vunpack.c.l.b16 %v3095
    %v3167 = vunpack.c.l.b16 %v3096
    %v3168 = vunpack.c.l.b16 %v3097
    %v3169 = vunpack.c.l.b16 %v3098
    %v3170 = vunpack.c.l.b16 %v3099
    %v3171 = vunpack.c.l.b16 %v3100
    %v3172 = vunpack.c.l.b16 %v3101
    %v3173 = vunpack.c.l.b16 %v3102
    %v3174 = vunpack.c.l.b16 %v3103
    %v3175 = vpack.c.b16 %v3144, %v3143
    %v3176 = vpack.c.b16 %v3146, %v3145
    %v3177 = vpack.c.b16 %v3148, %v3147
    %v3178 = vpack.c.b16 %v3150, %v3149
    %v3179 = vpack.c.b16 %v3152, %v3151
    %v3180 = vpack.c.b16 %v3154, %v3153
    %v3181 = vpack.c.b16 %v3156, %v3155
    %v3182 = vpack.c.b16 %v3158, %v3157
    %v3183 = vpack.c.b16 %v3160, %v3159
    %v3184 = vpack.c.b16 %v3162, %v3161
    %v3185 = vpack.c.b16 %v3164, %v3163
    %v3186 = vpack.c.b16 %v3166, %v3165
    %v3187 = vpack.c.b16 %v3168, %v3167
    %v3188 = vpack.c.b16 %v3170, %v3169
    %v3189 = vpack.c.b16 %v3172, %v3171
    %v3190 = vpack.c.b16 %v3174, %v3173
    %3207 = vmatprep.subr.bf16.mxu0 0
    %3208 = vmatpush1.bf16.msra.mxu0 %v3175
    %3209 = vmatprep.subr.bf16.mxu0 0
    %3210 = vmatpush1.bf16.msra.mxu0 %v3176
    %3211 = vmatprep.subr.bf16.mxu0 0
    %3212 = vmatpush1.bf16.msra.mxu0 %v3177
    %3213 = vmatprep.subr.bf16.mxu0 0
    %3214 = vmatpush1.bf16.msra.mxu0 %v3178
    %3215 = vmatprep.subr.bf16.mxu0 0
    %3216 = vmatpush1.bf16.msra.mxu0 %v3179
    %3217 = vmatprep.subr.bf16.mxu0 0
    %3218 = vmatpush1.bf16.msra.mxu0 %v3180
    %3219 = vmatprep.subr.bf16.mxu0 0
    %3220 = vmatpush1.bf16.msra.mxu0 %v3181
    %3221 = vmatprep.subr.bf16.mxu0 0
    %3222 = vmatpush1.bf16.msra.mxu0 %v3182
    %3223 = vmatprep.subr.bf16.mxu0 0
    %3224 = vmatpush1.bf16.msra.mxu0 %v3183
    %3225 = vmatprep.subr.bf16.mxu0 0
    %3226 = vmatpush1.bf16.msra.mxu0 %v3184
    %3227 = vmatprep.subr.bf16.mxu0 0
    %3228 = vmatpush1.bf16.msra.mxu0 %v3185
    %3229 = vmatprep.subr.bf16.mxu0 0
    %3230 = vmatpush1.bf16.msra.mxu0 %v3186
    %3231 = vmatprep.subr.bf16.mxu0 0
    %3232 = vmatpush1.bf16.msra.mxu0 %v3187
    %3233 = vmatprep.subr.bf16.mxu0 0
    %3234 = vmatpush1.bf16.msra.mxu0 %v3188
    %3235 = vmatprep.subr.bf16.mxu0 0
    %3236 = vmatpush1.bf16.msra.mxu0 %v3189
    %3237 = vmatprep.subr.bf16.mxu0 0
    %3238 = vmatpush1.bf16.msra.mxu0 %v3190
    %3239 = vmatprep.mubr.bf16.mxu0 %v3071
    %3240 = vmatmul.mubr.bf16.gmra.mrb[0].mxu0 %v3070
    %v3241 = vpop.f32.mrb[0].mxu0
    %v3242 = vadd.f32 %v3109, %v3241
    %v3243 = vpop.f32.mrb[0].mxu0
    %v3244 = vpop.f32.mrb[0].mxu0
    %v3245 = vpop.f32.mrb[0].mxu0
    %3246 = vdwg.mxu0
    %3247 = vst [vmem:[%s13] sm:$0xff] %v3242
    // Predicated region
    $region66: #{cnn_forward.1} parent=1 // pred_check
      _
    $region67: #{cnn_forward.1} parent=1 // pred_check_branch
      %3249 = sbr.rel (0) target = $region69
    $region68: #{cnn_forward.1} parent=1 // pred_region
      _
    $region69: #{cnn_forward.1} parent=1 // pred_fallthru
      _
    // Predicated region
    $region70: #{cnn_forward.1} parent=1 // pred_check
      _
    $region71: #{cnn_forward.1} parent=1 // pred_check_branch
      %3251 = sbr.rel (0) target = $region73
    $region72: #{cnn_forward.1} parent=1 // pred_region
      _
    $region73: #{cnn_forward.1} parent=1 // pred_fallthru
      _
    %3252 = vsyncpa [#allocation3], 1
    %3253 = vsyncpa [#allocation5], 1

</llo_original>
